<compile_context>
chip_gen: v7x
topology: tpu7x:2x2x1
jax: 0.10.0
libtpu: 0.0.40
codegen_flags: <defaults>
</compile_context>

<pallas_src>
import jax
import jax.numpy as jnp
from jax.experimental import pallas as pl
from jax.experimental.pallas import tpu as pltpu

CPAD = 128  # trunk channels are zero-padded to one full lane width


# ---------------------- fused MXU matmul + epilogue kernel -------------------

def fused_matmul(a, b, epi, *, has_prelu=False, has_post=False, residual=None,
                 out_dtype=jnp.float32, tm=256):
    """[M,K] @ [K,N] with a fused per-channel epilogue applied in VMEM:
         v = A @ B + bias
         v = prelu(v, alpha)               (if has_prelu)
         v = v * post_scale + post_shift   (if has_post)
         v = v + residual                  (if residual is given)
    `epi` is the pre-stacked [R, N] table of per-channel epilogue vectors
    (row 0 = bias, then alpha, then post_scale/post_shift) so the kernel has a
    single small auxiliary input stream. A/B feed the MXU in bf16 (f32
    accumulation); epilogue math stays f32. Tiled over M only (K and N are
    small here); the M axis is 'parallel' so a v7x megacore can split rows
    across its two TensorCores.
    """
    M, K = a.shape
    Kb, N = b.shape
    assert K == Kb
    tm = M if M <= tm else tm
    assert M % tm == 0, (M, tm)

    R = epi.shape[0]
    assert epi.shape == (1 + int(has_prelu) + 2 * int(has_post), N)
    has_res = residual is not None

    def kernel(*refs):
        if has_res:
            a_ref, b_ref, e_ref, r_ref, o_ref = refs
        else:
            a_ref, b_ref, e_ref, o_ref = refs
            r_ref = None

        v = jnp.dot(a_ref[...], b_ref[...], preferred_element_type=jnp.float32)
        row = 0
        v = v + e_ref[row:row + 1, :]                       # bias
        row += 1
        if has_prelu:
            alpha = e_ref[row:row + 1, :]
            v = jnp.where(v >= 0.0, v, alpha * v)
            row += 1
        if has_post:
            v = v * e_ref[row:row + 1, :] + e_ref[row + 1:row + 2, :]
        if has_res:
            v = v + r_ref[...].astype(jnp.float32)
        o_ref[...] = v.astype(o_ref.dtype)

    inputs = [a.astype(jnp.bfloat16), b.astype(jnp.bfloat16),
              epi.astype(jnp.float32)]
    in_specs = [pl.BlockSpec((tm, K), lambda i: (i, 0)),
                pl.BlockSpec((K, N), lambda i: (0, 0)),
                pl.BlockSpec((R, N), lambda i: (0, 0))]
    if has_res:
        inputs.append(residual)
        in_specs.append(pl.BlockSpec((tm, N), lambda i: (i, 0)))

    return pl.pallas_call(
        kernel,
        out_shape=jax.ShapeDtypeStruct((M, N), out_dtype),
        grid=(M // tm,),
        in_specs=in_specs,
        out_specs=pl.BlockSpec((tm, N), lambda i: (i, 0)),
        compiler_params=pltpu.CompilerParams(
            dimension_semantics=("parallel",)),
    )(*inputs)


# -------------------------------- conv glue ----------------------------------

def conv3x3_fused(x_nhwc, w_kn, epi, *, stride=1, has_prelu=False,
                  has_post=False, residual=None, out_dtype=jnp.bfloat16):
    """3x3 conv (pad=1, no bias) as im2col + fused MXU matmul epilogue.
    w_kn is pre-laid-out [9*Cin, Cout_pad] with BN scales already folded in."""
    N, H, W, Cin = x_nhwc.shape
    Cout = w_kn.shape[1]
    Ho = (H + 2 - 3) // stride + 1
    Wo = (W + 2 - 3) // stride + 1
    xp = jnp.pad(x_nhwc, ((0, 0), (1, 1), (1, 1), (0, 0)))
    cols = []
    for dh in range(3):
        for dw in range(3):
            cols.append(xp[:, dh:dh + (Ho - 1) * stride + 1:stride,
                           dw:dw + (Wo - 1) * stride + 1:stride, :])
    # TODO(synk): at production iresnet sizes, replace this XLA im2col slab
    # with in-kernel tap accumulation (manual DMA of the 9 shifted windows).
    patches = jnp.concatenate(cols, axis=-1).reshape(N * Ho * Wo, 9 * Cin)
    res2d = None if residual is None else residual.reshape(N * Ho * Wo, Cout)
    out = fused_matmul(patches, w_kn, epi, has_prelu=has_prelu,
                       has_post=has_post, residual=res2d, out_dtype=out_dtype)
    return out.reshape(N, Ho, Wo, Cout)


def conv1x1_fused(x_nhwc, w_kn, epi, *, stride=1, out_dtype=jnp.float32):
    N, H, W, Cin = x_nhwc.shape
    Cout = w_kn.shape[1]
    xs = x_nhwc[:, ::stride, ::stride, :]
    Ho, Wo = xs.shape[1], xs.shape[2]
    out = fused_matmul(xs.reshape(N * Ho * Wo, Cin), w_kn, epi,
                       out_dtype=out_dtype)
    return out.reshape(N, Ho, Wo, Cout)


# ------------------------------ parameters -----------------------------------

def make_params(key, cin=4, c1=16, c2=32, feat=64):
    """Raw (PyTorch-style) parameters of the truncated iresnet."""
    ks = jax.random.split(key, 16)
    r = lambda k, shp, s=0.1: (s * jax.random.normal(k, shp)).astype(jnp.float32)
    p = {
        "conv1_w": r(ks[0], (c1, cin, 3, 3)),
        "bn1_g": 1.0 + r(ks[1], (c1,)), "bn1_b": r(ks[2], (c1,)),
        "prelu1_a": jnp.full((c1,), 0.25, jnp.float32),
        # IBasicBlock
        "blk_bn0_g": 1.0 + r(ks[3], (c1,)), "blk_bn0_b": r(ks[4], (c1,)),
        "blk_conv1_w": r(ks[5], (c2, c1, 3, 3)),
        "blk_bn1_g": 1.0 + r(ks[6], (c2,)), "blk_bn1_b": r(ks[7], (c2,)),
        "blk_prelu_a": jnp.full((c2,), 0.25, jnp.float32),
        "blk_conv2_w": r(ks[8], (c2, c2, 3, 3)),
        "blk_bn2_g": 1.0 + r(ks[9], (c2,)), "blk_bn2_b": r(ks[10], (c2,)),
        "ds_conv_w": r(ks[11], (c2, c1, 1, 1)),
        "ds_bn_g": 1.0 + r(ks[12], (c2,)), "ds_bn_b": r(ks[13], (c2,)),
        # head
        "bn2_g": 1.0 + r(ks[14], (c2,)), "bn2_b": r(ks[15], (c2,)),
        "fc_w": r(jax.random.fold_in(key, 100), (feat, c2 * 8 * 8)),
        "fc_b": r(jax.random.fold_in(key, 101), (feat,)),
        "bnf_g": 1.0 + r(jax.random.fold_in(key, 102), (feat,)),
        "bnf_b": r(jax.random.fold_in(key, 103), (feat,)),
    }
    return p


def _bn_fold(gamma, beta, eps=1e-5):
    # eval-mode BN with running_mean=0, running_var=1
    return gamma / jnp.sqrt(1.0 + eps), beta


def _cpad(v, n=CPAD):
    return jnp.pad(v, (0, n - v.shape[0]))


def _w3x3_to_kn(w_oihw, cin_pad, cout_pad):
    """[Cout,Cin,3,3] -> zero-padded [9*cin_pad, cout_pad] matmul layout whose
    row order matches the im2col (dh, dw, cin) channel order."""
    cout, cin = w_oihw.shape[0], w_oihw.shape[1]
    w = jnp.transpose(w_oihw, (2, 3, 1, 0))                   # [3,3,Cin,Cout]
    w = jnp.pad(w, ((0, 0), (0, 0), (0, cin_pad - cin), (0, cout_pad - cout)))
    return w.reshape(9 * cin_pad, cout_pad)


def prepare_params(p, spatial=(8, 8)):
    """Fold every eval-mode BN into the adjacent conv/FC weights, pre-pack all
    weights in bf16 matmul layout, zero-pad trunk channels to CPAD lanes,
    stack per-channel epilogue vectors into single [R, CPAD] tables, and bake
    the NHWC flatten order into the FC columns. Runs once, outside jit."""
    Ho, Wo = spatial
    bf = jnp.bfloat16

    s1, t1 = _bn_fold(p["bn1_g"], p["bn1_b"])            # stem BN
    s0, t0 = _bn_fold(p["blk_bn0_g"], p["blk_bn0_b"])    # block leading BN
    s1b, t1b = _bn_fold(p["blk_bn1_g"], p["blk_bn1_b"])
    s2b, t2b = _bn_fold(p["blk_bn2_g"], p["blk_bn2_b"])
    sds, tds = _bn_fold(p["ds_bn_g"], p["ds_bn_b"])
    sg, tg = _bn_fold(p["bn2_g"], p["bn2_b"])            # head BN (2d)
    sf, tf = _bn_fold(p["bnf_g"], p["bnf_b"])            # final BN (1d)

    cin = p["conv1_w"].shape[1]
    out = {}

    # stem: conv1*bn1scale -> (+ bn1 shift) -> PReLU -> block bn0 as post-
    # affine (so the block's conv1 can consume the stem output directly).
    out["stem_w"] = _w3x3_to_kn(p["conv1_w"] * s1[:, None, None, None],
                                cin, CPAD).astype(bf)
    out["stem_epi"] = jnp.stack(
        [_cpad(t1), _cpad(p["prelu1_a"]), _cpad(s0), _cpad(t0)], axis=0)

    # block conv1 + bn1 + PReLU
    out["bk1_w"] = _w3x3_to_kn(p["blk_conv1_w"] * s1b[:, None, None, None],
                               CPAD, CPAD).astype(bf)
    out["bk1_epi"] = jnp.stack([_cpad(t1b), _cpad(p["blk_prelu_a"])], axis=0)

    # block conv2 (stride 2) + bn2 ; residual add happens in the same kernel
    out["bk2_w"] = _w3x3_to_kn(p["blk_conv2_w"] * s2b[:, None, None, None],
                               CPAD, CPAD).astype(bf)
    out["bk2_epi"] = _cpad(t2b).reshape(1, CPAD)

    # downsample shortcut acts on y = (z - t0)/s0 (z = bn0-folded stem output),
    # so fold bn0^{-1} per input channel and bn_ds per output channel into the
    # 1x1 weights; the constant term becomes a bias (1x1 conv has no padding,
    # so this fold is exact).
    wd = p["ds_conv_w"][:, :, 0, 0]                       # [C2, C1]
    wds = (wd / s0[None, :]) * sds[:, None]               # [C2, C1]
    out["ds_w"] = jnp.pad(wds.T, ((0, CPAD - wds.shape[1]),
                                  (0, CPAD - wds.shape[0]))).astype(bf)
    out["ds_epi"] = _cpad(tds - sds * (wd @ (t0 / s0))).reshape(1, CPAD)

    # head: bn2_head + fc(+bias) + final bn1d folded into one matmul; fc
    # columns are re-ordered to NHWC flatten order so the forward never
    # transposes the activation before the FC.
    feat = p["fc_w"].shape[0]
    c2 = p["bn2_g"].shape[0]
    w = p["fc_w"].reshape(feat, c2, Ho, Wo)
    w_scaled = w * sg[None, :, None, None] * sf[:, None, None, None]
    out["fc_w"] = jnp.transpose(w_scaled, (2, 3, 1, 0)).reshape(
        Ho * Wo * c2, feat).astype(bf)
    fc_b = sf * (w.reshape(feat, c2, Ho * Wo).sum(-1) @ tg + p["fc_b"]) + tf
    out["fc_epi"] = fc_b.reshape(1, feat)
    return out


# ----------------------------- network forward -------------------------------

def network_builder_forward(params, x_nchw):
    p = params
    x = jnp.transpose(x_nchw, (0, 2, 3, 1)).astype(jnp.bfloat16)   # NHWC, bf16
    N = x.shape[0]

    # stem: conv3x3 -> bn1 -> prelu (block's leading bn0 folded in as the
    # post-affine epilogue) -- one pallas_call
    z = conv3x3_fused(x, p["stem_w"], p["stem_epi"], has_prelu=True,
                      has_post=True, out_dtype=jnp.bfloat16)       # [N,16,16,128]

    # IBasicBlock shortcut: conv1x1(stride 2) + bn_ds (with bn0^{-1} folded)
    sc = conv1x1_fused(z, p["ds_w"], p["ds_epi"], stride=2,
                       out_dtype=jnp.float32)                      # [N,8,8,128]

    # IBasicBlock main path: conv3x3+bn+prelu, then conv3x3(s2)+bn with the
    # residual add fused into the second conv's epilogue
    h = conv3x3_fused(z, p["bk1_w"], p["bk1_epi"], has_prelu=True,
                      out_dtype=jnp.bfloat16)                      # [N,16,16,128]
    out = conv3x3_fused(h, p["bk2_w"], p["bk2_epi"], stride=2, residual=sc,
                        out_dtype=jnp.float32)                     # [N,8,8,128]

    Ho, Wo = out.shape[1], out.shape[2]
    c2 = p["fc_w"].shape[0] // (Ho * Wo)
    out_real = out[..., :c2]                                       # drop lane pad

    # local feature map (NCHW, like PyTorch conv feature maps)
    lc_feats = jnp.transpose(out_real, (0, 3, 1, 2))               # [N,C2,Ho,Wo]

    # global features: head bn2 -> flatten -> fc -> bn1d, all folded into the
    # fc weights/bias; flatten is NHWC order matching the fc column layout
    g_flat = out_real.reshape(N, Ho * Wo * c2)
    gl_feats = fused_matmul(g_flat, p["fc_w"], p["fc_epi"],
                            out_dtype=jnp.float32)                 # [N, feat]
    return gl_feats, lc_feats


if __name__ == "__main__":
    key = jax.random.PRNGKey(0)
    kx, kp = jax.random.split(key)
    x = jax.random.normal(kx, (2, 4, 16, 16), dtype=jnp.float32)   # NCHW input
    params = prepare_params(make_params(kp), spatial=(8, 8))       # outside jit

    gl, lc = jax.jit(network_builder_forward)(params, x)
    jax.block_until_ready((gl, lc))

    assert gl.shape == (2, 64)
    assert lc.shape == (2, 32, 8, 8)
    print("KERNEL_OK")
</pallas_src>

<mosaic_0001>
module attributes {stable_mosaic.version = 11 : i64} {
  func.func @kernel(%arg0: i32, %arg1: memref<256x36xbf16, #tpu.memory_space<vmem>>, %arg2: memref<36x128xbf16, #tpu.memory_space<vmem>>, %arg3: memref<4x128xf32, #tpu.memory_space<vmem>>, %arg4: memref<256x128xbf16, #tpu.memory_space<vmem>>) attributes {dimension_semantics = [#tpu.dimension_semantics<parallel>], iteration_bounds = array<i64: 2>, scalar_prefetch = 0 : i64, scratch_operands = 0 : i64, tpu.core_type = #tpu.core_type<tc>, window_params = [{transform_indices = @transform_0, window_bounds = array<i64: 256, 36>}, {pipeline_mode = #tpu.pipeline_mode<synchronous>, transform_indices = @transform_1, window_bounds = array<i64: 36, 128>}, {pipeline_mode = #tpu.pipeline_mode<synchronous>, transform_indices = @transform_2, window_bounds = array<i64: 4, 128>}, {transform_indices = @transform_3, window_bounds = array<i64: 256, 128>}]} {
    %c0 = arith.constant 0 : index
    %c0_0 = arith.constant 0 : index
    %0 = vector.load %arg1[%c0, %c0_0] : memref<256x36xbf16, #tpu.memory_space<vmem>>, vector<256x36xbf16>
    %c0_1 = arith.constant 0 : index
    %c0_2 = arith.constant 0 : index
    %1 = vector.load %arg2[%c0_1, %c0_2] : memref<36x128xbf16, #tpu.memory_space<vmem>>, vector<36x128xbf16>
    %cst = arith.constant dense<0.000000e+00> : vector<256x128xf32>
    %2 = tpu.matmul %0, %1, %cst {dimension_numbers = #tpu.dot_dimension_numbers<[1], [0], [0], [1], [0, 0, 1, 1], [], []>} : vector<256x36xbf16>, vector<36x128xbf16>, vector<256x128xf32> -> vector<256x128xf32>
    %c0_3 = arith.constant 0 : index
    %c0_4 = arith.constant 0 : index
    %3 = vector.load %arg3[%c0_3, %c0_4] : memref<4x128xf32, #tpu.memory_space<vmem>>, vector<1x128xf32>
    %4 = vector.broadcast %3 : vector<1x128xf32> to vector<256x128xf32>
    %5 = arith.addf %2, %4 : vector<256x128xf32>
    %c1 = arith.constant 1 : index
    %c0_5 = arith.constant 0 : index
    %6 = vector.load %arg3[%c1, %c0_5] : memref<4x128xf32, #tpu.memory_space<vmem>>, vector<1x128xf32>
    %cst_6 = arith.constant 0.000000e+00 : f32
    %7 = vector.broadcast %cst_6 : f32 to vector<256x128xf32>
    %8 = arith.cmpf oge, %5, %7 : vector<256x128xf32>
    %9 = vector.broadcast %6 : vector<1x128xf32> to vector<256x128xf32>
    %10 = arith.mulf %9, %5 : vector<256x128xf32>
    %11 = arith.select %8, %5, %10 : vector<256x128xi1>, vector<256x128xf32>
    %c2 = arith.constant 2 : index
    %c0_7 = arith.constant 0 : index
    %12 = vector.load %arg3[%c2, %c0_7] : memref<4x128xf32, #tpu.memory_space<vmem>>, vector<1x128xf32>
    %13 = vector.broadcast %12 : vector<1x128xf32> to vector<256x128xf32>
    %14 = arith.mulf %11, %13 : vector<256x128xf32>
    %c3 = arith.constant 3 : index
    %c0_8 = arith.constant 0 : index
    %15 = vector.load %arg3[%c3, %c0_8] : memref<4x128xf32, #tpu.memory_space<vmem>>, vector<1x128xf32>
    %16 = vector.broadcast %15 : vector<1x128xf32> to vector<256x128xf32>
    %17 = arith.addf %14, %16 : vector<256x128xf32>
    %18 = arith.truncf %17 : vector<256x128xf32> to vector<256x128xbf16>
    %c0_9 = arith.constant 0 : index
    %c0_10 = arith.constant 0 : index
    %19 = vector.load %arg4[%c0_9, %c0_10] : memref<256x128xbf16, #tpu.memory_space<vmem>>, vector<256x128xbf16>
    tpu.vector_store %arg4[%c0_9, %c0_10], %18 {strides = array<i32>} : memref<256x128xbf16, #tpu.memory_space<vmem>>, vector<256x128xbf16>,
    return
  }
  func.func @transform_0(%arg0: i32) -> (i32, i32) {
    %c0_i32 = arith.constant 0 : i32
    %c0_i32_0 = arith.constant 0 : i32
    return %arg0, %c0_i32 : i32, i32
  }
  func.func @transform_1(%arg0: i32) -> (i32, i32) {
    %c0_i32 = arith.constant 0 : i32
    %c0_i32_0 = arith.constant 0 : i32
    %c0_i32_1 = arith.constant 0 : i32
    return %c0_i32, %c0_i32_0 : i32, i32
  }
  func.func @transform_2(%arg0: i32) -> (i32, i32) {
    %c0_i32 = arith.constant 0 : i32
    %c0_i32_0 = arith.constant 0 : i32
    %c0_i32_1 = arith.constant 0 : i32
    return %c0_i32, %c0_i32_0 : i32, i32
  }
  func.func @transform_3(%arg0: i32) -> (i32, i32) {
    %c0_i32 = arith.constant 0 : i32
    %c0_i32_0 = arith.constant 0 : i32
    return %arg0, %c0_i32 : i32, i32
  }
}

module attributes {stable_mosaic.version = 11 : i64} {
  func.func @kernel(%arg0: i32, %arg1: memref<256x1152xbf16, #tpu.memory_space<vmem>>, %arg2: memref<1152x128xbf16, #tpu.memory_space<vmem>>, %arg3: memref<2x128xf32, #tpu.memory_space<vmem>>, %arg4: memref<256x128xbf16, #tpu.memory_space<vmem>>) attributes {dimension_semantics = [#tpu.dimension_semantics<parallel>], iteration_bounds = array<i64: 2>, scalar_prefetch = 0 : i64, scratch_operands = 0 : i64, tpu.core_type = #tpu.core_type<tc>, window_params = [{transform_indices = @transform_0, window_bounds = array<i64: 256, 1152>}, {pipeline_mode = #tpu.pipeline_mode<synchronous>, transform_indices = @transform_1, window_bounds = array<i64: 1152, 128>}, {pipeline_mode = #tpu.pipeline_mode<synchronous>, transform_indices = @transform_2, window_bounds = array<i64: 2, 128>}, {transform_indices = @transform_3, window_bounds = array<i64: 256, 128>}]} {
    %c0 = arith.constant 0 : index
    %c0_0 = arith.constant 0 : index
    %0 = vector.load %arg1[%c0, %c0_0] : memref<256x1152xbf16, #tpu.memory_space<vmem>>, vector<256x1152xbf16>
    %c0_1 = arith.constant 0 : index
    %c0_2 = arith.constant 0 : index
    %1 = vector.load %arg2[%c0_1, %c0_2] : memref<1152x128xbf16, #tpu.memory_space<vmem>>, vector<1152x128xbf16>
    %cst = arith.constant dense<0.000000e+00> : vector<256x128xf32>
    %2 = tpu.matmul %0, %1, %cst {dimension_numbers = #tpu.dot_dimension_numbers<[1], [0], [0], [1], [0, 0, 1, 1], [], []>} : vector<256x1152xbf16>, vector<1152x128xbf16>, vector<256x128xf32> -> vector<256x128xf32>
    %c0_3 = arith.constant 0 : index
    %c0_4 = arith.constant 0 : index
    %3 = vector.load %arg3[%c0_3, %c0_4] : memref<2x128xf32, #tpu.memory_space<vmem>>, vector<1x128xf32>
    %4 = vector.broadcast %3 : vector<1x128xf32> to vector<256x128xf32>
    %5 = arith.addf %2, %4 : vector<256x128xf32>
    %c1 = arith.constant 1 : index
    %c0_5 = arith.constant 0 : index
    %6 = vector.load %arg3[%c1, %c0_5] : memref<2x128xf32, #tpu.memory_space<vmem>>, vector<1x128xf32>
    %cst_6 = arith.constant 0.000000e+00 : f32
    %7 = vector.broadcast %cst_6 : f32 to vector<256x128xf32>
    %8 = arith.cmpf oge, %5, %7 : vector<256x128xf32>
    %9 = vector.broadcast %6 : vector<1x128xf32> to vector<256x128xf32>
    %10 = arith.mulf %9, %5 : vector<256x128xf32>
    %11 = arith.select %8, %5, %10 : vector<256x128xi1>, vector<256x128xf32>
    %12 = arith.truncf %11 : vector<256x128xf32> to vector<256x128xbf16>
    %c0_7 = arith.constant 0 : index
    %c0_8 = arith.constant 0 : index
    %13 = vector.load %arg4[%c0_7, %c0_8] : memref<256x128xbf16, #tpu.memory_space<vmem>>, vector<256x128xbf16>
    tpu.vector_store %arg4[%c0_7, %c0_8], %12 {strides = array<i32>} : memref<256x128xbf16, #tpu.memory_space<vmem>>, vector<256x128xbf16>,
    return
  }
  func.func @transform_0(%arg0: i32) -> (i32, i32) {
    %c0_i32 = arith.constant 0 : i32
    %c0_i32_0 = arith.constant 0 : i32
    return %arg0, %c0_i32 : i32, i32
  }
  func.func @transform_1(%arg0: i32) -> (i32, i32) {
    %c0_i32 = arith.constant 0 : i32
    %c0_i32_0 = arith.constant 0 : i32
    %c0_i32_1 = arith.constant 0 : i32
    return %c0_i32, %c0_i32_0 : i32, i32
  }
  func.func @transform_2(%arg0: i32) -> (i32, i32) {
    %c0_i32 = arith.constant 0 : i32
    %c0_i32_0 = arith.constant 0 : i32
    %c0_i32_1 = arith.constant 0 : i32
    return %c0_i32, %c0_i32_0 : i32, i32
  }
  func.func @transform_3(%arg0: i32) -> (i32, i32) {
    %c0_i32 = arith.constant 0 : i32
    %c0_i32_0 = arith.constant 0 : i32
    return %arg0, %c0_i32 : i32, i32
  }
}

module attributes {stable_mosaic.version = 11 : i64} {
  func.func @kernel(%arg0: i32, %arg1: memref<128x128xbf16, #tpu.memory_space<vmem>>, %arg2: memref<128x128xbf16, #tpu.memory_space<vmem>>, %arg3: memref<1x128xf32, #tpu.memory_space<vmem>>, %arg4: memref<128x128xf32, #tpu.memory_space<vmem>>) attributes {dimension_semantics = [#tpu.dimension_semantics<parallel>], iteration_bounds = array<i64: 1>, scalar_prefetch = 0 : i64, scratch_operands = 0 : i64, tpu.core_type = #tpu.core_type<tc>, window_params = [{transform_indices = @transform_0, window_bounds = array<i64: 128, 128>}, {pipeline_mode = #tpu.pipeline_mode<synchronous>, transform_indices = @transform_1, window_bounds = array<i64: 128, 128>}, {pipeline_mode = #tpu.pipeline_mode<synchronous>, transform_indices = @transform_2, window_bounds = array<i64: 1, 128>}, {transform_indices = @transform_3, window_bounds = array<i64: 128, 128>}]} {
    %c0 = arith.constant 0 : index
    %c0_0 = arith.constant 0 : index
    %0 = vector.load %arg1[%c0, %c0_0] : memref<128x128xbf16, #tpu.memory_space<vmem>>, vector<128x128xbf16>
    %c0_1 = arith.constant 0 : index
    %c0_2 = arith.constant 0 : index
    %1 = vector.load %arg2[%c0_1, %c0_2] : memref<128x128xbf16, #tpu.memory_space<vmem>>, vector<128x128xbf16>
    %cst = arith.constant dense<0.000000e+00> : vector<128x128xf32>
    %2 = tpu.matmul %0, %1, %cst {dimension_numbers = #tpu.dot_dimension_numbers<[1], [0], [0], [1], [0, 0, 1, 1], [], []>} : vector<128x128xbf16>, vector<128x128xbf16>, vector<128x128xf32> -> vector<128x128xf32>
    %c0_3 = arith.constant 0 : index
    %c0_4 = arith.constant 0 : index
    %3 = vector.load %arg3[%c0_3, %c0_4] : memref<1x128xf32, #tpu.memory_space<vmem>>, vector<1x128xf32>
    %4 = vector.broadcast %3 : vector<1x128xf32> to vector<128x128xf32>
    %5 = arith.addf %2, %4 : vector<128x128xf32>
    %c0_5 = arith.constant 0 : index
    %c0_6 = arith.constant 0 : index
    %6 = vector.load %arg4[%c0_5, %c0_6] : memref<128x128xf32, #tpu.memory_space<vmem>>, vector<128x128xf32>
    tpu.vector_store %arg4[%c0_5, %c0_6], %5 {strides = array<i32>} : memref<128x128xf32, #tpu.memory_space<vmem>>, vector<128x128xf32>,
    return
  }
  func.func @transform_0(%arg0: i32) -> (i32, i32) {
    %c0_i32 = arith.constant 0 : i32
    %c0_i32_0 = arith.constant 0 : i32
    return %arg0, %c0_i32 : i32, i32
  }
  func.func @transform_1(%arg0: i32) -> (i32, i32) {
    %c0_i32 = arith.constant 0 : i32
    %c0_i32_0 = arith.constant 0 : i32
    %c0_i32_1 = arith.constant 0 : i32
    return %c0_i32, %c0_i32_0 : i32, i32
  }
  func.func @transform_2(%arg0: i32) -> (i32, i32) {
    %c0_i32 = arith.constant 0 : i32
    %c0_i32_0 = arith.constant 0 : i32
    %c0_i32_1 = arith.constant 0 : i32
    return %c0_i32, %c0_i32_0 : i32, i32
  }
  func.func @transform_3(%arg0: i32) -> (i32, i32) {
    %c0_i32 = arith.constant 0 : i32
    %c0_i32_0 = arith.constant 0 : i32
    return %arg0, %c0_i32 : i32, i32
  }
}

module attributes {stable_mosaic.version = 11 : i64} {
  func.func @kernel(%arg0: i32, %arg1: memref<128x1152xbf16, #tpu.memory_space<vmem>>, %arg2: memref<1152x128xbf16, #tpu.memory_space<vmem>>, %arg3: memref<1x128xf32, #tpu.memory_space<vmem>>, %arg4: memref<128x128xf32, #tpu.memory_space<vmem>>, %arg5: memref<128x128xf32, #tpu.memory_space<vmem>>) attributes {dimension_semantics = [#tpu.dimension_semantics<parallel>], iteration_bounds = array<i64: 1>, scalar_prefetch = 0 : i64, scratch_operands = 0 : i64, tpu.core_type = #tpu.core_type<tc>, window_params = [{transform_indices = @transform_0, window_bounds = array<i64: 128, 1152>}, {pipeline_mode = #tpu.pipeline_mode<synchronous>, transform_indices = @transform_1, window_bounds = array<i64: 1152, 128>}, {pipeline_mode = #tpu.pipeline_mode<synchronous>, transform_indices = @transform_2, window_bounds = array<i64: 1, 128>}, {transform_indices = @transform_3, window_bounds = array<i64: 128, 128>}, {transform_indices = @transform_4, window_bounds = array<i64: 128, 128>}]} {
    %c0 = arith.constant 0 : index
    %c0_0 = arith.constant 0 : index
    %0 = vector.load %arg1[%c0, %c0_0] : memref<128x1152xbf16, #tpu.memory_space<vmem>>, vector<128x1152xbf16>
    %c0_1 = arith.constant 0 : index
    %c0_2 = arith.constant 0 : index
    %1 = vector.load %arg2[%c0_1, %c0_2] : memref<1152x128xbf16, #tpu.memory_space<vmem>>, vector<1152x128xbf16>
    %cst = arith.constant dense<0.000000e+00> : vector<128x128xf32>
    %2 = tpu.matmul %0, %1, %cst {dimension_numbers = #tpu.dot_dimension_numbers<[1], [0], [0], [1], [0, 0, 1, 1], [], []>} : vector<128x1152xbf16>, vector<1152x128xbf16>, vector<128x128xf32> -> vector<128x128xf32>
    %c0_3 = arith.constant 0 : index
    %c0_4 = arith.constant 0 : index
    %3 = vector.load %arg3[%c0_3, %c0_4] : memref<1x128xf32, #tpu.memory_space<vmem>>, vector<1x128xf32>
    %4 = vector.broadcast %3 : vector<1x128xf32> to vector<128x128xf32>
    %5 = arith.addf %2, %4 : vector<128x128xf32>
    %c0_5 = arith.constant 0 : index
    %c0_6 = arith.constant 0 : index
    %6 = vector.load %arg4[%c0_5, %c0_6] : memref<128x128xf32, #tpu.memory_space<vmem>>, vector<128x128xf32>
    %7 = arith.addf %5, %6 : vector<128x128xf32>
    %c0_7 = arith.constant 0 : index
    %c0_8 = arith.constant 0 : index
    %8 = vector.load %arg5[%c0_7, %c0_8] : memref<128x128xf32, #tpu.memory_space<vmem>>, vector<128x128xf32>
    tpu.vector_store %arg5[%c0_7, %c0_8], %7 {strides = array<i32>} : memref<128x128xf32, #tpu.memory_space<vmem>>, vector<128x128xf32>,
    return
  }
  func.func @transform_0(%arg0: i32) -> (i32, i32) {
    %c0_i32 = arith.constant 0 : i32
    %c0_i32_0 = arith.constant 0 : i32
    return %arg0, %c0_i32 : i32, i32
  }
  func.func @transform_1(%arg0: i32) -> (i32, i32) {
    %c0_i32 = arith.constant 0 : i32
    %c0_i32_0 = arith.constant 0 : i32
    %c0_i32_1 = arith.constant 0 : i32
    return %c0_i32, %c0_i32_0 : i32, i32
  }
  func.func @transform_2(%arg0: i32) -> (i32, i32) {
    %c0_i32 = arith.constant 0 : i32
    %c0_i32_0 = arith.constant 0 : i32
    %c0_i32_1 = arith.constant 0 : i32
    return %c0_i32, %c0_i32_0 : i32, i32
  }
  func.func @transform_3(%arg0: i32) -> (i32, i32) {
    %c0_i32 = arith.constant 0 : i32
    %c0_i32_0 = arith.constant 0 : i32
    return %arg0, %c0_i32 : i32, i32
  }
  func.func @transform_4(%arg0: i32) -> (i32, i32) {
    %c0_i32 = arith.constant 0 : i32
    %c0_i32_0 = arith.constant 0 : i32
    return %arg0, %c0_i32 : i32, i32
  }
}

module attributes {stable_mosaic.version = 11 : i64} {
  func.func @kernel(%arg0: i32, %arg1: memref<2x2048xbf16, #tpu.memory_space<vmem>>, %arg2: memref<2048x64xbf16, #tpu.memory_space<vmem>>, %arg3: memref<1x64xf32, #tpu.memory_space<vmem>>, %arg4: memref<2x64xf32, #tpu.memory_space<vmem>>) attributes {dimension_semantics = [#tpu.dimension_semantics<parallel>], iteration_bounds = array<i64: 1>, scalar_prefetch = 0 : i64, scratch_operands = 0 : i64, tpu.core_type = #tpu.core_type<tc>, window_params = [{transform_indices = @transform_0, window_bounds = array<i64: 2, 2048>}, {pipeline_mode = #tpu.pipeline_mode<synchronous>, transform_indices = @transform_1, window_bounds = array<i64: 2048, 64>}, {pipeline_mode = #tpu.pipeline_mode<synchronous>, transform_indices = @transform_2, window_bounds = array<i64: 1, 64>}, {transform_indices = @transform_3, window_bounds = array<i64: 2, 64>}]} {
    %c0 = arith.constant 0 : index
    %c0_0 = arith.constant 0 : index
    %0 = vector.load %arg1[%c0, %c0_0] : memref<2x2048xbf16, #tpu.memory_space<vmem>>, vector<2x2048xbf16>
    %c0_1 = arith.constant 0 : index
    %c0_2 = arith.constant 0 : index
    %1 = vector.load %arg2[%c0_1, %c0_2] : memref<2048x64xbf16, #tpu.memory_space<vmem>>, vector<2048x64xbf16>
    %cst = arith.constant dense<0.000000e+00> : vector<2x64xf32>
    %2 = tpu.matmul %0, %1, %cst {dimension_numbers = #tpu.dot_dimension_numbers<[1], [0], [0], [1], [0, 0, 1, 1], [], []>} : vector<2x2048xbf16>, vector<2048x64xbf16>, vector<2x64xf32> -> vector<2x64xf32>
    %c0_3 = arith.constant 0 : index
    %c0_4 = arith.constant 0 : index
    %3 = vector.load %arg3[%c0_3, %c0_4] : memref<1x64xf32, #tpu.memory_space<vmem>>, vector<1x64xf32>
    %4 = vector.broadcast %3 : vector<1x64xf32> to vector<2x64xf32>
    %5 = arith.addf %2, %4 : vector<2x64xf32>
    %c0_5 = arith.constant 0 : index
    %c0_6 = arith.constant 0 : index
    %6 = vector.load %arg4[%c0_5, %c0_6] : memref<2x64xf32, #tpu.memory_space<vmem>>, vector<2x64xf32>
    tpu.vector_store %arg4[%c0_5, %c0_6], %5 {strides = array<i32>} : memref<2x64xf32, #tpu.memory_space<vmem>>, vector<2x64xf32>,
    return
  }
  func.func @transform_0(%arg0: i32) -> (i32, i32) {
    %c0_i32 = arith.constant 0 : i32
    %c0_i32_0 = arith.constant 0 : i32
    return %arg0, %c0_i32 : i32, i32
  }
  func.func @transform_1(%arg0: i32) -> (i32, i32) {
    %c0_i32 = arith.constant 0 : i32
    %c0_i32_0 = arith.constant 0 : i32
    %c0_i32_1 = arith.constant 0 : i32
    return %c0_i32, %c0_i32_0 : i32, i32
  }
  func.func @transform_2(%arg0: i32) -> (i32, i32) {
    %c0_i32 = arith.constant 0 : i32
    %c0_i32_0 = arith.constant 0 : i32
    %c0_i32_1 = arith.constant 0 : i32
    return %c0_i32, %c0_i32_0 : i32, i32
  }
  func.func @transform_3(%arg0: i32) -> (i32, i32) {
    %c0_i32 = arith.constant 0 : i32
    %c0_i32_0 = arith.constant 0 : i32
    return %arg0, %c0_i32 : i32, i32
  }
}

</mosaic_0001>

<llo_original>
// kernel: network_builder_forward.5
$region0: #{network_builder_forward.5}
  #allocation0 [shape = 'u32[]', space=smem, size = 0x4, offset = 0x4, fixed_abs, tag = 'smem constant byte address 0x4 - core index']
  #allocation1 [shape = 'u32[144,128]{1,0:T(1,128)}', space=vmem, size = 0x12000, scoped, tag = 'internal scratch']
  %s0 = inlined_call_operand.vmem [shape: bf16[512,36], index: 0, kind: input, shape index: {}]
  %s1 = inlined_call_operand.vmem [shape: bf16[36,128], index: 1, kind: input, shape index: {}]
  %s2 = inlined_call_operand.vmem [shape: f32[4,128], index: 2, kind: input, shape index: {}]
  %s3 = inlined_call_operand.vmem [shape: bf16[512,128], index: 3, kind: output, shape index: {}]
  %s4 = sld [smem:[#allocation0]]
  $region45: #{network_builder_forward.5} parent=0
    _
  %s6 = ssub.s32 1, %s4
  %s7 = scalar_select 0, %s6, %s4
  loop: start=0, step=1, limit=4
  $region2: #{network_builder_forward.5} parent=0 // loop_pre_header
    _
  $region3: #{network_builder_forward.5} parent=0 // loop_header
    %s9 = sphi 0, %s13
    %p10 = scmp.ge.s32.totalorder %s9, 4
    %s19 = sphi 0, %s21
    %s22 = sphi 0, %s19
    %s23 = sphi 0, %s22
    %s39 = sphi 0, %s23
    %s43 = sphi 0, %s43
    %s45 = sphi 0, %s43
    %s46 = sphi 0, %s45
    %s60 = sphi 0, %s46
    %s64 = sphi 0, %s64
    %s66 = sphi 0, %s64
    %s67 = sphi 0, %s66
    %s81 = sphi 0, %s67
    %s87 = sphi 0, %s89
    %s90 = sphi 0, %s87
    %s91 = sphi 0, %s90
    %s107 = sphi 0, %s91
  $region4: #{network_builder_forward.5} parent=0 // loop_header_branch
    %12 = sbr.rel (%p10) target = $region8
  $region5: #{network_builder_forward.5} parent=0 // loop_body
    %s14 = ssub.s32 %s9, 1
    %s15 = ssub.s32 %s9, 2
    %s16 = sadd.s32 %s9, 1
    %s17 = ssub.s32 %s9, %s16
    %p18 = scmp.eq.s32.totalorder %s17, 0
    %s20 = sadd.s32 %s19, 1
    %s21 = scalar_select %p18, %s19, %s20
    %p24 = pneg %p18
    %p25 = scmp.eq.s32.totalorder %s9, 1
    %p26 = por %p24, %p25
    %p27 = scmp.ne.s32.totalorder %s19, %s22
    %p28 = scmp.eq.s32.totalorder %s9, 0
    %p29 = por %p27, %p28
    %p30 = scmp.ne.s32.totalorder %s19, %s22
    %p31 = scmp.eq.s32.totalorder %s14, 1
    %p32 = por %p30, %p31
    %p33 = scmp.ne.s32.totalorder %s22, %s23
    %p34 = scmp.eq.s32.totalorder %s14, 0
    %p35 = por %p33, %p34
    %p36 = scmp.ne.s32.totalorder %s22, %s23
    %p37 = scmp.eq.s32.totalorder %s15, 1
    %p38 = por %p36, %p37
    %p40 = scmp.ne.s32.totalorder %s23, %s39
    %p41 = scmp.eq.s32.totalorder %s15, 0
    %p42 = por %p40, %p41
    %s44 = sadd.s32 %s43, 1
    %p47 = scmp.eq.s32.totalorder %s9, 1
    %p48 = scmp.ne.s32.totalorder %s43, %s45
    %p49 = scmp.eq.s32.totalorder %s9, 0
    %p50 = por %p48, %p49
    %p51 = scmp.ne.s32.totalorder %s43, %s45
    %p52 = scmp.eq.s32.totalorder %s14, 1
    %p53 = por %p51, %p52
    %p54 = scmp.ne.s32.totalorder %s45, %s46
    %p55 = scmp.eq.s32.totalorder %s14, 0
    %p56 = por %p54, %p55
    %p57 = scmp.ne.s32.totalorder %s45, %s46
    %p58 = scmp.eq.s32.totalorder %s15, 1
    %p59 = por %p57, %p58
    %p61 = scmp.ne.s32.totalorder %s46, %s60
    %p62 = scmp.eq.s32.totalorder %s15, 0
    %p63 = por %p61, %p62
    %s65 = sadd.s32 %s64, 1
    %p68 = scmp.eq.s32.totalorder %s9, 1
    %p69 = scmp.ne.s32.totalorder %s64, %s66
    %p70 = scmp.eq.s32.totalorder %s9, 0
    %p71 = por %p69, %p70
    %p72 = scmp.ne.s32.totalorder %s64, %s66
    %p73 = scmp.eq.s32.totalorder %s14, 1
    %p74 = por %p72, %p73
    %p75 = scmp.ne.s32.totalorder %s66, %s67
    %p76 = scmp.eq.s32.totalorder %s14, 0
    %p77 = por %p75, %p76
    %p78 = scmp.ne.s32.totalorder %s66, %s67
    %p79 = scmp.eq.s32.totalorder %s15, 1
    %p80 = por %p78, %p79
    %p82 = scmp.ne.s32.totalorder %s67, %s81
    %p83 = scmp.eq.s32.totalorder %s15, 0
    %p84 = por %p82, %p83
    %s85 = ssub.s32 %s9, %s16
    %p86 = scmp.eq.s32.totalorder %s85, 0
    %s88 = sadd.s32 %s87, 1
    %s89 = scalar_select %p86, %s87, %s88
    %p92 = pneg %p86
    %p93 = scmp.eq.s32.totalorder %s9, 1
    %p94 = por %p92, %p93
    %p95 = scmp.ne.s32.totalorder %s87, %s90
    %p96 = scmp.eq.s32.totalorder %s9, 0
    %p97 = por %p95, %p96
    %p98 = scmp.ne.s32.totalorder %s87, %s90
    %p99 = scmp.eq.s32.totalorder %s14, 1
    %p100 = por %p98, %p99
    %p101 = scmp.ne.s32.totalorder %s90, %s91
    %p102 = scmp.eq.s32.totalorder %s14, 0
    %p103 = por %p101, %p102
    %p104 = scmp.ne.s32.totalorder %s90, %s91
    %p105 = scmp.eq.s32.totalorder %s15, 1
    %p106 = por %p104, %p105
    %p108 = scmp.ne.s32.totalorder %s91, %s107
    %p109 = scmp.eq.s32.totalorder %s15, 0
    %p110 = por %p108, %p109
    %p111 = scmp.le.s32.totalorder 1, %s9
    %p112 = scmp.lt.s32.totalorder %s9, 3
    %p113 = pnand %p111, %p112
    %p114 = pneg %p113
    // Predicated region
    $region9: #{network_builder_forward.5} parent=5 // pred_check
      _
    $region10: #{network_builder_forward.5} parent=5 // pred_check_branch
      %116 = sbr.rel (%p113) target = $region12
    $region11: #{network_builder_forward.5} parent=5 // pred_region
      %s117 = ssub.s32 %s9, 1
      // Predicated region
      $region13: #{network_builder_forward.5} parent=11 // pred_check
        %p118 = pneg %p56
      $region14: #{network_builder_forward.5} parent=11 // pred_check_branch
        %120 = sbr.rel (%p118) target = $region16
      $region15: #{network_builder_forward.5} parent=11 // pred_region
        _
      $region16: #{network_builder_forward.5} parent=11 // pred_fallthru
        _
      // Predicated region
      $region17: #{network_builder_forward.5} parent=11 // pred_check
        %p121 = pneg %p77
      $region18: #{network_builder_forward.5} parent=11 // pred_check_branch
        %123 = sbr.rel (%p121) target = $region20
      $region19: #{network_builder_forward.5} parent=11 // pred_region
        _
      $region20: #{network_builder_forward.5} parent=11 // pred_fallthru
        _
    $region12: #{network_builder_forward.5} parent=5 // pred_fallthru
      _
    %p124 = scmp.lt.s32.totalorder %s9, 2
    // Predicated region
    $region21: #{network_builder_forward.5} parent=5 // pred_check
      %p125 = pneg %p124
    $region22: #{network_builder_forward.5} parent=5 // pred_check_branch
      %127 = sbr.rel (%p125) target = $region24
    $region23: #{network_builder_forward.5} parent=5 // pred_region
      // Predicated region
      $region25: #{network_builder_forward.5} parent=23 // pred_check
        %p128 = pneg %p29
      $region26: #{network_builder_forward.5} parent=23 // pred_check_branch
        %130 = sbr.rel (%p128) target = $region28
      $region27: #{network_builder_forward.5} parent=23 // pred_region
        %s131 = smul.u32 32, %s9
        %p132 = scmp.lt.s32.totalorder %s131, 63
        %s133 = scalar_select %p132, %s131, 63
        %s134 = smul.addr %s133, 4
        %s135 = scalar_lea.vmem %s0, %s134
        %s136 = smul.u32 32, %s9
      $region28: #{network_builder_forward.5} parent=23 // pred_fallthru
        _
    $region24: #{network_builder_forward.5} parent=5 // pred_fallthru
      _
    %p137 = scmp.le.s32.totalorder 1, %s9
    %p138 = scmp.lt.s32.totalorder %s9, 3
    %p139 = pnand %p137, %p138
    %p140 = pneg %p139
    // Predicated region
    $region29: #{network_builder_forward.5} parent=5 // pred_check
      _
    $region30: #{network_builder_forward.5} parent=5 // pred_check_branch
      %142 = sbr.rel (%p139) target = $region32
    $region31: #{network_builder_forward.5} parent=5 // pred_region
      %s143 = ssub.s32 %s9, 1
      %s144 = smul.u32 32, %s14
      %p145 = scmp.lt.s32.totalorder %s144, 63
      %s146 = scalar_select %p145, %s144, 63
      %s147 = smul.addr %s146, 4
      %s148 = scalar_lea.vmem %s0, %s147
      %p149 = pneg %p35
      %p150 = pneg %p32
      %p151 = pneg %p56
      %p152 = pneg %p53
      %p153 = pneg %p77
      %p154 = pneg %p74
      %p155 = pneg %p103
      %p156 = pneg %p100
      %s157 = smul.u32 32, %s14
      %p158 = scmp.lt.s32.totalorder %s157, 63
      %s159 = scalar_select %p158, %s157, 63
      %s160 = smul.addr %s159, 4
      %s161 = scalar_lea.vmem %s3, %s160
      %s162 = smul.u32 32, %s14
      %p163 = scmp.lt.s32.totalorder %s162, 63
      %s164 = scalar_select %p163, %s162, 63
      %s165 = smul.addr %s164, 4
      %s166 = scalar_lea.vmem %s0, %s165
      %s167 = smul.u32 32, %s14
      %s168 = smul.u32 32, %s14
      %p169 = scmp.lt.s32.totalorder %s168, 63
      %s170 = scalar_select %p169, %s168, 63
      %s171 = smul.addr %s170, 4
      %s172 = scalar_lea.vmem %s3, %s171
      %s173 = smul.u32 32, %s14
      %v175 = vld [vmem:[%s166] sm:$0xf]
      %v176 = vld [vmem:[%s166 + $0x4] sm:$0xf]
      %v177 = vld [vmem:[%s166 + $0x8] sm:$0xf]
      %v178 = vld [vmem:[%s166 + $0xc] sm:$0xf]
      %v179 = vld [vmem:[%s166 + $0x10] sm:$0xf]
      %v180 = vld [vmem:[%s166 + $0x14] sm:$0xf]
      %v181 = vld [vmem:[%s166 + $0x18] sm:$0xf]
      %v182 = vld [vmem:[%s166 + $0x1c] sm:$0xf]
      %v183 = vld [vmem:[%s166 + $0x20] sm:$0xf]
      %v184 = vld [vmem:[%s166 + $0x24] sm:$0xf]
      %v185 = vld [vmem:[%s166 + $0x28] sm:$0xf]
      %v186 = vld [vmem:[%s166 + $0x2c] sm:$0xf]
      %v187 = vld [vmem:[%s166 + $0x30] sm:$0xf]
      %v188 = vld [vmem:[%s166 + $0x34] sm:$0xf]
      %v189 = vld [vmem:[%s166 + $0x38] sm:$0xf]
      %v190 = vld [vmem:[%s166 + $0x3c] sm:$0xf]
      %v191 = vld [vmem:[%s166 + $0x40] sm:$0xf]
      %v192 = vld [vmem:[%s166 + $0x44] sm:$0xf]
      %v193 = vld [vmem:[%s166 + $0x48] sm:$0xf]
      %v194 = vld [vmem:[%s166 + $0x4c] sm:$0xf]
      %v195 = vld [vmem:[%s166 + $0x50] sm:$0xf]
      %v196 = vld [vmem:[%s166 + $0x54] sm:$0xf]
      %v197 = vld [vmem:[%s166 + $0x58] sm:$0xf]
      %v198 = vld [vmem:[%s166 + $0x5c] sm:$0xf]
      %v199 = vld [vmem:[%s166 + $0x60] sm:$0xf]
      %v200 = vld [vmem:[%s166 + $0x64] sm:$0xf]
      %v201 = vld [vmem:[%s166 + $0x68] sm:$0xf]
      %v202 = vld [vmem:[%s166 + $0x6c] sm:$0xf]
      %v203 = vld [vmem:[%s166 + $0x70] sm:$0xf]
      %v204 = vld [vmem:[%s166 + $0x74] sm:$0xf]
      %v205 = vld [vmem:[%s166 + $0x78] sm:$0xf]
      %v206 = vld [vmem:[%s166 + $0x7c] sm:$0xf]
      %v207 = vld [vmem:[%s1] sm:$0xf]
      %v208 = vld [vmem:[%s1 + $0x4] sm:$0xf]
      %v209 = vld [vmem:[%s1 + $0x8] sm:$0xf]
      %v210 = vld [vmem:[%s1 + $0xc] sm:$0xf]
      %v211 = vld [vmem:[%s1 + $0x10] sm:$0x3]
      %v212 = vld [vmem:[%s2] sm:$0x1]
      %v213 = vlaneseq
      %v214 = vshrl.u32 %v213, 7
      %v215 = vsub.s32 0, %v214
      %v216 = vrot.slane %v212, %v215
      %v249 = vunpack.c.l.b16 %v175
      %v250 = vunpack.c.l.b16 %v176
      %v251 = vunpack.c.l.b16 %v177
      %v252 = vunpack.c.l.b16 %v178
      %v253 = vunpack.c.l.b16 %v179
      %v254 = vunpack.c.l.b16 %v180
      %v255 = vunpack.c.l.b16 %v181
      %v256 = vunpack.c.l.b16 %v182
      %v257 = vunpack.c.l.b16 %v183
      %v258 = vunpack.c.l.b16 %v184
      %v259 = vunpack.c.l.b16 %v185
      %v260 = vunpack.c.l.b16 %v186
      %v261 = vunpack.c.l.b16 %v187
      %v262 = vunpack.c.l.b16 %v188
      %v263 = vunpack.c.l.b16 %v189
      %v264 = vunpack.c.l.b16 %v190
      %v265 = vunpack.c.l.b16 %v191
      %v266 = vunpack.c.l.b16 %v192
      %v267 = vunpack.c.l.b16 %v193
      %v268 = vunpack.c.l.b16 %v194
      %v269 = vunpack.c.l.b16 %v195
      %v270 = vunpack.c.l.b16 %v196
      %v271 = vunpack.c.l.b16 %v197
      %v272 = vunpack.c.l.b16 %v198
      %v273 = vunpack.c.l.b16 %v199
      %v274 = vunpack.c.l.b16 %v200
      %v275 = vunpack.c.l.b16 %v201
      %v276 = vunpack.c.l.b16 %v202
      %v277 = vunpack.c.l.b16 %v203
      %v278 = vunpack.c.l.b16 %v204
      %v279 = vunpack.c.l.b16 %v205
      %v280 = vunpack.c.l.b16 %v206
      %v281 = vpack.c.b16 %v250, %v249
      %v282 = vpack.c.b16 %v252, %v251
      %v283 = vpack.c.b16 %v254, %v253
      %v284 = vpack.c.b16 %v256, %v255
      %v285 = vpack.c.b16 %v258, %v257
      %v286 = vpack.c.b16 %v260, %v259
      %v287 = vpack.c.b16 %v262, %v261
      %v288 = vpack.c.b16 %v264, %v263
      %v289 = vpack.c.b16 %v266, %v265
      %v290 = vpack.c.b16 %v268, %v267
      %v291 = vpack.c.b16 %v270, %v269
      %v292 = vpack.c.b16 %v272, %v271
      %v293 = vpack.c.b16 %v274, %v273
      %v294 = vpack.c.b16 %v276, %v275
      %v295 = vpack.c.b16 %v278, %v277
      %v296 = vpack.c.b16 %v280, %v279
      %v302 = vunpack.c.l.b16 %v207
      %v303 = vunpack.c.l.b16 %v208
      %v304 = vunpack.c.l.b16 %v209
      %v305 = vunpack.c.l.b16 %v210
      %v306 = vunpack.c.l.b16 %v211
      %v307 = vpack.c.b16 %v303, %v302
      %v308 = vpack.c.b16 %v305, %v304
      %v309 = vpack.c.b16 %v306, %v306
      %vm312 = vcmask 293888
      %v314 = vsel %vm312, %v281, 0
      %v317 = vsel %vm312, %v282, 0
      %v320 = vsel %vm312, %v283, 0
      %v323 = vsel %vm312, %v284, 0
      %v326 = vsel %vm312, %v285, 0
      %v329 = vsel %vm312, %v286, 0
      %v332 = vsel %vm312, %v287, 0
      %v335 = vsel %vm312, %v288, 0
      %v338 = vsel %vm312, %v289, 0
      %v341 = vsel %vm312, %v290, 0
      %v344 = vsel %vm312, %v291, 0
      %v347 = vsel %vm312, %v292, 0
      %v350 = vsel %vm312, %v293, 0
      %v353 = vsel %vm312, %v294, 0
      %v356 = vsel %vm312, %v295, 0
      %v359 = vsel %vm312, %v296, 0
      %vm361 = vcmask 1041408
      %v363 = vsel %vm361, %v309, 0
      %365 = vmatprep.subr.bf16.mxu0 0
      %366 = vmatpush1.bf16.msra.mxu0 %v307
      %367 = vmatprep.subr.bf16.mxu0 0
      %368 = vmatpush1.bf16.msra.mxu0 %v308
      %369 = vmatprep.subr.bf16.mxu0 0
      %370 = vmatpush1.bf16.msra.mxu0 %v363
      %371 = vmatprep.subr.bf16.mxu0 0
      %372 = vmatpush1.bf16.msra.mxu0 0
      %373 = vmatprep.subr.bf16.mxu0 0
      %374 = vmatpush1.bf16.msra.mxu0 0
      %375 = vmatprep.subr.bf16.mxu0 0
      %376 = vmatpush1.bf16.msra.mxu0 0
      %377 = vmatprep.subr.bf16.mxu0 0
      %378 = vmatpush1.bf16.msra.mxu0 0
      %379 = vmatprep.subr.bf16.mxu0 0
      %380 = vmatpush1.bf16.msra.mxu0 0
      %381 = vmatprep.subr.bf16.mxu0 0
      %382 = vmatpush1.bf16.msra.mxu0 0
      %383 = vmatprep.subr.bf16.mxu0 0
      %384 = vmatpush1.bf16.msra.mxu0 0
      %385 = vmatprep.subr.bf16.mxu0 0
      %386 = vmatpush1.bf16.msra.mxu0 0
      %387 = vmatprep.subr.bf16.mxu0 0
      %388 = vmatpush1.bf16.msra.mxu0 0
      %389 = vmatprep.subr.bf16.mxu0 0
      %390 = vmatpush1.bf16.msra.mxu0 0
      %391 = vmatprep.subr.bf16.mxu0 0
      %392 = vmatpush1.bf16.msra.mxu0 0
      %393 = vmatprep.subr.bf16.mxu0 0
      %394 = vmatpush1.bf16.msra.mxu0 0
      %395 = vmatprep.subr.bf16.mxu0 0
      %396 = vmatpush1.bf16.msra.mxu0 0
      %397 = vmatprep.mubr.bf16.mxu0 0
      %398 = vmatmul.mubr.bf16.gmra.mrb[0].mxu0 %v314
      %v399 = vpop.f32.mrb[0].mxu0
      %v400 = vadd.f32 %v216, %v399
      %v401 = vpop.f32.mrb[0].mxu0
      %v402 = vpop.f32.mrb[0].mxu0
      %v403 = vadd.f32 %v216, %v402
      %v404 = vpop.f32.mrb[0].mxu0
      %405 = vmatprep.mubr.bf16.mxu0 0
      %406 = vmatmul.mubr.bf16.gmra.mrb[0].mxu0 %v317
      %v407 = vpop.f32.mrb[0].mxu0
      %v408 = vadd.f32 %v216, %v407
      %v409 = vpop.f32.mrb[0].mxu0
      %v410 = vpop.f32.mrb[0].mxu0
      %v411 = vadd.f32 %v216, %v410
      %v412 = vpop.f32.mrb[0].mxu0
      %413 = vmatprep.mubr.bf16.mxu0 0
      %414 = vmatmul.mubr.bf16.gmra.mrb[0].mxu0 %v320
      %v415 = vpop.f32.mrb[0].mxu0
      %v416 = vadd.f32 %v216, %v415
      %v417 = vpop.f32.mrb[0].mxu0
      %v418 = vpop.f32.mrb[0].mxu0
      %v419 = vadd.f32 %v216, %v418
      %v420 = vpop.f32.mrb[0].mxu0
      %421 = vmatprep.mubr.bf16.mxu0 0
      %422 = vmatmul.mubr.bf16.gmra.mrb[0].mxu0 %v323
      %v423 = vpop.f32.mrb[0].mxu0
      %v424 = vadd.f32 %v216, %v423
      %v425 = vpop.f32.mrb[0].mxu0
      %v426 = vpop.f32.mrb[0].mxu0
      %v427 = vadd.f32 %v216, %v426
      %v428 = vpop.f32.mrb[0].mxu0
      %429 = vmatprep.mubr.bf16.mxu0 0
      %430 = vmatmul.mubr.bf16.gmra.mrb[0].mxu0 %v326
      %v431 = vpop.f32.mrb[0].mxu0
      %v432 = vadd.f32 %v216, %v431
      %v433 = vpop.f32.mrb[0].mxu0
      %v434 = vpop.f32.mrb[0].mxu0
      %v435 = vadd.f32 %v216, %v434
      %v436 = vpop.f32.mrb[0].mxu0
      %437 = vmatprep.mubr.bf16.mxu0 0
      %438 = vmatmul.mubr.bf16.gmra.mrb[0].mxu0 %v329
      %v439 = vpop.f32.mrb[0].mxu0
      %v440 = vadd.f32 %v216, %v439
      %v441 = vpop.f32.mrb[0].mxu0
      %v442 = vpop.f32.mrb[0].mxu0
      %v443 = vadd.f32 %v216, %v442
      %v444 = vpop.f32.mrb[0].mxu0
      %445 = vmatprep.mubr.bf16.mxu0 0
      %446 = vmatmul.mubr.bf16.gmra.mrb[0].mxu0 %v332
      %v447 = vpop.f32.mrb[0].mxu0
      %v448 = vadd.f32 %v216, %v447
      %v449 = vpop.f32.mrb[0].mxu0
      %v450 = vpop.f32.mrb[0].mxu0
      %v451 = vadd.f32 %v216, %v450
      %v452 = vpop.f32.mrb[0].mxu0
      %453 = vmatprep.mubr.bf16.mxu0 0
      %454 = vmatmul.mubr.bf16.gmra.mrb[0].mxu0 %v335
      %v455 = vpop.f32.mrb[0].mxu0
      %v456 = vadd.f32 %v216, %v455
      %v457 = vpop.f32.mrb[0].mxu0
      %v458 = vpop.f32.mrb[0].mxu0
      %v459 = vadd.f32 %v216, %v458
      %v460 = vpop.f32.mrb[0].mxu0
      %461 = vmatprep.mubr.bf16.mxu0 0
      %462 = vmatmul.mubr.bf16.gmra.mrb[0].mxu0 %v338
      %v463 = vpop.f32.mrb[0].mxu0
      %v464 = vadd.f32 %v216, %v463
      %v465 = vpop.f32.mrb[0].mxu0
      %v466 = vpop.f32.mrb[0].mxu0
      %v467 = vadd.f32 %v216, %v466
      %v468 = vpop.f32.mrb[0].mxu0
      %469 = vmatprep.mubr.bf16.mxu0 0
      %470 = vmatmul.mubr.bf16.gmra.mrb[0].mxu0 %v341
      %v471 = vpop.f32.mrb[0].mxu0
      %v472 = vadd.f32 %v216, %v471
      %v473 = vpop.f32.mrb[0].mxu0
      %v474 = vpop.f32.mrb[0].mxu0
      %v475 = vadd.f32 %v216, %v474
      %v476 = vpop.f32.mrb[0].mxu0
      %477 = vmatprep.mubr.bf16.mxu0 0
      %478 = vmatmul.mubr.bf16.gmra.mrb[0].mxu0 %v344
      %v479 = vpop.f32.mrb[0].mxu0
      %v480 = vadd.f32 %v216, %v479
      %v481 = vpop.f32.mrb[0].mxu0
      %v482 = vpop.f32.mrb[0].mxu0
      %v483 = vadd.f32 %v216, %v482
      %v484 = vpop.f32.mrb[0].mxu0
      %485 = vmatprep.mubr.bf16.mxu0 0
      %486 = vmatmul.mubr.bf16.gmra.mrb[0].mxu0 %v347
      %v487 = vpop.f32.mrb[0].mxu0
      %v488 = vadd.f32 %v216, %v487
      %v489 = vpop.f32.mrb[0].mxu0
      %v490 = vpop.f32.mrb[0].mxu0
      %v491 = vadd.f32 %v216, %v490
      %v492 = vpop.f32.mrb[0].mxu0
      %493 = vmatprep.mubr.bf16.mxu0 0
      %494 = vmatmul.mubr.bf16.gmra.mrb[0].mxu0 %v350
      %v495 = vpop.f32.mrb[0].mxu0
      %v496 = vadd.f32 %v216, %v495
      %v497 = vpop.f32.mrb[0].mxu0
      %v498 = vpop.f32.mrb[0].mxu0
      %v499 = vadd.f32 %v216, %v498
      %v500 = vpop.f32.mrb[0].mxu0
      %501 = vmatprep.mubr.bf16.mxu0 0
      %502 = vmatmul.mubr.bf16.gmra.mrb[0].mxu0 %v353
      %v503 = vpop.f32.mrb[0].mxu0
      %v504 = vadd.f32 %v216, %v503
      %v505 = vpop.f32.mrb[0].mxu0
      %v506 = vpop.f32.mrb[0].mxu0
      %v507 = vadd.f32 %v216, %v506
      %v508 = vpop.f32.mrb[0].mxu0
      %509 = vmatprep.mubr.bf16.mxu0 0
      %510 = vmatmul.mubr.bf16.gmra.mrb[0].mxu0 %v356
      %v511 = vpop.f32.mrb[0].mxu0
      %v512 = vadd.f32 %v216, %v511
      %v513 = vpop.f32.mrb[0].mxu0
      %v514 = vpop.f32.mrb[0].mxu0
      %v515 = vadd.f32 %v216, %v514
      %v516 = vpop.f32.mrb[0].mxu0
      %517 = vmatprep.mubr.bf16.mxu0 0
      %518 = vmatmul.mubr.bf16.gmra.mrb[0].mxu0 %v359
      %v519 = vpop.f32.mrb[0].mxu0
      %v520 = vadd.f32 %v216, %v519
      %v521 = vpop.f32.mrb[0].mxu0
      %v522 = vpop.f32.mrb[0].mxu0
      %v523 = vadd.f32 %v216, %v522
      %v524 = vpop.f32.mrb[0].mxu0
      %525 = vdwg.mxu0
      %v526 = vld [vmem:[%s2 + $0x1] sm:$0x1]
      %vm527 = vcmp.ge.f32.partialorder %v400, 0.0
      %vm528 = vcmp.ge.f32.partialorder %v403, 0.0
      %vm529 = vcmp.ge.f32.partialorder %v408, 0.0
      %vm530 = vcmp.ge.f32.partialorder %v411, 0.0
      %vm531 = vcmp.ge.f32.partialorder %v416, 0.0
      %vm532 = vcmp.ge.f32.partialorder %v419, 0.0
      %vm533 = vcmp.ge.f32.partialorder %v424, 0.0
      %vm534 = vcmp.ge.f32.partialorder %v427, 0.0
      %vm535 = vcmp.ge.f32.partialorder %v432, 0.0
      %vm536 = vcmp.ge.f32.partialorder %v435, 0.0
      %vm537 = vcmp.ge.f32.partialorder %v440, 0.0
      %vm538 = vcmp.ge.f32.partialorder %v443, 0.0
      %vm539 = vcmp.ge.f32.partialorder %v448, 0.0
      %vm540 = vcmp.ge.f32.partialorder %v451, 0.0
      %vm541 = vcmp.ge.f32.partialorder %v456, 0.0
      %vm542 = vcmp.ge.f32.partialorder %v459, 0.0
      %vm543 = vcmp.ge.f32.partialorder %v464, 0.0
      %vm544 = vcmp.ge.f32.partialorder %v467, 0.0
      %vm545 = vcmp.ge.f32.partialorder %v472, 0.0
      %vm546 = vcmp.ge.f32.partialorder %v475, 0.0
      %vm547 = vcmp.ge.f32.partialorder %v480, 0.0
      %vm548 = vcmp.ge.f32.partialorder %v483, 0.0
      %vm549 = vcmp.ge.f32.partialorder %v488, 0.0
      %vm550 = vcmp.ge.f32.partialorder %v491, 0.0
      %vm551 = vcmp.ge.f32.partialorder %v496, 0.0
      %vm552 = vcmp.ge.f32.partialorder %v499, 0.0
      %vm553 = vcmp.ge.f32.partialorder %v504, 0.0
      %vm554 = vcmp.ge.f32.partialorder %v507, 0.0
      %vm555 = vcmp.ge.f32.partialorder %v512, 0.0
      %vm556 = vcmp.ge.f32.partialorder %v515, 0.0
      %vm557 = vcmp.ge.f32.partialorder %v520, 0.0
      %vm558 = vcmp.ge.f32.partialorder %v523, 0.0
      %v559 = vlaneseq
      %v560 = vshrl.u32 %v559, 7
      %v561 = vsub.s32 0, %v560
      %v562 = vrot.slane %v526, %v561
      %v563 = vmul.f32 %v562, %v400
      %v564 = vmul.f32 %v562, %v403
      %v565 = vmul.f32 %v562, %v408
      %v566 = vmul.f32 %v562, %v411
      %v567 = vmul.f32 %v562, %v416
      %v568 = vmul.f32 %v562, %v419
      %v569 = vmul.f32 %v562, %v424
      %v570 = vmul.f32 %v562, %v427
      %v571 = vmul.f32 %v562, %v432
      %v572 = vmul.f32 %v562, %v435
      %v573 = vmul.f32 %v562, %v440
      %v574 = vmul.f32 %v562, %v443
      %v575 = vmul.f32 %v562, %v448
      %v576 = vmul.f32 %v562, %v451
      %v577 = vmul.f32 %v562, %v456
      %v578 = vmul.f32 %v562, %v459
      %v579 = vmul.f32 %v562, %v464
      %v580 = vmul.f32 %v562, %v467
      %v581 = vmul.f32 %v562, %v472
      %v582 = vmul.f32 %v562, %v475
      %v583 = vmul.f32 %v562, %v480
      %v584 = vmul.f32 %v562, %v483
      %v585 = vmul.f32 %v562, %v488
      %v586 = vmul.f32 %v562, %v491
      %v587 = vmul.f32 %v562, %v496
      %v588 = vmul.f32 %v562, %v499
      %v589 = vmul.f32 %v562, %v504
      %v590 = vmul.f32 %v562, %v507
      %v591 = vmul.f32 %v562, %v512
      %v592 = vmul.f32 %v562, %v515
      %v593 = vmul.f32 %v562, %v520
      %v594 = vmul.f32 %v562, %v523
      %v595 = vsel %vm527, %v400, %v563
      %v596 = vsel %vm528, %v403, %v564
      %v597 = vsel %vm529, %v408, %v565
      %v598 = vsel %vm530, %v411, %v566
      %v599 = vsel %vm531, %v416, %v567
      %v600 = vsel %vm532, %v419, %v568
      %v601 = vsel %vm533, %v424, %v569
      %v602 = vsel %vm534, %v427, %v570
      %v603 = vsel %vm535, %v432, %v571
      %v604 = vsel %vm536, %v435, %v572
      %v605 = vsel %vm537, %v440, %v573
      %v606 = vsel %vm538, %v443, %v574
      %v607 = vsel %vm539, %v448, %v575
      %v608 = vsel %vm540, %v451, %v576
      %v609 = vsel %vm541, %v456, %v577
      %v610 = vsel %vm542, %v459, %v578
      %v611 = vsel %vm543, %v464, %v579
      %v612 = vsel %vm544, %v467, %v580
      %v613 = vsel %vm545, %v472, %v581
      %v614 = vsel %vm546, %v475, %v582
      %v615 = vsel %vm547, %v480, %v583
      %v616 = vsel %vm548, %v483, %v584
      %v617 = vsel %vm549, %v488, %v585
      %v618 = vsel %vm550, %v491, %v586
      %v619 = vsel %vm551, %v496, %v587
      %v620 = vsel %vm552, %v499, %v588
      %v621 = vsel %vm553, %v504, %v589
      %v622 = vsel %vm554, %v507, %v590
      %v623 = vsel %vm555, %v512, %v591
      %v624 = vsel %vm556, %v515, %v592
      %v625 = vsel %vm557, %v520, %v593
      %v626 = vsel %vm558, %v523, %v594
      %v627 = vld [vmem:[%s2 + $0x2] sm:$0x1]
      %v628 = vlaneseq
      %v629 = vshrl.u32 %v628, 7
      %v630 = vsub.s32 0, %v629
      %v631 = vrot.slane %v627, %v630
      %v632 = vmul.f32 %v595, %v631
      %v633 = vmul.f32 %v596, %v631
      %v634 = vmul.f32 %v597, %v631
      %v635 = vmul.f32 %v598, %v631
      %v636 = vmul.f32 %v599, %v631
      %v637 = vmul.f32 %v600, %v631
      %v638 = vmul.f32 %v601, %v631
      %v639 = vmul.f32 %v602, %v631
      %v640 = vmul.f32 %v603, %v631
      %v641 = vmul.f32 %v604, %v631
      %v642 = vmul.f32 %v605, %v631
      %v643 = vmul.f32 %v606, %v631
      %v644 = vmul.f32 %v607, %v631
      %v645 = vmul.f32 %v608, %v631
      %v646 = vmul.f32 %v609, %v631
      %v647 = vmul.f32 %v610, %v631
      %v648 = vmul.f32 %v611, %v631
      %v649 = vmul.f32 %v612, %v631
      %v650 = vmul.f32 %v613, %v631
      %v651 = vmul.f32 %v614, %v631
      %v652 = vmul.f32 %v615, %v631
      %v653 = vmul.f32 %v616, %v631
      %v654 = vmul.f32 %v617, %v631
      %v655 = vmul.f32 %v618, %v631
      %v656 = vmul.f32 %v619, %v631
      %v657 = vmul.f32 %v620, %v631
      %v658 = vmul.f32 %v621, %v631
      %v659 = vmul.f32 %v622, %v631
      %v660 = vmul.f32 %v623, %v631
      %v661 = vmul.f32 %v624, %v631
      %v662 = vmul.f32 %v625, %v631
      %v663 = vmul.f32 %v626, %v631
      %v664 = vld [vmem:[%s2 + $0x3] sm:$0x1]
      %v665 = vlaneseq
      %v666 = vshrl.u32 %v665, 7
      %v667 = vsub.s32 0, %v666
      %v668 = vrot.slane %v664, %v667
      %v669 = vadd.f32 %v632, %v668
      %v670 = vadd.f32 %v633, %v668
      %v671 = vadd.f32 %v634, %v668
      %v672 = vadd.f32 %v635, %v668
      %v673 = vadd.f32 %v636, %v668
      %v674 = vadd.f32 %v637, %v668
      %v675 = vadd.f32 %v638, %v668
      %v676 = vadd.f32 %v639, %v668
      %v677 = vadd.f32 %v640, %v668
      %v678 = vadd.f32 %v641, %v668
      %v679 = vadd.f32 %v642, %v668
      %v680 = vadd.f32 %v643, %v668
      %v681 = vadd.f32 %v644, %v668
      %v682 = vadd.f32 %v645, %v668
      %v683 = vadd.f32 %v646, %v668
      %v684 = vadd.f32 %v647, %v668
      %v685 = vadd.f32 %v648, %v668
      %v686 = vadd.f32 %v649, %v668
      %v687 = vadd.f32 %v650, %v668
      %v688 = vadd.f32 %v651, %v668
      %v689 = vadd.f32 %v652, %v668
      %v690 = vadd.f32 %v653, %v668
      %v691 = vadd.f32 %v654, %v668
      %v692 = vadd.f32 %v655, %v668
      %v693 = vadd.f32 %v656, %v668
      %v694 = vadd.f32 %v657, %v668
      %v695 = vadd.f32 %v658, %v668
      %v696 = vadd.f32 %v659, %v668
      %v697 = vadd.f32 %v660, %v668
      %v698 = vadd.f32 %v661, %v668
      %v699 = vadd.f32 %v662, %v668
      %v700 = vadd.f32 %v663, %v668
      %v701 = vpack.c.bf16 %v670, %v669
      %v702 = vpack.c.bf16 %v672, %v671
      %v703 = vpack.c.bf16 %v674, %v673
      %v704 = vpack.c.bf16 %v676, %v675
      %v705 = vpack.c.bf16 %v678, %v677
      %v706 = vpack.c.bf16 %v680, %v679
      %v707 = vpack.c.bf16 %v682, %v681
      %v708 = vpack.c.bf16 %v684, %v683
      %v709 = vpack.c.bf16 %v686, %v685
      %v710 = vpack.c.bf16 %v688, %v687
      %v711 = vpack.c.bf16 %v690, %v689
      %v712 = vpack.c.bf16 %v692, %v691
      %v713 = vpack.c.bf16 %v694, %v693
      %v714 = vpack.c.bf16 %v696, %v695
      %v715 = vpack.c.bf16 %v698, %v697
      %v716 = vpack.c.bf16 %v700, %v699
      %v733 = vunpack.c.l.b16 %v701
      %v734 = vunpack.c.h.b16 %v701
      %v735 = vunpack.c.l.b16 %v702
      %v736 = vunpack.c.h.b16 %v702
      %v737 = vunpack.c.l.b16 %v703
      %v738 = vunpack.c.h.b16 %v703
      %v739 = vunpack.c.l.b16 %v704
      %v740 = vunpack.c.h.b16 %v704
      %v741 = vunpack.c.l.b16 %v705
      %v742 = vunpack.c.h.b16 %v705
      %v743 = vunpack.c.l.b16 %v706
      %v744 = vunpack.c.h.b16 %v706
      %v745 = vunpack.c.l.b16 %v707
      %v746 = vunpack.c.h.b16 %v707
      %v747 = vunpack.c.l.b16 %v708
      %v748 = vunpack.c.h.b16 %v708
      %v749 = vunpack.c.l.b16 %v709
      %v750 = vunpack.c.h.b16 %v709
      %v751 = vunpack.c.l.b16 %v710
      %v752 = vunpack.c.h.b16 %v710
      %v753 = vunpack.c.l.b16 %v711
      %v754 = vunpack.c.h.b16 %v711
      %v755 = vunpack.c.l.b16 %v712
      %v756 = vunpack.c.h.b16 %v712
      %v757 = vunpack.c.l.b16 %v713
      %v758 = vunpack.c.h.b16 %v713
      %v759 = vunpack.c.l.b16 %v714
      %v760 = vunpack.c.h.b16 %v714
      %v761 = vunpack.c.l.b16 %v715
      %v762 = vunpack.c.h.b16 %v715
      %v763 = vunpack.c.l.b16 %v716
      %v764 = vunpack.c.h.b16 %v716
      %v765 = vpack.c.b16 %v733, %v733
      %v766 = vpack.c.b16 %v734, %v734
      %v767 = vpack.c.b16 %v735, %v735
      %v768 = vpack.c.b16 %v736, %v736
      %v769 = vpack.c.b16 %v737, %v737
      %v770 = vpack.c.b16 %v738, %v738
      %v771 = vpack.c.b16 %v739, %v739
      %v772 = vpack.c.b16 %v740, %v740
      %v773 = vpack.c.b16 %v741, %v741
      %v774 = vpack.c.b16 %v742, %v742
      %v775 = vpack.c.b16 %v743, %v743
      %v776 = vpack.c.b16 %v744, %v744
      %v777 = vpack.c.b16 %v745, %v745
      %v778 = vpack.c.b16 %v746, %v746
      %v779 = vpack.c.b16 %v747, %v747
      %v780 = vpack.c.b16 %v748, %v748
      %v781 = vpack.c.b16 %v749, %v749
      %v782 = vpack.c.b16 %v750, %v750
      %v783 = vpack.c.b16 %v751, %v751
      %v784 = vpack.c.b16 %v752, %v752
      %v785 = vpack.c.b16 %v753, %v753
      %v786 = vpack.c.b16 %v754, %v754
      %v787 = vpack.c.b16 %v755, %v755
      %v788 = vpack.c.b16 %v756, %v756
      %v789 = vpack.c.b16 %v757, %v757
      %v790 = vpack.c.b16 %v758, %v758
      %v791 = vpack.c.b16 %v759, %v759
      %v792 = vpack.c.b16 %v760, %v760
      %v793 = vpack.c.b16 %v761, %v761
      %v794 = vpack.c.b16 %v762, %v762
      %v795 = vpack.c.b16 %v763, %v763
      %v796 = vpack.c.b16 %v764, %v764
      %829 = vst [vmem:[%s172] sm:$0xf] %v765
      %830 = vst [vmem:[%s172 + $0x4] sm:$0xf] %v766
      %831 = vst [vmem:[%s172 + $0x8] sm:$0xf] %v767
      %832 = vst [vmem:[%s172 + $0xc] sm:$0xf] %v768
      %833 = vst [vmem:[%s172 + $0x10] sm:$0xf] %v769
      %834 = vst [vmem:[%s172 + $0x14] sm:$0xf] %v770
      %835 = vst [vmem:[%s172 + $0x18] sm:$0xf] %v771
      %836 = vst [vmem:[%s172 + $0x1c] sm:$0xf] %v772
      %837 = vst [vmem:[%s172 + $0x20] sm:$0xf] %v773
      %838 = vst [vmem:[%s172 + $0x24] sm:$0xf] %v774
      %839 = vst [vmem:[%s172 + $0x28] sm:$0xf] %v775
      %840 = vst [vmem:[%s172 + $0x2c] sm:$0xf] %v776
      %841 = vst [vmem:[%s172 + $0x30] sm:$0xf] %v777
      %842 = vst [vmem:[%s172 + $0x34] sm:$0xf] %v778
      %843 = vst [vmem:[%s172 + $0x38] sm:$0xf] %v779
      %844 = vst [vmem:[%s172 + $0x3c] sm:$0xf] %v780
      %845 = vst [vmem:[%s172 + $0x40] sm:$0xf] %v781
      %846 = vst [vmem:[%s172 + $0x44] sm:$0xf] %v782
      %847 = vst [vmem:[%s172 + $0x48] sm:$0xf] %v783
      %848 = vst [vmem:[%s172 + $0x4c] sm:$0xf] %v784
      %849 = vst [vmem:[%s172 + $0x50] sm:$0xf] %v785
      %850 = vst [vmem:[%s172 + $0x54] sm:$0xf] %v786
      %851 = vst [vmem:[%s172 + $0x58] sm:$0xf] %v787
      %852 = vst [vmem:[%s172 + $0x5c] sm:$0xf] %v788
      %853 = vst [vmem:[%s172 + $0x60] sm:$0xf] %v789
      %854 = vst [vmem:[%s172 + $0x64] sm:$0xf] %v790
      %855 = vst [vmem:[%s172 + $0x68] sm:$0xf] %v791
      %856 = vst [vmem:[%s172 + $0x6c] sm:$0xf] %v792
      %857 = vst [vmem:[%s172 + $0x70] sm:$0xf] %v793
      %858 = vst [vmem:[%s172 + $0x74] sm:$0xf] %v794
      %859 = vst [vmem:[%s172 + $0x78] sm:$0xf] %v795
      %860 = vst [vmem:[%s172 + $0x7c] sm:$0xf] %v796
      %s861 = smul.u32 32, %s14
      %p862 = scmp.lt.s32.totalorder %s861, 63
      %s863 = scalar_select %p862, %s861, 63
      %s864 = smul.addr %s863, 4
      %s865 = scalar_lea.vmem %s3, %s864
      // Predicated region
      $region33: #{network_builder_forward.5} parent=31 // pred_check
        %p866 = pneg %p100
      $region34: #{network_builder_forward.5} parent=31 // pred_check_branch
        %868 = sbr.rel (%p866) target = $region36
      $region35: #{network_builder_forward.5} parent=31 // pred_region
        %s869 = smul.u32 32, %s14
      $region36: #{network_builder_forward.5} parent=31 // pred_fallthru
        _
    $region32: #{network_builder_forward.5} parent=5 // pred_fallthru
      _
    %p870 = scmp.le.s32.totalorder 2, %s9
    // Predicated region
    $region37: #{network_builder_forward.5} parent=5 // pred_check
      %p871 = pneg %p870
    $region38: #{network_builder_forward.5} parent=5 // pred_check_branch
      %873 = sbr.rel (%p871) target = $region40
    $region39: #{network_builder_forward.5} parent=5 // pred_region
      %s874 = ssub.s32 %s9, 2
      // Predicated region
      $region41: #{network_builder_forward.5} parent=39 // pred_check
        %p875 = pneg %p106
      $region42: #{network_builder_forward.5} parent=39 // pred_check_branch
        %877 = sbr.rel (%p875) target = $region44
      $region43: #{network_builder_forward.5} parent=39 // pred_region
        %s878 = smul.u32 32, %s15
        %p879 = scmp.lt.s32.totalorder %s878, 63
        %s880 = scalar_select %p879, %s878, 63
        %s881 = smul.addr %s880, 4
        %s882 = scalar_lea.vmem %s3, %s881
      $region44: #{network_builder_forward.5} parent=39 // pred_fallthru
        _
    $region40: #{network_builder_forward.5} parent=5 // pred_fallthru
      _
  $region6: #{network_builder_forward.5} parent=0 // loop_footer
    %s13 = sadd.s32 1, %s9
  $region7: #{network_builder_forward.5} parent=0 // loop_footer_branch
    %8 = sbr.rel target = $region3
  $region8: #{network_builder_forward.5} parent=0 // loop_exit
    _

// kernel: network_builder_forward.6
$region0: #{network_builder_forward.6}
  #allocation0 [shape = 'u32[]', space=smem, size = 0x4, offset = 0x4, fixed_abs, tag = 'smem constant byte address 0x4 - core index']
  #allocation1 [shape = 'u32[144,128]{1,0:T(1,128)}', space=vmem, size = 0x12000, scoped, tag = 'internal scratch']
  %s0 = inlined_call_operand.vmem [shape: bf16[128,128], index: 0, kind: input, shape index: {}]
  %s1 = inlined_call_operand.vmem [shape: bf16[128,128], index: 1, kind: input, shape index: {}]
  %s2 = inlined_call_operand.vmem [shape: f32[1,128], index: 2, kind: input, shape index: {}]
  %s3 = inlined_call_operand.vmem [shape: f32[128,128], index: 3, kind: output, shape index: {}]
  %s4 = sld [smem:[#allocation0]]
  $region22: #{network_builder_forward.6} parent=0
    _
  %s6 = ssub.s32 1, %s4
  %s7 = scalar_select 0, %s6, %s4
  // Predicated region
  $region2: #{network_builder_forward.6} parent=0 // pred_check
    _
  $region3: #{network_builder_forward.6} parent=0 // pred_check_branch
    %9 = sbr.rel (0) target = $region5
  $region4: #{network_builder_forward.6} parent=0 // pred_region
    _
  $region5: #{network_builder_forward.6} parent=0 // pred_fallthru
    _
  // Predicated region
  $region6: #{network_builder_forward.6} parent=0 // pred_check
    _
  $region7: #{network_builder_forward.6} parent=0 // pred_check_branch
    %11 = sbr.rel (0) target = $region9
  $region8: #{network_builder_forward.6} parent=0 // pred_region
    _
  $region9: #{network_builder_forward.6} parent=0 // pred_fallthru
    _
  // Predicated region
  $region10: #{network_builder_forward.6} parent=0 // pred_check
    _
  $region11: #{network_builder_forward.6} parent=0 // pred_check_branch
    %13 = sbr.rel (0) target = $region13
  $region12: #{network_builder_forward.6} parent=0 // pred_region
    _
  $region13: #{network_builder_forward.6} parent=0 // pred_fallthru
    _
  %v15 = vld [vmem:[%s0] sm:$0xf]
  %v16 = vld [vmem:[%s0 + $0x4] sm:$0xf]
  %v17 = vld [vmem:[%s0 + $0x8] sm:$0xf]
  %v18 = vld [vmem:[%s0 + $0xc] sm:$0xf]
  %v19 = vld [vmem:[%s0 + $0x10] sm:$0xf]
  %v20 = vld [vmem:[%s0 + $0x14] sm:$0xf]
  %v21 = vld [vmem:[%s0 + $0x18] sm:$0xf]
  %v22 = vld [vmem:[%s0 + $0x1c] sm:$0xf]
  %v23 = vld [vmem:[%s0 + $0x20] sm:$0xf]
  %v24 = vld [vmem:[%s0 + $0x24] sm:$0xf]
  %v25 = vld [vmem:[%s0 + $0x28] sm:$0xf]
  %v26 = vld [vmem:[%s0 + $0x2c] sm:$0xf]
  %v27 = vld [vmem:[%s0 + $0x30] sm:$0xf]
  %v28 = vld [vmem:[%s0 + $0x34] sm:$0xf]
  %v29 = vld [vmem:[%s0 + $0x38] sm:$0xf]
  %v30 = vld [vmem:[%s0 + $0x3c] sm:$0xf]
  %v31 = vld [vmem:[%s1] sm:$0xf]
  %v32 = vld [vmem:[%s1 + $0x4] sm:$0xf]
  %v33 = vld [vmem:[%s1 + $0x8] sm:$0xf]
  %v34 = vld [vmem:[%s1 + $0xc] sm:$0xf]
  %v35 = vld [vmem:[%s1 + $0x10] sm:$0xf]
  %v36 = vld [vmem:[%s1 + $0x14] sm:$0xf]
  %v37 = vld [vmem:[%s1 + $0x18] sm:$0xf]
  %v38 = vld [vmem:[%s1 + $0x1c] sm:$0xf]
  %v39 = vld [vmem:[%s1 + $0x20] sm:$0xf]
  %v40 = vld [vmem:[%s1 + $0x24] sm:$0xf]
  %v41 = vld [vmem:[%s1 + $0x28] sm:$0xf]
  %v42 = vld [vmem:[%s1 + $0x2c] sm:$0xf]
  %v43 = vld [vmem:[%s1 + $0x30] sm:$0xf]
  %v44 = vld [vmem:[%s1 + $0x34] sm:$0xf]
  %v45 = vld [vmem:[%s1 + $0x38] sm:$0xf]
  %v46 = vld [vmem:[%s1 + $0x3c] sm:$0xf]
  %v47 = vld [vmem:[%s2] sm:$0x1]
  %v49 = vlaneseq
  %v50 = vshrl.u32 %v49, 7
  %v51 = vsub.s32 0, %v50
  %v52 = vrot.slane %v47, %v51
  %v70 = vunpack.c.l.b16 %v15
  %v71 = vunpack.c.l.b16 %v16
  %v72 = vunpack.c.l.b16 %v17
  %v73 = vunpack.c.l.b16 %v18
  %v74 = vunpack.c.l.b16 %v19
  %v75 = vunpack.c.l.b16 %v20
  %v76 = vunpack.c.l.b16 %v21
  %v77 = vunpack.c.l.b16 %v22
  %v78 = vunpack.c.l.b16 %v23
  %v79 = vunpack.c.l.b16 %v24
  %v80 = vunpack.c.l.b16 %v25
  %v81 = vunpack.c.l.b16 %v26
  %v82 = vunpack.c.l.b16 %v27
  %v83 = vunpack.c.l.b16 %v28
  %v84 = vunpack.c.l.b16 %v29
  %v85 = vunpack.c.l.b16 %v30
  %v86 = vpack.c.b16 %v71, %v70
  %v87 = vpack.c.b16 %v73, %v72
  %v88 = vpack.c.b16 %v75, %v74
  %v89 = vpack.c.b16 %v77, %v76
  %v90 = vpack.c.b16 %v79, %v78
  %v91 = vpack.c.b16 %v81, %v80
  %v92 = vpack.c.b16 %v83, %v82
  %v93 = vpack.c.b16 %v85, %v84
  %v118 = vunpack.c.l.b16 %v31
  %v119 = vunpack.c.l.b16 %v32
  %v120 = vunpack.c.l.b16 %v33
  %v121 = vunpack.c.l.b16 %v34
  %v122 = vunpack.c.l.b16 %v35
  %v123 = vunpack.c.l.b16 %v36
  %v124 = vunpack.c.l.b16 %v37
  %v125 = vunpack.c.l.b16 %v38
  %v126 = vunpack.c.l.b16 %v39
  %v127 = vunpack.c.l.b16 %v40
  %v128 = vunpack.c.l.b16 %v41
  %v129 = vunpack.c.l.b16 %v42
  %v130 = vunpack.c.l.b16 %v43
  %v131 = vunpack.c.l.b16 %v44
  %v132 = vunpack.c.l.b16 %v45
  %v133 = vunpack.c.l.b16 %v46
  %v134 = vpack.c.b16 %v119, %v118
  %v135 = vpack.c.b16 %v121, %v120
  %v136 = vpack.c.b16 %v123, %v122
  %v137 = vpack.c.b16 %v125, %v124
  %v138 = vpack.c.b16 %v127, %v126
  %v139 = vpack.c.b16 %v129, %v128
  %v140 = vpack.c.b16 %v131, %v130
  %v141 = vpack.c.b16 %v133, %v132
  %150 = vmatprep.subr.bf16.mxu0 0
  %151 = vmatpush1.bf16.msra.mxu0 %v134
  %152 = vmatprep.subr.bf16.mxu0 0
  %153 = vmatpush1.bf16.msra.mxu0 %v135
  %154 = vmatprep.subr.bf16.mxu0 0
  %155 = vmatpush1.bf16.msra.mxu0 %v136
  %156 = vmatprep.subr.bf16.mxu0 0
  %157 = vmatpush1.bf16.msra.mxu0 %v137
  %158 = vmatprep.subr.bf16.mxu0 0
  %159 = vmatpush1.bf16.msra.mxu0 %v138
  %160 = vmatprep.subr.bf16.mxu0 0
  %161 = vmatpush1.bf16.msra.mxu0 %v139
  %162 = vmatprep.subr.bf16.mxu0 0
  %163 = vmatpush1.bf16.msra.mxu0 %v140
  %164 = vmatprep.subr.bf16.mxu0 0
  %165 = vmatpush1.bf16.msra.mxu0 %v141
  %166 = vmatprep.subr.bf16.mxu0 0
  %167 = vmatpush1.bf16.msra.mxu0 0
  %168 = vmatprep.subr.bf16.mxu0 0
  %169 = vmatpush1.bf16.msra.mxu0 0
  %170 = vmatprep.subr.bf16.mxu0 0
  %171 = vmatpush1.bf16.msra.mxu0 0
  %172 = vmatprep.subr.bf16.mxu0 0
  %173 = vmatpush1.bf16.msra.mxu0 0
  %174 = vmatprep.subr.bf16.mxu0 0
  %175 = vmatpush1.bf16.msra.mxu0 0
  %176 = vmatprep.subr.bf16.mxu0 0
  %177 = vmatpush1.bf16.msra.mxu0 0
  %178 = vmatprep.subr.bf16.mxu0 0
  %179 = vmatpush1.bf16.msra.mxu0 0
  %180 = vmatprep.subr.bf16.mxu0 0
  %181 = vmatpush1.bf16.msra.mxu0 0
  %182 = vmatprep.mubr.bf16.mxu0 0
  %183 = vmatmul.mubr.bf16.gmra.mrb[0].mxu0 %v86
  %v184 = vpop.f32.mrb[0].mxu0
  %v185 = vadd.f32 %v52, %v184
  %v186 = vpop.f32.mrb[0].mxu0
  %v187 = vpop.f32.mrb[0].mxu0
  %v188 = vadd.f32 %v52, %v187
  %v189 = vpop.f32.mrb[0].mxu0
  %190 = vmatprep.mubr.bf16.mxu0 0
  %191 = vmatmul.mubr.bf16.gmra.mrb[0].mxu0 %v87
  %v192 = vpop.f32.mrb[0].mxu0
  %v193 = vadd.f32 %v52, %v192
  %v194 = vpop.f32.mrb[0].mxu0
  %v195 = vpop.f32.mrb[0].mxu0
  %v196 = vadd.f32 %v52, %v195
  %v197 = vpop.f32.mrb[0].mxu0
  %198 = vmatprep.mubr.bf16.mxu0 0
  %199 = vmatmul.mubr.bf16.gmra.mrb[0].mxu0 %v88
  %v200 = vpop.f32.mrb[0].mxu0
  %v201 = vadd.f32 %v52, %v200
  %v202 = vpop.f32.mrb[0].mxu0
  %v203 = vpop.f32.mrb[0].mxu0
  %v204 = vadd.f32 %v52, %v203
  %v205 = vpop.f32.mrb[0].mxu0
  %206 = vmatprep.mubr.bf16.mxu0 0
  %207 = vmatmul.mubr.bf16.gmra.mrb[0].mxu0 %v89
  %v208 = vpop.f32.mrb[0].mxu0
  %v209 = vadd.f32 %v52, %v208
  %v210 = vpop.f32.mrb[0].mxu0
  %v211 = vpop.f32.mrb[0].mxu0
  %v212 = vadd.f32 %v52, %v211
  %v213 = vpop.f32.mrb[0].mxu0
  %214 = vmatprep.mubr.bf16.mxu0 0
  %215 = vmatmul.mubr.bf16.gmra.mrb[0].mxu0 %v90
  %v216 = vpop.f32.mrb[0].mxu0
  %v217 = vadd.f32 %v52, %v216
  %v218 = vpop.f32.mrb[0].mxu0
  %v219 = vpop.f32.mrb[0].mxu0
  %v220 = vadd.f32 %v52, %v219
  %v221 = vpop.f32.mrb[0].mxu0
  %222 = vmatprep.mubr.bf16.mxu0 0
  %223 = vmatmul.mubr.bf16.gmra.mrb[0].mxu0 %v91
  %v224 = vpop.f32.mrb[0].mxu0
  %v225 = vadd.f32 %v52, %v224
  %v226 = vpop.f32.mrb[0].mxu0
  %v227 = vpop.f32.mrb[0].mxu0
  %v228 = vadd.f32 %v52, %v227
  %v229 = vpop.f32.mrb[0].mxu0
  %230 = vmatprep.mubr.bf16.mxu0 0
  %231 = vmatmul.mubr.bf16.gmra.mrb[0].mxu0 %v92
  %v232 = vpop.f32.mrb[0].mxu0
  %v233 = vadd.f32 %v52, %v232
  %v234 = vpop.f32.mrb[0].mxu0
  %v235 = vpop.f32.mrb[0].mxu0
  %v236 = vadd.f32 %v52, %v235
  %v237 = vpop.f32.mrb[0].mxu0
  %238 = vmatprep.mubr.bf16.mxu0 0
  %239 = vmatmul.mubr.bf16.gmra.mrb[0].mxu0 %v93
  %v240 = vpop.f32.mrb[0].mxu0
  %v241 = vadd.f32 %v52, %v240
  %v242 = vpop.f32.mrb[0].mxu0
  %v243 = vpop.f32.mrb[0].mxu0
  %v244 = vadd.f32 %v52, %v243
  %v245 = vpop.f32.mrb[0].mxu0
  %246 = vdwg.mxu0
  %247 = vst [vmem:[%s3] sm:$0xff] %v185
  %248 = vst [vmem:[%s3 + $0x8] sm:$0xff] %v188
  %249 = vst [vmem:[%s3 + $0x10] sm:$0xff] %v193
  %250 = vst [vmem:[%s3 + $0x18] sm:$0xff] %v196
  %251 = vst [vmem:[%s3 + $0x20] sm:$0xff] %v201
  %252 = vst [vmem:[%s3 + $0x28] sm:$0xff] %v204
  %253 = vst [vmem:[%s3 + $0x30] sm:$0xff] %v209
  %254 = vst [vmem:[%s3 + $0x38] sm:$0xff] %v212
  %255 = vst [vmem:[%s3 + $0x40] sm:$0xff] %v217
  %256 = vst [vmem:[%s3 + $0x48] sm:$0xff] %v220
  %257 = vst [vmem:[%s3 + $0x50] sm:$0xff] %v225
  %258 = vst [vmem:[%s3 + $0x58] sm:$0xff] %v228
  %259 = vst [vmem:[%s3 + $0x60] sm:$0xff] %v233
  %260 = vst [vmem:[%s3 + $0x68] sm:$0xff] %v236
  %261 = vst [vmem:[%s3 + $0x70] sm:$0xff] %v241
  %262 = vst [vmem:[%s3 + $0x78] sm:$0xff] %v244
  // Predicated region
  $region14: #{network_builder_forward.6} parent=0 // pred_check
    _
  $region15: #{network_builder_forward.6} parent=0 // pred_check_branch
    %264 = sbr.rel (0) target = $region17
  $region16: #{network_builder_forward.6} parent=0 // pred_region
    _
  $region17: #{network_builder_forward.6} parent=0 // pred_fallthru
    _
  // Predicated region
  $region18: #{network_builder_forward.6} parent=0 // pred_check
    _
  $region19: #{network_builder_forward.6} parent=0 // pred_check_branch
    %266 = sbr.rel (0) target = $region21
  $region20: #{network_builder_forward.6} parent=0 // pred_region
    _
  $region21: #{network_builder_forward.6} parent=0 // pred_fallthru
    _

// kernel: network_builder_forward.7
$region0: #{network_builder_forward.7}
  #allocation0 [shape = 'u32[]', space=smem, size = 0x4, offset = 0x4, fixed_abs, tag = 'smem constant byte address 0x4 - core index']
  #allocation1 [shape = 'u32[144,128]{1,0:T(1,128)}', space=vmem, size = 0x12000, scoped, tag = 'internal scratch']
  %s0 = inlined_call_operand.vmem [shape: bf16[512,1152], index: 0, kind: input, shape index: {}]
  %s1 = inlined_call_operand.vmem [shape: bf16[1152,128], index: 1, kind: input, shape index: {}]
  %s2 = inlined_call_operand.vmem [shape: f32[2,128], index: 2, kind: input, shape index: {}]
  %s3 = inlined_call_operand.vmem [shape: bf16[512,128], index: 3, kind: output, shape index: {}]
  %s4 = sld [smem:[#allocation0]]
  $region45: #{network_builder_forward.7} parent=0
    _
  %s6 = ssub.s32 1, %s4
  %s7 = scalar_select 0, %s6, %s4
  loop: start=0, step=1, limit=4
  $region2: #{network_builder_forward.7} parent=0 // loop_pre_header
    _
  $region3: #{network_builder_forward.7} parent=0 // loop_header
    %s9 = sphi 0, %s13
    %p10 = scmp.ge.s32.totalorder %s9, 4
    %s19 = sphi 0, %s21
    %s22 = sphi 0, %s19
    %s23 = sphi 0, %s22
    %s39 = sphi 0, %s23
    %s43 = sphi 0, %s43
    %s45 = sphi 0, %s43
    %s46 = sphi 0, %s45
    %s60 = sphi 0, %s46
    %s64 = sphi 0, %s64
    %s66 = sphi 0, %s64
    %s67 = sphi 0, %s66
    %s81 = sphi 0, %s67
    %s87 = sphi 0, %s89
    %s90 = sphi 0, %s87
    %s91 = sphi 0, %s90
    %s107 = sphi 0, %s91
  $region4: #{network_builder_forward.7} parent=0 // loop_header_branch
    %12 = sbr.rel (%p10) target = $region8
  $region5: #{network_builder_forward.7} parent=0 // loop_body
    %s14 = ssub.s32 %s9, 1
    %s15 = ssub.s32 %s9, 2
    %s16 = sadd.s32 %s9, 1
    %s17 = ssub.s32 %s9, %s16
    %p18 = scmp.eq.s32.totalorder %s17, 0
    %s20 = sadd.s32 %s19, 1
    %s21 = scalar_select %p18, %s19, %s20
    %p24 = pneg %p18
    %p25 = scmp.eq.s32.totalorder %s9, 1
    %p26 = por %p24, %p25
    %p27 = scmp.ne.s32.totalorder %s19, %s22
    %p28 = scmp.eq.s32.totalorder %s9, 0
    %p29 = por %p27, %p28
    %p30 = scmp.ne.s32.totalorder %s19, %s22
    %p31 = scmp.eq.s32.totalorder %s14, 1
    %p32 = por %p30, %p31
    %p33 = scmp.ne.s32.totalorder %s22, %s23
    %p34 = scmp.eq.s32.totalorder %s14, 0
    %p35 = por %p33, %p34
    %p36 = scmp.ne.s32.totalorder %s22, %s23
    %p37 = scmp.eq.s32.totalorder %s15, 1
    %p38 = por %p36, %p37
    %p40 = scmp.ne.s32.totalorder %s23, %s39
    %p41 = scmp.eq.s32.totalorder %s15, 0
    %p42 = por %p40, %p41
    %s44 = sadd.s32 %s43, 1
    %p47 = scmp.eq.s32.totalorder %s9, 1
    %p48 = scmp.ne.s32.totalorder %s43, %s45
    %p49 = scmp.eq.s32.totalorder %s9, 0
    %p50 = por %p48, %p49
    %p51 = scmp.ne.s32.totalorder %s43, %s45
    %p52 = scmp.eq.s32.totalorder %s14, 1
    %p53 = por %p51, %p52
    %p54 = scmp.ne.s32.totalorder %s45, %s46
    %p55 = scmp.eq.s32.totalorder %s14, 0
    %p56 = por %p54, %p55
    %p57 = scmp.ne.s32.totalorder %s45, %s46
    %p58 = scmp.eq.s32.totalorder %s15, 1
    %p59 = por %p57, %p58
    %p61 = scmp.ne.s32.totalorder %s46, %s60
    %p62 = scmp.eq.s32.totalorder %s15, 0
    %p63 = por %p61, %p62
    %s65 = sadd.s32 %s64, 1
    %p68 = scmp.eq.s32.totalorder %s9, 1
    %p69 = scmp.ne.s32.totalorder %s64, %s66
    %p70 = scmp.eq.s32.totalorder %s9, 0
    %p71 = por %p69, %p70
    %p72 = scmp.ne.s32.totalorder %s64, %s66
    %p73 = scmp.eq.s32.totalorder %s14, 1
    %p74 = por %p72, %p73
    %p75 = scmp.ne.s32.totalorder %s66, %s67
    %p76 = scmp.eq.s32.totalorder %s14, 0
    %p77 = por %p75, %p76
    %p78 = scmp.ne.s32.totalorder %s66, %s67
    %p79 = scmp.eq.s32.totalorder %s15, 1
    %p80 = por %p78, %p79
    %p82 = scmp.ne.s32.totalorder %s67, %s81
    %p83 = scmp.eq.s32.totalorder %s15, 0
    %p84 = por %p82, %p83
    %s85 = ssub.s32 %s9, %s16
    %p86 = scmp.eq.s32.totalorder %s85, 0
    %s88 = sadd.s32 %s87, 1
    %s89 = scalar_select %p86, %s87, %s88
    %p92 = pneg %p86
    %p93 = scmp.eq.s32.totalorder %s9, 1
    %p94 = por %p92, %p93
    %p95 = scmp.ne.s32.totalorder %s87, %s90
    %p96 = scmp.eq.s32.totalorder %s9, 0
    %p97 = por %p95, %p96
    %p98 = scmp.ne.s32.totalorder %s87, %s90
    %p99 = scmp.eq.s32.totalorder %s14, 1
    %p100 = por %p98, %p99
    %p101 = scmp.ne.s32.totalorder %s90, %s91
    %p102 = scmp.eq.s32.totalorder %s14, 0
    %p103 = por %p101, %p102
    %p104 = scmp.ne.s32.totalorder %s90, %s91
    %p105 = scmp.eq.s32.totalorder %s15, 1
    %p106 = por %p104, %p105
    %p108 = scmp.ne.s32.totalorder %s91, %s107
    %p109 = scmp.eq.s32.totalorder %s15, 0
    %p110 = por %p108, %p109
    %p111 = scmp.le.s32.totalorder 1, %s9
    %p112 = scmp.lt.s32.totalorder %s9, 3
    %p113 = pnand %p111, %p112
    %p114 = pneg %p113
    // Predicated region
    $region9: #{network_builder_forward.7} parent=5 // pred_check
      _
    $region10: #{network_builder_forward.7} parent=5 // pred_check_branch
      %116 = sbr.rel (%p113) target = $region12
    $region11: #{network_builder_forward.7} parent=5 // pred_region
      %s117 = ssub.s32 %s9, 1
      // Predicated region
      $region13: #{network_builder_forward.7} parent=11 // pred_check
        %p118 = pneg %p56
      $region14: #{network_builder_forward.7} parent=11 // pred_check_branch
        %120 = sbr.rel (%p118) target = $region16
      $region15: #{network_builder_forward.7} parent=11 // pred_region
        _
      $region16: #{network_builder_forward.7} parent=11 // pred_fallthru
        _
      // Predicated region
      $region17: #{network_builder_forward.7} parent=11 // pred_check
        %p121 = pneg %p77
      $region18: #{network_builder_forward.7} parent=11 // pred_check_branch
        %123 = sbr.rel (%p121) target = $region20
      $region19: #{network_builder_forward.7} parent=11 // pred_region
        _
      $region20: #{network_builder_forward.7} parent=11 // pred_fallthru
        _
    $region12: #{network_builder_forward.7} parent=5 // pred_fallthru
      _
    %p124 = scmp.lt.s32.totalorder %s9, 2
    // Predicated region
    $region21: #{network_builder_forward.7} parent=5 // pred_check
      %p125 = pneg %p124
    $region22: #{network_builder_forward.7} parent=5 // pred_check_branch
      %127 = sbr.rel (%p125) target = $region24
    $region23: #{network_builder_forward.7} parent=5 // pred_region
      // Predicated region
      $region25: #{network_builder_forward.7} parent=23 // pred_check
        %p128 = pneg %p29
      $region26: #{network_builder_forward.7} parent=23 // pred_check_branch
        %130 = sbr.rel (%p128) target = $region28
      $region27: #{network_builder_forward.7} parent=23 // pred_region
        %s131 = smul.u32 32, %s9
        %p132 = scmp.lt.s32.totalorder %s131, 63
        %s133 = scalar_select %p132, %s131, 63
        %s134 = smul.addr %s133, 9
        %s135 = smul.addr %s134, 4
        %s136 = scalar_lea.vmem %s0, %s135
        %s137 = smul.u32 32, %s9
      $region28: #{network_builder_forward.7} parent=23 // pred_fallthru
        _
    $region24: #{network_builder_forward.7} parent=5 // pred_fallthru
      _
    %p138 = scmp.le.s32.totalorder 1, %s9
    %p139 = scmp.lt.s32.totalorder %s9, 3
    %p140 = pnand %p138, %p139
    %p141 = pneg %p140
    // Predicated region
    $region29: #{network_builder_forward.7} parent=5 // pred_check
      _
    $region30: #{network_builder_forward.7} parent=5 // pred_check_branch
      %143 = sbr.rel (%p140) target = $region32
    $region31: #{network_builder_forward.7} parent=5 // pred_region
      %s144 = ssub.s32 %s9, 1
      %s145 = smul.u32 32, %s14
      %p146 = scmp.lt.s32.totalorder %s145, 63
      %s147 = scalar_select %p146, %s145, 63
      %s148 = smul.addr %s147, 9
      %s149 = smul.addr %s148, 4
      %s150 = scalar_lea.vmem %s0, %s149
      %p151 = pneg %p35
      %p152 = pneg %p32
      %p153 = pneg %p56
      %p154 = pneg %p53
      %p155 = pneg %p77
      %p156 = pneg %p74
      %p157 = pneg %p103
      %p158 = pneg %p100
      %s159 = smul.u32 32, %s14
      %p160 = scmp.lt.s32.totalorder %s159, 63
      %s161 = scalar_select %p160, %s159, 63
      %s162 = smul.addr %s161, 4
      %s163 = scalar_lea.vmem %s3, %s162
      %s164 = smul.u32 32, %s14
      %p165 = scmp.lt.s32.totalorder %s164, 63
      %s166 = scalar_select %p165, %s164, 63
      %s167 = smul.addr %s166, 9
      %s168 = smul.addr %s167, 4
      %s169 = scalar_lea.vmem %s0, %s168
      %s170 = smul.u32 32, %s14
      %s171 = smul.u32 32, %s14
      %p172 = scmp.lt.s32.totalorder %s171, 63
      %s173 = scalar_select %p172, %s171, 63
      %s174 = smul.addr %s173, 4
      %s175 = scalar_lea.vmem %s3, %s174
      %s176 = smul.u32 32, %s14
      %v178 = vld [vmem:[%s169] sm:$0xff]
      %v179 = vld [vmem:[%s169 + $0x8] sm:$0xff]
      %v180 = vld [vmem:[%s169 + $0x10] sm:$0xff]
      %v181 = vld [vmem:[%s169 + $0x18] sm:$0xff]
      %v182 = vld [vmem:[%s169 + $0x20] sm:$0xf]
      %v183 = vld [vmem:[%s169 + $0x24] sm:$0xff]
      %v184 = vld [vmem:[%s169 + $0x2c] sm:$0xff]
      %v185 = vld [vmem:[%s169 + $0x34] sm:$0xff]
      %v186 = vld [vmem:[%s169 + $0x3c] sm:$0xff]
      %v187 = vld [vmem:[%s169 + $0x44] sm:$0xf]
      %v188 = vld [vmem:[%s169 + $0x48] sm:$0xff]
      %v189 = vld [vmem:[%s169 + $0x50] sm:$0xff]
      %v190 = vld [vmem:[%s169 + $0x58] sm:$0xff]
      %v191 = vld [vmem:[%s169 + $0x60] sm:$0xff]
      %v192 = vld [vmem:[%s169 + $0x68] sm:$0xf]
      %v193 = vld [vmem:[%s169 + $0x6c] sm:$0xff]
      %v194 = vld [vmem:[%s169 + $0x74] sm:$0xff]
      %v195 = vld [vmem:[%s169 + $0x7c] sm:$0xff]
      %v196 = vld [vmem:[%s169 + $0x84] sm:$0xff]
      %v197 = vld [vmem:[%s169 + $0x8c] sm:$0xf]
      %v198 = vld [vmem:[%s169 + $0x90] sm:$0xff]
      %v199 = vld [vmem:[%s169 + $0x98] sm:$0xff]
      %v200 = vld [vmem:[%s169 + $0xa0] sm:$0xff]
      %v201 = vld [vmem:[%s169 + $0xa8] sm:$0xff]
      %v202 = vld [vmem:[%s169 + $0xb0] sm:$0xf]
      %v203 = vld [vmem:[%s169 + $0xb4] sm:$0xff]
      %v204 = vld [vmem:[%s169 + $0xbc] sm:$0xff]
      %v205 = vld [vmem:[%s169 + $0xc4] sm:$0xff]
      %v206 = vld [vmem:[%s169 + $0xcc] sm:$0xff]
      %v207 = vld [vmem:[%s169 + $0xd4] sm:$0xf]
      %v208 = vld [vmem:[%s169 + $0xd8] sm:$0xff]
      %v209 = vld [vmem:[%s169 + $0xe0] sm:$0xff]
      %v210 = vld [vmem:[%s169 + $0xe8] sm:$0xff]
      %v211 = vld [vmem:[%s169 + $0xf0] sm:$0xff]
      %v212 = vld [vmem:[%s169 + $0xf8] sm:$0xf]
      %v213 = vld [vmem:[%s169 + $0xfc] sm:$0xff]
      %v214 = vld [vmem:[%s169 + $0x104] sm:$0xff]
      %v215 = vld [vmem:[%s169 + $0x10c] sm:$0xff]
      %v216 = vld [vmem:[%s169 + $0x114] sm:$0xff]
      %v217 = vld [vmem:[%s169 + $0x11c] sm:$0xf]
      %v218 = vld [vmem:[%s169 + $0x120] sm:$0xff]
      %v219 = vld [vmem:[%s169 + $0x128] sm:$0xff]
      %v220 = vld [vmem:[%s169 + $0x130] sm:$0xff]
      %v221 = vld [vmem:[%s169 + $0x138] sm:$0xff]
      %v222 = vld [vmem:[%s169 + $0x140] sm:$0xf]
      %v223 = vld [vmem:[%s169 + $0x144] sm:$0xff]
      %v224 = vld [vmem:[%s169 + $0x14c] sm:$0xff]
      %v225 = vld [vmem:[%s169 + $0x154] sm:$0xff]
      %v226 = vld [vmem:[%s169 + $0x15c] sm:$0xff]
      %v227 = vld [vmem:[%s169 + $0x164] sm:$0xf]
      %v228 = vld [vmem:[%s169 + $0x168] sm:$0xff]
      %v229 = vld [vmem:[%s169 + $0x170] sm:$0xff]
      %v230 = vld [vmem:[%s169 + $0x178] sm:$0xff]
      %v231 = vld [vmem:[%s169 + $0x180] sm:$0xff]
      %v232 = vld [vmem:[%s169 + $0x188] sm:$0xf]
      %v233 = vld [vmem:[%s169 + $0x18c] sm:$0xff]
      %v234 = vld [vmem:[%s169 + $0x194] sm:$0xff]
      %v235 = vld [vmem:[%s169 + $0x19c] sm:$0xff]
      %v236 = vld [vmem:[%s169 + $0x1a4] sm:$0xff]
      %v237 = vld [vmem:[%s169 + $0x1ac] sm:$0xf]
      %v238 = vld [vmem:[%s169 + $0x1b0] sm:$0xff]
      %v239 = vld [vmem:[%s169 + $0x1b8] sm:$0xff]
      %v240 = vld [vmem:[%s169 + $0x1c0] sm:$0xff]
      %v241 = vld [vmem:[%s169 + $0x1c8] sm:$0xff]
      %v242 = vld [vmem:[%s169 + $0x1d0] sm:$0xf]
      %v243 = vld [vmem:[%s169 + $0x1d4] sm:$0xff]
      %v244 = vld [vmem:[%s169 + $0x1dc] sm:$0xff]
      %v245 = vld [vmem:[%s169 + $0x1e4] sm:$0xff]
      %v246 = vld [vmem:[%s169 + $0x1ec] sm:$0xff]
      %v247 = vld [vmem:[%s169 + $0x1f4] sm:$0xf]
      %v248 = vld [vmem:[%s169 + $0x1f8] sm:$0xff]
      %v249 = vld [vmem:[%s169 + $0x200] sm:$0xff]
      %v250 = vld [vmem:[%s169 + $0x208] sm:$0xff]
      %v251 = vld [vmem:[%s169 + $0x210] sm:$0xff]
      %v252 = vld [vmem:[%s169 + $0x218] sm:$0xf]
      %v253 = vld [vmem:[%s169 + $0x21c] sm:$0xff]
      %v254 = vld [vmem:[%s169 + $0x224] sm:$0xff]
      %v255 = vld [vmem:[%s169 + $0x22c] sm:$0xff]
      %v256 = vld [vmem:[%s169 + $0x234] sm:$0xff]
      %v257 = vld [vmem:[%s169 + $0x23c] sm:$0xf]
      %v258 = vld [vmem:[%s169 + $0x240] sm:$0xff]
      %v259 = vld [vmem:[%s169 + $0x248] sm:$0xff]
      %v260 = vld [vmem:[%s169 + $0x250] sm:$0xff]
      %v261 = vld [vmem:[%s169 + $0x258] sm:$0xff]
      %v262 = vld [vmem:[%s169 + $0x260] sm:$0xf]
      %v263 = vld [vmem:[%s169 + $0x264] sm:$0xff]
      %v264 = vld [vmem:[%s169 + $0x26c] sm:$0xff]
      %v265 = vld [vmem:[%s169 + $0x274] sm:$0xff]
      %v266 = vld [vmem:[%s169 + $0x27c] sm:$0xff]
      %v267 = vld [vmem:[%s169 + $0x284] sm:$0xf]
      %v268 = vld [vmem:[%s169 + $0x288] sm:$0xff]
      %v269 = vld [vmem:[%s169 + $0x290] sm:$0xff]
      %v270 = vld [vmem:[%s169 + $0x298] sm:$0xff]
      %v271 = vld [vmem:[%s169 + $0x2a0] sm:$0xff]
      %v272 = vld [vmem:[%s169 + $0x2a8] sm:$0xf]
      %v273 = vld [vmem:[%s169 + $0x2ac] sm:$0xff]
      %v274 = vld [vmem:[%s169 + $0x2b4] sm:$0xff]
      %v275 = vld [vmem:[%s169 + $0x2bc] sm:$0xff]
      %v276 = vld [vmem:[%s169 + $0x2c4] sm:$0xff]
      %v277 = vld [vmem:[%s169 + $0x2cc] sm:$0xf]
      %v278 = vld [vmem:[%s169 + $0x2d0] sm:$0xff]
      %v279 = vld [vmem:[%s169 + $0x2d8] sm:$0xff]
      %v280 = vld [vmem:[%s169 + $0x2e0] sm:$0xff]
      %v281 = vld [vmem:[%s169 + $0x2e8] sm:$0xff]
      %v282 = vld [vmem:[%s169 + $0x2f0] sm:$0xf]
      %v283 = vld [vmem:[%s169 + $0x2f4] sm:$0xff]
      %v284 = vld [vmem:[%s169 + $0x2fc] sm:$0xff]
      %v285 = vld [vmem:[%s169 + $0x304] sm:$0xff]
      %v286 = vld [vmem:[%s169 + $0x30c] sm:$0xff]
      %v287 = vld [vmem:[%s169 + $0x314] sm:$0xf]
      %v288 = vld [vmem:[%s169 + $0x318] sm:$0xff]
      %v289 = vld [vmem:[%s169 + $0x320] sm:$0xff]
      %v290 = vld [vmem:[%s169 + $0x328] sm:$0xff]
      %v291 = vld [vmem:[%s169 + $0x330] sm:$0xff]
      %v292 = vld [vmem:[%s169 + $0x338] sm:$0xf]
      %v293 = vld [vmem:[%s169 + $0x33c] sm:$0xff]
      %v294 = vld [vmem:[%s169 + $0x344] sm:$0xff]
      %v295 = vld [vmem:[%s169 + $0x34c] sm:$0xff]
      %v296 = vld [vmem:[%s169 + $0x354] sm:$0xff]
      %v297 = vld [vmem:[%s169 + $0x35c] sm:$0xf]
      %v298 = vld [vmem:[%s169 + $0x360] sm:$0xff]
      %v299 = vld [vmem:[%s169 + $0x368] sm:$0xff]
      %v300 = vld [vmem:[%s169 + $0x370] sm:$0xff]
      %v301 = vld [vmem:[%s169 + $0x378] sm:$0xff]
      %v302 = vld [vmem:[%s169 + $0x380] sm:$0xf]
      %v303 = vld [vmem:[%s169 + $0x384] sm:$0xff]
      %v304 = vld [vmem:[%s169 + $0x38c] sm:$0xff]
      %v305 = vld [vmem:[%s169 + $0x394] sm:$0xff]
      %v306 = vld [vmem:[%s169 + $0x39c] sm:$0xff]
      %v307 = vld [vmem:[%s169 + $0x3a4] sm:$0xf]
      %v308 = vld [vmem:[%s169 + $0x3a8] sm:$0xff]
      %v309 = vld [vmem:[%s169 + $0x3b0] sm:$0xff]
      %v310 = vld [vmem:[%s169 + $0x3b8] sm:$0xff]
      %v311 = vld [vmem:[%s169 + $0x3c0] sm:$0xff]
      %v312 = vld [vmem:[%s169 + $0x3c8] sm:$0xf]
      %v313 = vld [vmem:[%s169 + $0x3cc] sm:$0xff]
      %v314 = vld [vmem:[%s169 + $0x3d4] sm:$0xff]
      %v315 = vld [vmem:[%s169 + $0x3dc] sm:$0xff]
      %v316 = vld [vmem:[%s169 + $0x3e4] sm:$0xff]
      %v317 = vld [vmem:[%s169 + $0x3ec] sm:$0xf]
      %v318 = vld [vmem:[%s169 + $0x3f0] sm:$0xff]
      %v319 = vld [vmem:[%s169 + $0x3f8] sm:$0xff]
      %v320 = vld [vmem:[%s169 + $0x400] sm:$0xff]
      %v321 = vld [vmem:[%s169 + $0x408] sm:$0xff]
      %v322 = vld [vmem:[%s169 + $0x410] sm:$0xf]
      %v323 = vld [vmem:[%s169 + $0x414] sm:$0xff]
      %v324 = vld [vmem:[%s169 + $0x41c] sm:$0xff]
      %v325 = vld [vmem:[%s169 + $0x424] sm:$0xff]
      %v326 = vld [vmem:[%s169 + $0x42c] sm:$0xff]
      %v327 = vld [vmem:[%s169 + $0x434] sm:$0xf]
      %v328 = vld [vmem:[%s169 + $0x438] sm:$0xff]
      %v329 = vld [vmem:[%s169 + $0x440] sm:$0xff]
      %v330 = vld [vmem:[%s169 + $0x448] sm:$0xff]
      %v331 = vld [vmem:[%s169 + $0x450] sm:$0xff]
      %v332 = vld [vmem:[%s169 + $0x458] sm:$0xf]
      %v333 = vld [vmem:[%s169 + $0x45c] sm:$0xff]
      %v334 = vld [vmem:[%s169 + $0x464] sm:$0xff]
      %v335 = vld [vmem:[%s169 + $0x46c] sm:$0xff]
      %v336 = vld [vmem:[%s169 + $0x474] sm:$0xff]
      %v337 = vld [vmem:[%s169 + $0x47c] sm:$0xf]
      %v338 = vld [vmem:[%s1] sm:$0xf]
      %v339 = vld [vmem:[%s1 + $0x4] sm:$0xf]
      %v340 = vld [vmem:[%s1 + $0x8] sm:$0xf]
      %v341 = vld [vmem:[%s1 + $0xc] sm:$0xf]
      %v342 = vld [vmem:[%s1 + $0x10] sm:$0xf]
      %v343 = vld [vmem:[%s1 + $0x14] sm:$0xf]
      %v344 = vld [vmem:[%s1 + $0x18] sm:$0xf]
      %v345 = vld [vmem:[%s1 + $0x1c] sm:$0xf]
      %v346 = vld [vmem:[%s1 + $0x20] sm:$0xf]
      %v347 = vld [vmem:[%s1 + $0x24] sm:$0xf]
      %v348 = vld [vmem:[%s1 + $0x28] sm:$0xf]
      %v349 = vld [vmem:[%s1 + $0x2c] sm:$0xf]
      %v350 = vld [vmem:[%s1 + $0x30] sm:$0xf]
      %v351 = vld [vmem:[%s1 + $0x34] sm:$0xf]
      %v352 = vld [vmem:[%s1 + $0x38] sm:$0xf]
      %v353 = vld [vmem:[%s1 + $0x3c] sm:$0xf]
      %v354 = vld [vmem:[%s1 + $0x40] sm:$0xf]
      %v355 = vld [vmem:[%s1 + $0x44] sm:$0xf]
      %v356 = vld [vmem:[%s1 + $0x48] sm:$0xf]
      %v357 = vld [vmem:[%s1 + $0x4c] sm:$0xf]
      %v358 = vld [vmem:[%s1 + $0x50] sm:$0xf]
      %v359 = vld [vmem:[%s1 + $0x54] sm:$0xf]
      %v360 = vld [vmem:[%s1 + $0x58] sm:$0xf]
      %v361 = vld [vmem:[%s1 + $0x5c] sm:$0xf]
      %v362 = vld [vmem:[%s1 + $0x60] sm:$0xf]
      %v363 = vld [vmem:[%s1 + $0x64] sm:$0xf]
      %v364 = vld [vmem:[%s1 + $0x68] sm:$0xf]
      %v365 = vld [vmem:[%s1 + $0x6c] sm:$0xf]
      %v366 = vld [vmem:[%s1 + $0x70] sm:$0xf]
      %v367 = vld [vmem:[%s1 + $0x74] sm:$0xf]
      %v368 = vld [vmem:[%s1 + $0x78] sm:$0xf]
      %v369 = vld [vmem:[%s1 + $0x7c] sm:$0xf]
      %v370 = vld [vmem:[%s1 + $0x80] sm:$0xf]
      %v371 = vld [vmem:[%s1 + $0x84] sm:$0xf]
      %v372 = vld [vmem:[%s1 + $0x88] sm:$0xf]
      %v373 = vld [vmem:[%s1 + $0x8c] sm:$0xf]
      %v374 = vld [vmem:[%s1 + $0x90] sm:$0xf]
      %v375 = vld [vmem:[%s1 + $0x94] sm:$0xf]
      %v376 = vld [vmem:[%s1 + $0x98] sm:$0xf]
      %v377 = vld [vmem:[%s1 + $0x9c] sm:$0xf]
      %v378 = vld [vmem:[%s1 + $0xa0] sm:$0xf]
      %v379 = vld [vmem:[%s1 + $0xa4] sm:$0xf]
      %v380 = vld [vmem:[%s1 + $0xa8] sm:$0xf]
      %v381 = vld [vmem:[%s1 + $0xac] sm:$0xf]
      %v382 = vld [vmem:[%s1 + $0xb0] sm:$0xf]
      %v383 = vld [vmem:[%s1 + $0xb4] sm:$0xf]
      %v384 = vld [vmem:[%s1 + $0xb8] sm:$0xf]
      %v385 = vld [vmem:[%s1 + $0xbc] sm:$0xf]
      %v386 = vld [vmem:[%s1 + $0xc0] sm:$0xf]
      %v387 = vld [vmem:[%s1 + $0xc4] sm:$0xf]
      %v388 = vld [vmem:[%s1 + $0xc8] sm:$0xf]
      %v389 = vld [vmem:[%s1 + $0xcc] sm:$0xf]
      %v390 = vld [vmem:[%s1 + $0xd0] sm:$0xf]
      %v391 = vld [vmem:[%s1 + $0xd4] sm:$0xf]
      %v392 = vld [vmem:[%s1 + $0xd8] sm:$0xf]
      %v393 = vld [vmem:[%s1 + $0xdc] sm:$0xf]
      %v394 = vld [vmem:[%s1 + $0xe0] sm:$0xf]
      %v395 = vld [vmem:[%s1 + $0xe4] sm:$0xf]
      %v396 = vld [vmem:[%s1 + $0xe8] sm:$0xf]
      %v397 = vld [vmem:[%s1 + $0xec] sm:$0xf]
      %v398 = vld [vmem:[%s1 + $0xf0] sm:$0xf]
      %v399 = vld [vmem:[%s1 + $0xf4] sm:$0xf]
      %v400 = vld [vmem:[%s1 + $0xf8] sm:$0xf]
      %v401 = vld [vmem:[%s1 + $0xfc] sm:$0xf]
      %v402 = vld [vmem:[%s1 + $0x100] sm:$0xf]
      %v403 = vld [vmem:[%s1 + $0x104] sm:$0xf]
      %v404 = vld [vmem:[%s1 + $0x108] sm:$0xf]
      %v405 = vld [vmem:[%s1 + $0x10c] sm:$0xf]
      %v406 = vld [vmem:[%s1 + $0x110] sm:$0xf]
      %v407 = vld [vmem:[%s1 + $0x114] sm:$0xf]
      %v408 = vld [vmem:[%s1 + $0x118] sm:$0xf]
      %v409 = vld [vmem:[%s1 + $0x11c] sm:$0xf]
      %v410 = vld [vmem:[%s1 + $0x120] sm:$0xf]
      %v411 = vld [vmem:[%s1 + $0x124] sm:$0xf]
      %v412 = vld [vmem:[%s1 + $0x128] sm:$0xf]
      %v413 = vld [vmem:[%s1 + $0x12c] sm:$0xf]
      %v414 = vld [vmem:[%s1 + $0x130] sm:$0xf]
      %v415 = vld [vmem:[%s1 + $0x134] sm:$0xf]
      %v416 = vld [vmem:[%s1 + $0x138] sm:$0xf]
      %v417 = vld [vmem:[%s1 + $0x13c] sm:$0xf]
      %v418 = vld [vmem:[%s1 + $0x140] sm:$0xf]
      %v419 = vld [vmem:[%s1 + $0x144] sm:$0xf]
      %v420 = vld [vmem:[%s1 + $0x148] sm:$0xf]
      %v421 = vld [vmem:[%s1 + $0x14c] sm:$0xf]
      %v422 = vld [vmem:[%s1 + $0x150] sm:$0xf]
      %v423 = vld [vmem:[%s1 + $0x154] sm:$0xf]
      %v424 = vld [vmem:[%s1 + $0x158] sm:$0xf]
      %v425 = vld [vmem:[%s1 + $0x15c] sm:$0xf]
      %v426 = vld [vmem:[%s1 + $0x160] sm:$0xf]
      %v427 = vld [vmem:[%s1 + $0x164] sm:$0xf]
      %v428 = vld [vmem:[%s1 + $0x168] sm:$0xf]
      %v429 = vld [vmem:[%s1 + $0x16c] sm:$0xf]
      %v430 = vld [vmem:[%s1 + $0x170] sm:$0xf]
      %v431 = vld [vmem:[%s1 + $0x174] sm:$0xf]
      %v432 = vld [vmem:[%s1 + $0x178] sm:$0xf]
      %v433 = vld [vmem:[%s1 + $0x17c] sm:$0xf]
      %v434 = vld [vmem:[%s1 + $0x180] sm:$0xf]
      %v435 = vld [vmem:[%s1 + $0x184] sm:$0xf]
      %v436 = vld [vmem:[%s1 + $0x188] sm:$0xf]
      %v437 = vld [vmem:[%s1 + $0x18c] sm:$0xf]
      %v438 = vld [vmem:[%s1 + $0x190] sm:$0xf]
      %v439 = vld [vmem:[%s1 + $0x194] sm:$0xf]
      %v440 = vld [vmem:[%s1 + $0x198] sm:$0xf]
      %v441 = vld [vmem:[%s1 + $0x19c] sm:$0xf]
      %v442 = vld [vmem:[%s1 + $0x1a0] sm:$0xf]
      %v443 = vld [vmem:[%s1 + $0x1a4] sm:$0xf]
      %v444 = vld [vmem:[%s1 + $0x1a8] sm:$0xf]
      %v445 = vld [vmem:[%s1 + $0x1ac] sm:$0xf]
      %v446 = vld [vmem:[%s1 + $0x1b0] sm:$0xf]
      %v447 = vld [vmem:[%s1 + $0x1b4] sm:$0xf]
      %v448 = vld [vmem:[%s1 + $0x1b8] sm:$0xf]
      %v449 = vld [vmem:[%s1 + $0x1bc] sm:$0xf]
      %v450 = vld [vmem:[%s1 + $0x1c0] sm:$0xf]
      %v451 = vld [vmem:[%s1 + $0x1c4] sm:$0xf]
      %v452 = vld [vmem:[%s1 + $0x1c8] sm:$0xf]
      %v453 = vld [vmem:[%s1 + $0x1cc] sm:$0xf]
      %v454 = vld [vmem:[%s1 + $0x1d0] sm:$0xf]
      %v455 = vld [vmem:[%s1 + $0x1d4] sm:$0xf]
      %v456 = vld [vmem:[%s1 + $0x1d8] sm:$0xf]
      %v457 = vld [vmem:[%s1 + $0x1dc] sm:$0xf]
      %v458 = vld [vmem:[%s1 + $0x1e0] sm:$0xf]
      %v459 = vld [vmem:[%s1 + $0x1e4] sm:$0xf]
      %v460 = vld [vmem:[%s1 + $0x1e8] sm:$0xf]
      %v461 = vld [vmem:[%s1 + $0x1ec] sm:$0xf]
      %v462 = vld [vmem:[%s1 + $0x1f0] sm:$0xf]
      %v463 = vld [vmem:[%s1 + $0x1f4] sm:$0xf]
      %v464 = vld [vmem:[%s1 + $0x1f8] sm:$0xf]
      %v465 = vld [vmem:[%s1 + $0x1fc] sm:$0xf]
      %v466 = vld [vmem:[%s1 + $0x200] sm:$0xf]
      %v467 = vld [vmem:[%s1 + $0x204] sm:$0xf]
      %v468 = vld [vmem:[%s1 + $0x208] sm:$0xf]
      %v469 = vld [vmem:[%s1 + $0x20c] sm:$0xf]
      %v470 = vld [vmem:[%s1 + $0x210] sm:$0xf]
      %v471 = vld [vmem:[%s1 + $0x214] sm:$0xf]
      %v472 = vld [vmem:[%s1 + $0x218] sm:$0xf]
      %v473 = vld [vmem:[%s1 + $0x21c] sm:$0xf]
      %v474 = vld [vmem:[%s1 + $0x220] sm:$0xf]
      %v475 = vld [vmem:[%s1 + $0x224] sm:$0xf]
      %v476 = vld [vmem:[%s1 + $0x228] sm:$0xf]
      %v477 = vld [vmem:[%s1 + $0x22c] sm:$0xf]
      %v478 = vld [vmem:[%s1 + $0x230] sm:$0xf]
      %v479 = vld [vmem:[%s1 + $0x234] sm:$0xf]
      %v480 = vld [vmem:[%s1 + $0x238] sm:$0xf]
      %v481 = vld [vmem:[%s1 + $0x23c] sm:$0xf]
      %v482 = vld [vmem:[%s2] sm:$0x1]
      %v483 = vlaneseq
      %v484 = vshrl.u32 %v483, 7
      %v485 = vsub.s32 0, %v484
      %v486 = vrot.slane %v482, %v485
      %v647 = vunpack.c.l.b16 %v178
      %v648 = vunpack.c.h.b16 %v178
      %v649 = vunpack.c.l.b16 %v179
      %v650 = vunpack.c.h.b16 %v179
      %v651 = vunpack.c.l.b16 %v180
      %v652 = vunpack.c.h.b16 %v180
      %v653 = vunpack.c.l.b16 %v181
      %v654 = vunpack.c.h.b16 %v181
      %v655 = vunpack.c.l.b16 %v182
      %v656 = vunpack.c.l.b16 %v183
      %v657 = vunpack.c.h.b16 %v183
      %v658 = vunpack.c.l.b16 %v184
      %v659 = vunpack.c.h.b16 %v184
      %v660 = vunpack.c.l.b16 %v185
      %v661 = vunpack.c.h.b16 %v185
      %v662 = vunpack.c.l.b16 %v186
      %v663 = vunpack.c.h.b16 %v186
      %v664 = vunpack.c.l.b16 %v187
      %v665 = vunpack.c.l.b16 %v188
      %v666 = vunpack.c.h.b16 %v188
      %v667 = vunpack.c.l.b16 %v189
      %v668 = vunpack.c.h.b16 %v189
      %v669 = vunpack.c.l.b16 %v190
      %v670 = vunpack.c.h.b16 %v190
      %v671 = vunpack.c.l.b16 %v191
      %v672 = vunpack.c.h.b16 %v191
      %v673 = vunpack.c.l.b16 %v192
      %v674 = vunpack.c.l.b16 %v193
      %v675 = vunpack.c.h.b16 %v193
      %v676 = vunpack.c.l.b16 %v194
      %v677 = vunpack.c.h.b16 %v194
      %v678 = vunpack.c.l.b16 %v195
      %v679 = vunpack.c.h.b16 %v195
      %v680 = vunpack.c.l.b16 %v196
      %v681 = vunpack.c.h.b16 %v196
      %v682 = vunpack.c.l.b16 %v197
      %v683 = vunpack.c.l.b16 %v198
      %v684 = vunpack.c.h.b16 %v198
      %v685 = vunpack.c.l.b16 %v199
      %v686 = vunpack.c.h.b16 %v199
      %v687 = vunpack.c.l.b16 %v200
      %v688 = vunpack.c.h.b16 %v200
      %v689 = vunpack.c.l.b16 %v201
      %v690 = vunpack.c.h.b16 %v201
      %v691 = vunpack.c.l.b16 %v202
      %v692 = vunpack.c.l.b16 %v203
      %v693 = vunpack.c.h.b16 %v203
      %v694 = vunpack.c.l.b16 %v204
      %v695 = vunpack.c.h.b16 %v204
      %v696 = vunpack.c.l.b16 %v205
      %v697 = vunpack.c.h.b16 %v205
      %v698 = vunpack.c.l.b16 %v206
      %v699 = vunpack.c.h.b16 %v206
      %v700 = vunpack.c.l.b16 %v207
      %v701 = vunpack.c.l.b16 %v208
      %v702 = vunpack.c.h.b16 %v208
      %v703 = vunpack.c.l.b16 %v209
      %v704 = vunpack.c.h.b16 %v209
      %v705 = vunpack.c.l.b16 %v210
      %v706 = vunpack.c.h.b16 %v210
      %v707 = vunpack.c.l.b16 %v211
      %v708 = vunpack.c.h.b16 %v211
      %v709 = vunpack.c.l.b16 %v212
      %v710 = vunpack.c.l.b16 %v213
      %v711 = vunpack.c.h.b16 %v213
      %v712 = vunpack.c.l.b16 %v214
      %v713 = vunpack.c.h.b16 %v214
      %v714 = vunpack.c.l.b16 %v215
      %v715 = vunpack.c.h.b16 %v215
      %v716 = vunpack.c.l.b16 %v216
      %v717 = vunpack.c.h.b16 %v216
      %v718 = vunpack.c.l.b16 %v217
      %v719 = vunpack.c.l.b16 %v218
      %v720 = vunpack.c.h.b16 %v218
      %v721 = vunpack.c.l.b16 %v219
      %v722 = vunpack.c.h.b16 %v219
      %v723 = vunpack.c.l.b16 %v220
      %v724 = vunpack.c.h.b16 %v220
      %v725 = vunpack.c.l.b16 %v221
      %v726 = vunpack.c.h.b16 %v221
      %v727 = vunpack.c.l.b16 %v222
      %v728 = vunpack.c.l.b16 %v223
      %v729 = vunpack.c.h.b16 %v223
      %v730 = vunpack.c.l.b16 %v224
      %v731 = vunpack.c.h.b16 %v224
      %v732 = vunpack.c.l.b16 %v225
      %v733 = vunpack.c.h.b16 %v225
      %v734 = vunpack.c.l.b16 %v226
      %v735 = vunpack.c.h.b16 %v226
      %v736 = vunpack.c.l.b16 %v227
      %v737 = vunpack.c.l.b16 %v228
      %v738 = vunpack.c.h.b16 %v228
      %v739 = vunpack.c.l.b16 %v229
      %v740 = vunpack.c.h.b16 %v229
      %v741 = vunpack.c.l.b16 %v230
      %v742 = vunpack.c.h.b16 %v230
      %v743 = vunpack.c.l.b16 %v231
      %v744 = vunpack.c.h.b16 %v231
      %v745 = vunpack.c.l.b16 %v232
      %v746 = vunpack.c.l.b16 %v233
      %v747 = vunpack.c.h.b16 %v233
      %v748 = vunpack.c.l.b16 %v234
      %v749 = vunpack.c.h.b16 %v234
      %v750 = vunpack.c.l.b16 %v235
      %v751 = vunpack.c.h.b16 %v235
      %v752 = vunpack.c.l.b16 %v236
      %v753 = vunpack.c.h.b16 %v236
      %v754 = vunpack.c.l.b16 %v237
      %v755 = vunpack.c.l.b16 %v238
      %v756 = vunpack.c.h.b16 %v238
      %v757 = vunpack.c.l.b16 %v239
      %v758 = vunpack.c.h.b16 %v239
      %v759 = vunpack.c.l.b16 %v240
      %v760 = vunpack.c.h.b16 %v240
      %v761 = vunpack.c.l.b16 %v241
      %v762 = vunpack.c.h.b16 %v241
      %v763 = vunpack.c.l.b16 %v242
      %v764 = vunpack.c.l.b16 %v243
      %v765 = vunpack.c.h.b16 %v243
      %v766 = vunpack.c.l.b16 %v244
      %v767 = vunpack.c.h.b16 %v244
      %v768 = vunpack.c.l.b16 %v245
      %v769 = vunpack.c.h.b16 %v245
      %v770 = vunpack.c.l.b16 %v246
      %v771 = vunpack.c.h.b16 %v246
      %v772 = vunpack.c.l.b16 %v247
      %v773 = vunpack.c.l.b16 %v248
      %v774 = vunpack.c.h.b16 %v248
      %v775 = vunpack.c.l.b16 %v249
      %v776 = vunpack.c.h.b16 %v249
      %v777 = vunpack.c.l.b16 %v250
      %v778 = vunpack.c.h.b16 %v250
      %v779 = vunpack.c.l.b16 %v251
      %v780 = vunpack.c.h.b16 %v251
      %v781 = vunpack.c.l.b16 %v252
      %v782 = vunpack.c.l.b16 %v253
      %v783 = vunpack.c.h.b16 %v253
      %v784 = vunpack.c.l.b16 %v254
      %v785 = vunpack.c.h.b16 %v254
      %v786 = vunpack.c.l.b16 %v255
      %v787 = vunpack.c.h.b16 %v255
      %v788 = vunpack.c.l.b16 %v256
      %v789 = vunpack.c.h.b16 %v256
      %v790 = vunpack.c.l.b16 %v257
      %v791 = vunpack.c.l.b16 %v258
      %v792 = vunpack.c.h.b16 %v258
      %v793 = vunpack.c.l.b16 %v259
      %v794 = vunpack.c.h.b16 %v259
      %v795 = vunpack.c.l.b16 %v260
      %v796 = vunpack.c.h.b16 %v260
      %v797 = vunpack.c.l.b16 %v261
      %v798 = vunpack.c.h.b16 %v261
      %v799 = vunpack.c.l.b16 %v262
      %v800 = vunpack.c.l.b16 %v263
      %v801 = vunpack.c.h.b16 %v263
      %v802 = vunpack.c.l.b16 %v264
      %v803 = vunpack.c.h.b16 %v264
      %v804 = vunpack.c.l.b16 %v265
      %v805 = vunpack.c.h.b16 %v265
      %v806 = vunpack.c.l.b16 %v266
      %v807 = vunpack.c.h.b16 %v266
      %v808 = vunpack.c.l.b16 %v267
      %v809 = vunpack.c.l.b16 %v268
      %v810 = vunpack.c.h.b16 %v268
      %v811 = vunpack.c.l.b16 %v269
      %v812 = vunpack.c.h.b16 %v269
      %v813 = vunpack.c.l.b16 %v270
      %v814 = vunpack.c.h.b16 %v270
      %v815 = vunpack.c.l.b16 %v271
      %v816 = vunpack.c.h.b16 %v271
      %v817 = vunpack.c.l.b16 %v272
      %v818 = vunpack.c.l.b16 %v273
      %v819 = vunpack.c.h.b16 %v273
      %v820 = vunpack.c.l.b16 %v274
      %v821 = vunpack.c.h.b16 %v274
      %v822 = vunpack.c.l.b16 %v275
      %v823 = vunpack.c.h.b16 %v275
      %v824 = vunpack.c.l.b16 %v276
      %v825 = vunpack.c.h.b16 %v276
      %v826 = vunpack.c.l.b16 %v277
      %v827 = vunpack.c.l.b16 %v278
      %v828 = vunpack.c.h.b16 %v278
      %v829 = vunpack.c.l.b16 %v279
      %v830 = vunpack.c.h.b16 %v279
      %v831 = vunpack.c.l.b16 %v280
      %v832 = vunpack.c.h.b16 %v280
      %v833 = vunpack.c.l.b16 %v281
      %v834 = vunpack.c.h.b16 %v281
      %v835 = vunpack.c.l.b16 %v282
      %v836 = vunpack.c.l.b16 %v283
      %v837 = vunpack.c.h.b16 %v283
      %v838 = vunpack.c.l.b16 %v284
      %v839 = vunpack.c.h.b16 %v284
      %v840 = vunpack.c.l.b16 %v285
      %v841 = vunpack.c.h.b16 %v285
      %v842 = vunpack.c.l.b16 %v286
      %v843 = vunpack.c.h.b16 %v286
      %v844 = vunpack.c.l.b16 %v287
      %v845 = vunpack.c.l.b16 %v288
      %v846 = vunpack.c.h.b16 %v288
      %v847 = vunpack.c.l.b16 %v289
      %v848 = vunpack.c.h.b16 %v289
      %v849 = vunpack.c.l.b16 %v290
      %v850 = vunpack.c.h.b16 %v290
      %v851 = vunpack.c.l.b16 %v291
      %v852 = vunpack.c.h.b16 %v291
      %v853 = vunpack.c.l.b16 %v292
      %v854 = vunpack.c.l.b16 %v293
      %v855 = vunpack.c.h.b16 %v293
      %v856 = vunpack.c.l.b16 %v294
      %v857 = vunpack.c.h.b16 %v294
      %v858 = vunpack.c.l.b16 %v295
      %v859 = vunpack.c.h.b16 %v295
      %v860 = vunpack.c.l.b16 %v296
      %v861 = vunpack.c.h.b16 %v296
      %v862 = vunpack.c.l.b16 %v297
      %v863 = vunpack.c.l.b16 %v298
      %v864 = vunpack.c.h.b16 %v298
      %v865 = vunpack.c.l.b16 %v299
      %v866 = vunpack.c.h.b16 %v299
      %v867 = vunpack.c.l.b16 %v300
      %v868 = vunpack.c.h.b16 %v300
      %v869 = vunpack.c.l.b16 %v301
      %v870 = vunpack.c.h.b16 %v301
      %v871 = vunpack.c.l.b16 %v302
      %v872 = vunpack.c.l.b16 %v303
      %v873 = vunpack.c.h.b16 %v303
      %v874 = vunpack.c.l.b16 %v304
      %v875 = vunpack.c.h.b16 %v304
      %v876 = vunpack.c.l.b16 %v305
      %v877 = vunpack.c.h.b16 %v305
      %v878 = vunpack.c.l.b16 %v306
      %v879 = vunpack.c.h.b16 %v306
      %v880 = vunpack.c.l.b16 %v307
      %v881 = vunpack.c.l.b16 %v308
      %v882 = vunpack.c.h.b16 %v308
      %v883 = vunpack.c.l.b16 %v309
      %v884 = vunpack.c.h.b16 %v309
      %v885 = vunpack.c.l.b16 %v310
      %v886 = vunpack.c.h.b16 %v310
      %v887 = vunpack.c.l.b16 %v311
      %v888 = vunpack.c.h.b16 %v311
      %v889 = vunpack.c.l.b16 %v312
      %v890 = vunpack.c.l.b16 %v313
      %v891 = vunpack.c.h.b16 %v313
      %v892 = vunpack.c.l.b16 %v314
      %v893 = vunpack.c.h.b16 %v314
      %v894 = vunpack.c.l.b16 %v315
      %v895 = vunpack.c.h.b16 %v315
      %v896 = vunpack.c.l.b16 %v316
      %v897 = vunpack.c.h.b16 %v316
      %v898 = vunpack.c.l.b16 %v317
      %v899 = vunpack.c.l.b16 %v318
      %v900 = vunpack.c.h.b16 %v318
      %v901 = vunpack.c.l.b16 %v319
      %v902 = vunpack.c.h.b16 %v319
      %v903 = vunpack.c.l.b16 %v320
      %v904 = vunpack.c.h.b16 %v320
      %v905 = vunpack.c.l.b16 %v321
      %v906 = vunpack.c.h.b16 %v321
      %v907 = vunpack.c.l.b16 %v322
      %v908 = vunpack.c.l.b16 %v323
      %v909 = vunpack.c.h.b16 %v323
      %v910 = vunpack.c.l.b16 %v324
      %v911 = vunpack.c.h.b16 %v324
      %v912 = vunpack.c.l.b16 %v325
      %v913 = vunpack.c.h.b16 %v325
      %v914 = vunpack.c.l.b16 %v326
      %v915 = vunpack.c.h.b16 %v326
      %v916 = vunpack.c.l.b16 %v327
      %v917 = vunpack.c.l.b16 %v328
      %v918 = vunpack.c.h.b16 %v328
      %v919 = vunpack.c.l.b16 %v329
      %v920 = vunpack.c.h.b16 %v329
      %v921 = vunpack.c.l.b16 %v330
      %v922 = vunpack.c.h.b16 %v330
      %v923 = vunpack.c.l.b16 %v331
      %v924 = vunpack.c.h.b16 %v331
      %v925 = vunpack.c.l.b16 %v332
      %v926 = vunpack.c.l.b16 %v333
      %v927 = vunpack.c.h.b16 %v333
      %v928 = vunpack.c.l.b16 %v334
      %v929 = vunpack.c.h.b16 %v334
      %v930 = vunpack.c.l.b16 %v335
      %v931 = vunpack.c.h.b16 %v335
      %v932 = vunpack.c.l.b16 %v336
      %v933 = vunpack.c.h.b16 %v336
      %v934 = vunpack.c.l.b16 %v337
      %v935 = vpack.c.b16 %v656, %v647
      %v936 = vpack.c.b16 %v657, %v648
      %v937 = vpack.c.b16 %v658, %v649
      %v938 = vpack.c.b16 %v659, %v650
      %v939 = vpack.c.b16 %v660, %v651
      %v940 = vpack.c.b16 %v661, %v652
      %v941 = vpack.c.b16 %v662, %v653
      %v942 = vpack.c.b16 %v663, %v654
      %v943 = vpack.c.b16 %v664, %v655
      %v944 = vpack.c.b16 %v674, %v665
      %v945 = vpack.c.b16 %v675, %v666
      %v946 = vpack.c.b16 %v676, %v667
      %v947 = vpack.c.b16 %v677, %v668
      %v948 = vpack.c.b16 %v678, %v669
      %v949 = vpack.c.b16 %v679, %v670
      %v950 = vpack.c.b16 %v680, %v671
      %v951 = vpack.c.b16 %v681, %v672
      %v952 = vpack.c.b16 %v682, %v673
      %v953 = vpack.c.b16 %v692, %v683
      %v954 = vpack.c.b16 %v693, %v684
      %v955 = vpack.c.b16 %v694, %v685
      %v956 = vpack.c.b16 %v695, %v686
      %v957 = vpack.c.b16 %v696, %v687
      %v958 = vpack.c.b16 %v697, %v688
      %v959 = vpack.c.b16 %v698, %v689
      %v960 = vpack.c.b16 %v699, %v690
      %v961 = vpack.c.b16 %v700, %v691
      %v962 = vpack.c.b16 %v710, %v701
      %v963 = vpack.c.b16 %v711, %v702
      %v964 = vpack.c.b16 %v712, %v703
      %v965 = vpack.c.b16 %v713, %v704
      %v966 = vpack.c.b16 %v714, %v705
      %v967 = vpack.c.b16 %v715, %v706
      %v968 = vpack.c.b16 %v716, %v707
      %v969 = vpack.c.b16 %v717, %v708
      %v970 = vpack.c.b16 %v718, %v709
      %v971 = vpack.c.b16 %v728, %v719
      %v972 = vpack.c.b16 %v729, %v720
      %v973 = vpack.c.b16 %v730, %v721
      %v974 = vpack.c.b16 %v731, %v722
      %v975 = vpack.c.b16 %v732, %v723
      %v976 = vpack.c.b16 %v733, %v724
      %v977 = vpack.c.b16 %v734, %v725
      %v978 = vpack.c.b16 %v735, %v726
      %v979 = vpack.c.b16 %v736, %v727
      %v980 = vpack.c.b16 %v746, %v737
      %v981 = vpack.c.b16 %v747, %v738
      %v982 = vpack.c.b16 %v748, %v739
      %v983 = vpack.c.b16 %v749, %v740
      %v984 = vpack.c.b16 %v750, %v741
      %v985 = vpack.c.b16 %v751, %v742
      %v986 = vpack.c.b16 %v752, %v743
      %v987 = vpack.c.b16 %v753, %v744
      %v988 = vpack.c.b16 %v754, %v745
      %v989 = vpack.c.b16 %v764, %v755
      %v990 = vpack.c.b16 %v765, %v756
      %v991 = vpack.c.b16 %v766, %v757
      %v992 = vpack.c.b16 %v767, %v758
      %v993 = vpack.c.b16 %v768, %v759
      %v994 = vpack.c.b16 %v769, %v760
      %v995 = vpack.c.b16 %v770, %v761
      %v996 = vpack.c.b16 %v771, %v762
      %v997 = vpack.c.b16 %v772, %v763
      %v998 = vpack.c.b16 %v782, %v773
      %v999 = vpack.c.b16 %v783, %v774
      %v1000 = vpack.c.b16 %v784, %v775
      %v1001 = vpack.c.b16 %v785, %v776
      %v1002 = vpack.c.b16 %v786, %v777
      %v1003 = vpack.c.b16 %v787, %v778
      %v1004 = vpack.c.b16 %v788, %v779
      %v1005 = vpack.c.b16 %v789, %v780
      %v1006 = vpack.c.b16 %v790, %v781
      %v1007 = vpack.c.b16 %v800, %v791
      %v1008 = vpack.c.b16 %v801, %v792
      %v1009 = vpack.c.b16 %v802, %v793
      %v1010 = vpack.c.b16 %v803, %v794
      %v1011 = vpack.c.b16 %v804, %v795
      %v1012 = vpack.c.b16 %v805, %v796
      %v1013 = vpack.c.b16 %v806, %v797
      %v1014 = vpack.c.b16 %v807, %v798
      %v1015 = vpack.c.b16 %v808, %v799
      %v1016 = vpack.c.b16 %v818, %v809
      %v1017 = vpack.c.b16 %v819, %v810
      %v1018 = vpack.c.b16 %v820, %v811
      %v1019 = vpack.c.b16 %v821, %v812
      %v1020 = vpack.c.b16 %v822, %v813
      %v1021 = vpack.c.b16 %v823, %v814
      %v1022 = vpack.c.b16 %v824, %v815
      %v1023 = vpack.c.b16 %v825, %v816
      %v1024 = vpack.c.b16 %v826, %v817
      %v1025 = vpack.c.b16 %v836, %v827
      %v1026 = vpack.c.b16 %v837, %v828
      %v1027 = vpack.c.b16 %v838, %v829
      %v1028 = vpack.c.b16 %v839, %v830
      %v1029 = vpack.c.b16 %v840, %v831
      %v1030 = vpack.c.b16 %v841, %v832
      %v1031 = vpack.c.b16 %v842, %v833
      %v1032 = vpack.c.b16 %v843, %v834
      %v1033 = vpack.c.b16 %v844, %v835
      %v1034 = vpack.c.b16 %v854, %v845
      %v1035 = vpack.c.b16 %v855, %v846
      %v1036 = vpack.c.b16 %v856, %v847
      %v1037 = vpack.c.b16 %v857, %v848
      %v1038 = vpack.c.b16 %v858, %v849
      %v1039 = vpack.c.b16 %v859, %v850
      %v1040 = vpack.c.b16 %v860, %v851
      %v1041 = vpack.c.b16 %v861, %v852
      %v1042 = vpack.c.b16 %v862, %v853
      %v1043 = vpack.c.b16 %v872, %v863
      %v1044 = vpack.c.b16 %v873, %v864
      %v1045 = vpack.c.b16 %v874, %v865
      %v1046 = vpack.c.b16 %v875, %v866
      %v1047 = vpack.c.b16 %v876, %v867
      %v1048 = vpack.c.b16 %v877, %v868
      %v1049 = vpack.c.b16 %v878, %v869
      %v1050 = vpack.c.b16 %v879, %v870
      %v1051 = vpack.c.b16 %v880, %v871
      %v1052 = vpack.c.b16 %v890, %v881
      %v1053 = vpack.c.b16 %v891, %v882
      %v1054 = vpack.c.b16 %v892, %v883
      %v1055 = vpack.c.b16 %v893, %v884
      %v1056 = vpack.c.b16 %v894, %v885
      %v1057 = vpack.c.b16 %v895, %v886
      %v1058 = vpack.c.b16 %v896, %v887
      %v1059 = vpack.c.b16 %v897, %v888
      %v1060 = vpack.c.b16 %v898, %v889
      %v1061 = vpack.c.b16 %v908, %v899
      %v1062 = vpack.c.b16 %v909, %v900
      %v1063 = vpack.c.b16 %v910, %v901
      %v1064 = vpack.c.b16 %v911, %v902
      %v1065 = vpack.c.b16 %v912, %v903
      %v1066 = vpack.c.b16 %v913, %v904
      %v1067 = vpack.c.b16 %v914, %v905
      %v1068 = vpack.c.b16 %v915, %v906
      %v1069 = vpack.c.b16 %v916, %v907
      %v1070 = vpack.c.b16 %v926, %v917
      %v1071 = vpack.c.b16 %v927, %v918
      %v1072 = vpack.c.b16 %v928, %v919
      %v1073 = vpack.c.b16 %v929, %v920
      %v1074 = vpack.c.b16 %v930, %v921
      %v1075 = vpack.c.b16 %v931, %v922
      %v1076 = vpack.c.b16 %v932, %v923
      %v1077 = vpack.c.b16 %v933, %v924
      %v1078 = vpack.c.b16 %v934, %v925
      %v1367 = vunpack.c.l.b16 %v338
      %v1368 = vunpack.c.l.b16 %v339
      %v1369 = vunpack.c.l.b16 %v340
      %v1370 = vunpack.c.l.b16 %v341
      %v1371 = vunpack.c.l.b16 %v342
      %v1372 = vunpack.c.l.b16 %v343
      %v1373 = vunpack.c.l.b16 %v344
      %v1374 = vunpack.c.l.b16 %v345
      %v1375 = vunpack.c.l.b16 %v346
      %v1376 = vunpack.c.l.b16 %v347
      %v1377 = vunpack.c.l.b16 %v348
      %v1378 = vunpack.c.l.b16 %v349
      %v1379 = vunpack.c.l.b16 %v350
      %v1380 = vunpack.c.l.b16 %v351
      %v1381 = vunpack.c.l.b16 %v352
      %v1382 = vunpack.c.l.b16 %v353
      %v1383 = vunpack.c.l.b16 %v354
      %v1384 = vunpack.c.l.b16 %v355
      %v1385 = vunpack.c.l.b16 %v356
      %v1386 = vunpack.c.l.b16 %v357
      %v1387 = vunpack.c.l.b16 %v358
      %v1388 = vunpack.c.l.b16 %v359
      %v1389 = vunpack.c.l.b16 %v360
      %v1390 = vunpack.c.l.b16 %v361
      %v1391 = vunpack.c.l.b16 %v362
      %v1392 = vunpack.c.l.b16 %v363
      %v1393 = vunpack.c.l.b16 %v364
      %v1394 = vunpack.c.l.b16 %v365
      %v1395 = vunpack.c.l.b16 %v366
      %v1396 = vunpack.c.l.b16 %v367
      %v1397 = vunpack.c.l.b16 %v368
      %v1398 = vunpack.c.l.b16 %v369
      %v1399 = vunpack.c.l.b16 %v370
      %v1400 = vunpack.c.l.b16 %v371
      %v1401 = vunpack.c.l.b16 %v372
      %v1402 = vunpack.c.l.b16 %v373
      %v1403 = vunpack.c.l.b16 %v374
      %v1404 = vunpack.c.l.b16 %v375
      %v1405 = vunpack.c.l.b16 %v376
      %v1406 = vunpack.c.l.b16 %v377
      %v1407 = vunpack.c.l.b16 %v378
      %v1408 = vunpack.c.l.b16 %v379
      %v1409 = vunpack.c.l.b16 %v380
      %v1410 = vunpack.c.l.b16 %v381
      %v1411 = vunpack.c.l.b16 %v382
      %v1412 = vunpack.c.l.b16 %v383
      %v1413 = vunpack.c.l.b16 %v384
      %v1414 = vunpack.c.l.b16 %v385
      %v1415 = vunpack.c.l.b16 %v386
      %v1416 = vunpack.c.l.b16 %v387
      %v1417 = vunpack.c.l.b16 %v388
      %v1418 = vunpack.c.l.b16 %v389
      %v1419 = vunpack.c.l.b16 %v390
      %v1420 = vunpack.c.l.b16 %v391
      %v1421 = vunpack.c.l.b16 %v392
      %v1422 = vunpack.c.l.b16 %v393
      %v1423 = vunpack.c.l.b16 %v394
      %v1424 = vunpack.c.l.b16 %v395
      %v1425 = vunpack.c.l.b16 %v396
      %v1426 = vunpack.c.l.b16 %v397
      %v1427 = vunpack.c.l.b16 %v398
      %v1428 = vunpack.c.l.b16 %v399
      %v1429 = vunpack.c.l.b16 %v400
      %v1430 = vunpack.c.l.b16 %v401
      %v1431 = vunpack.c.l.b16 %v402
      %v1432 = vunpack.c.l.b16 %v403
      %v1433 = vunpack.c.l.b16 %v404
      %v1434 = vunpack.c.l.b16 %v405
      %v1435 = vunpack.c.l.b16 %v406
      %v1436 = vunpack.c.l.b16 %v407
      %v1437 = vunpack.c.l.b16 %v408
      %v1438 = vunpack.c.l.b16 %v409
      %v1439 = vunpack.c.l.b16 %v410
      %v1440 = vunpack.c.l.b16 %v411
      %v1441 = vunpack.c.l.b16 %v412
      %v1442 = vunpack.c.l.b16 %v413
      %v1443 = vunpack.c.l.b16 %v414
      %v1444 = vunpack.c.l.b16 %v415
      %v1445 = vunpack.c.l.b16 %v416
      %v1446 = vunpack.c.l.b16 %v417
      %v1447 = vunpack.c.l.b16 %v418
      %v1448 = vunpack.c.l.b16 %v419
      %v1449 = vunpack.c.l.b16 %v420
      %v1450 = vunpack.c.l.b16 %v421
      %v1451 = vunpack.c.l.b16 %v422
      %v1452 = vunpack.c.l.b16 %v423
      %v1453 = vunpack.c.l.b16 %v424
      %v1454 = vunpack.c.l.b16 %v425
      %v1455 = vunpack.c.l.b16 %v426
      %v1456 = vunpack.c.l.b16 %v427
      %v1457 = vunpack.c.l.b16 %v428
      %v1458 = vunpack.c.l.b16 %v429
      %v1459 = vunpack.c.l.b16 %v430
      %v1460 = vunpack.c.l.b16 %v431
      %v1461 = vunpack.c.l.b16 %v432
      %v1462 = vunpack.c.l.b16 %v433
      %v1463 = vunpack.c.l.b16 %v434
      %v1464 = vunpack.c.l.b16 %v435
      %v1465 = vunpack.c.l.b16 %v436
      %v1466 = vunpack.c.l.b16 %v437
      %v1467 = vunpack.c.l.b16 %v438
      %v1468 = vunpack.c.l.b16 %v439
      %v1469 = vunpack.c.l.b16 %v440
      %v1470 = vunpack.c.l.b16 %v441
      %v1471 = vunpack.c.l.b16 %v442
      %v1472 = vunpack.c.l.b16 %v443
      %v1473 = vunpack.c.l.b16 %v444
      %v1474 = vunpack.c.l.b16 %v445
      %v1475 = vunpack.c.l.b16 %v446
      %v1476 = vunpack.c.l.b16 %v447
      %v1477 = vunpack.c.l.b16 %v448
      %v1478 = vunpack.c.l.b16 %v449
      %v1479 = vunpack.c.l.b16 %v450
      %v1480 = vunpack.c.l.b16 %v451
      %v1481 = vunpack.c.l.b16 %v452
      %v1482 = vunpack.c.l.b16 %v453
      %v1483 = vunpack.c.l.b16 %v454
      %v1484 = vunpack.c.l.b16 %v455
      %v1485 = vunpack.c.l.b16 %v456
      %v1486 = vunpack.c.l.b16 %v457
      %v1487 = vunpack.c.l.b16 %v458
      %v1488 = vunpack.c.l.b16 %v459
      %v1489 = vunpack.c.l.b16 %v460
      %v1490 = vunpack.c.l.b16 %v461
      %v1491 = vunpack.c.l.b16 %v462
      %v1492 = vunpack.c.l.b16 %v463
      %v1493 = vunpack.c.l.b16 %v464
      %v1494 = vunpack.c.l.b16 %v465
      %v1495 = vunpack.c.l.b16 %v466
      %v1496 = vunpack.c.l.b16 %v467
      %v1497 = vunpack.c.l.b16 %v468
      %v1498 = vunpack.c.l.b16 %v469
      %v1499 = vunpack.c.l.b16 %v470
      %v1500 = vunpack.c.l.b16 %v471
      %v1501 = vunpack.c.l.b16 %v472
      %v1502 = vunpack.c.l.b16 %v473
      %v1503 = vunpack.c.l.b16 %v474
      %v1504 = vunpack.c.l.b16 %v475
      %v1505 = vunpack.c.l.b16 %v476
      %v1506 = vunpack.c.l.b16 %v477
      %v1507 = vunpack.c.l.b16 %v478
      %v1508 = vunpack.c.l.b16 %v479
      %v1509 = vunpack.c.l.b16 %v480
      %v1510 = vunpack.c.l.b16 %v481
      %v1511 = vpack.c.b16 %v1368, %v1367
      %v1512 = vpack.c.b16 %v1370, %v1369
      %v1513 = vpack.c.b16 %v1372, %v1371
      %v1514 = vpack.c.b16 %v1374, %v1373
      %v1515 = vpack.c.b16 %v1376, %v1375
      %v1516 = vpack.c.b16 %v1378, %v1377
      %v1517 = vpack.c.b16 %v1380, %v1379
      %v1518 = vpack.c.b16 %v1382, %v1381
      %v1519 = vpack.c.b16 %v1384, %v1383
      %v1520 = vpack.c.b16 %v1386, %v1385
      %v1521 = vpack.c.b16 %v1388, %v1387
      %v1522 = vpack.c.b16 %v1390, %v1389
      %v1523 = vpack.c.b16 %v1392, %v1391
      %v1524 = vpack.c.b16 %v1394, %v1393
      %v1525 = vpack.c.b16 %v1396, %v1395
      %v1526 = vpack.c.b16 %v1398, %v1397
      %v1527 = vpack.c.b16 %v1400, %v1399
      %v1528 = vpack.c.b16 %v1402, %v1401
      %v1529 = vpack.c.b16 %v1404, %v1403
      %v1530 = vpack.c.b16 %v1406, %v1405
      %v1531 = vpack.c.b16 %v1408, %v1407
      %v1532 = vpack.c.b16 %v1410, %v1409
      %v1533 = vpack.c.b16 %v1412, %v1411
      %v1534 = vpack.c.b16 %v1414, %v1413
      %v1535 = vpack.c.b16 %v1416, %v1415
      %v1536 = vpack.c.b16 %v1418, %v1417
      %v1537 = vpack.c.b16 %v1420, %v1419
      %v1538 = vpack.c.b16 %v1422, %v1421
      %v1539 = vpack.c.b16 %v1424, %v1423
      %v1540 = vpack.c.b16 %v1426, %v1425
      %v1541 = vpack.c.b16 %v1428, %v1427
      %v1542 = vpack.c.b16 %v1430, %v1429
      %v1543 = vpack.c.b16 %v1432, %v1431
      %v1544 = vpack.c.b16 %v1434, %v1433
      %v1545 = vpack.c.b16 %v1436, %v1435
      %v1546 = vpack.c.b16 %v1438, %v1437
      %v1547 = vpack.c.b16 %v1440, %v1439
      %v1548 = vpack.c.b16 %v1442, %v1441
      %v1549 = vpack.c.b16 %v1444, %v1443
      %v1550 = vpack.c.b16 %v1446, %v1445
      %v1551 = vpack.c.b16 %v1448, %v1447
      %v1552 = vpack.c.b16 %v1450, %v1449
      %v1553 = vpack.c.b16 %v1452, %v1451
      %v1554 = vpack.c.b16 %v1454, %v1453
      %v1555 = vpack.c.b16 %v1456, %v1455
      %v1556 = vpack.c.b16 %v1458, %v1457
      %v1557 = vpack.c.b16 %v1460, %v1459
      %v1558 = vpack.c.b16 %v1462, %v1461
      %v1559 = vpack.c.b16 %v1464, %v1463
      %v1560 = vpack.c.b16 %v1466, %v1465
      %v1561 = vpack.c.b16 %v1468, %v1467
      %v1562 = vpack.c.b16 %v1470, %v1469
      %v1563 = vpack.c.b16 %v1472, %v1471
      %v1564 = vpack.c.b16 %v1474, %v1473
      %v1565 = vpack.c.b16 %v1476, %v1475
      %v1566 = vpack.c.b16 %v1478, %v1477
      %v1567 = vpack.c.b16 %v1480, %v1479
      %v1568 = vpack.c.b16 %v1482, %v1481
      %v1569 = vpack.c.b16 %v1484, %v1483
      %v1570 = vpack.c.b16 %v1486, %v1485
      %v1571 = vpack.c.b16 %v1488, %v1487
      %v1572 = vpack.c.b16 %v1490, %v1489
      %v1573 = vpack.c.b16 %v1492, %v1491
      %v1574 = vpack.c.b16 %v1494, %v1493
      %v1575 = vpack.c.b16 %v1496, %v1495
      %v1576 = vpack.c.b16 %v1498, %v1497
      %v1577 = vpack.c.b16 %v1500, %v1499
      %v1578 = vpack.c.b16 %v1502, %v1501
      %v1579 = vpack.c.b16 %v1504, %v1503
      %v1580 = vpack.c.b16 %v1506, %v1505
      %v1581 = vpack.c.b16 %v1508, %v1507
      %v1582 = vpack.c.b16 %v1510, %v1509
      %1655 = vmatprep.subr.bf16.mxu0 0
      %1656 = vmatpush1.bf16.msra.mxu0 %v1511
      %1657 = vmatprep.subr.bf16.mxu0 0
      %1658 = vmatpush1.bf16.msra.mxu0 %v1512
      %1659 = vmatprep.subr.bf16.mxu0 0
      %1660 = vmatpush1.bf16.msra.mxu0 %v1513
      %1661 = vmatprep.subr.bf16.mxu0 0
      %1662 = vmatpush1.bf16.msra.mxu0 %v1514
      %1663 = vmatprep.subr.bf16.mxu0 0
      %1664 = vmatpush1.bf16.msra.mxu0 %v1515
      %1665 = vmatprep.subr.bf16.mxu0 0
      %1666 = vmatpush1.bf16.msra.mxu0 %v1516
      %1667 = vmatprep.subr.bf16.mxu0 0
      %1668 = vmatpush1.bf16.msra.mxu0 %v1517
      %1669 = vmatprep.subr.bf16.mxu0 0
      %1670 = vmatpush1.bf16.msra.mxu0 %v1518
      %1671 = vmatprep.subr.bf16.mxu0 0
      %1672 = vmatpush1.bf16.msra.mxu0 %v1519
      %1673 = vmatprep.subr.bf16.mxu0 0
      %1674 = vmatpush1.bf16.msra.mxu0 %v1520
      %1675 = vmatprep.subr.bf16.mxu0 0
      %1676 = vmatpush1.bf16.msra.mxu0 %v1521
      %1677 = vmatprep.subr.bf16.mxu0 0
      %1678 = vmatpush1.bf16.msra.mxu0 %v1522
      %1679 = vmatprep.subr.bf16.mxu0 0
      %1680 = vmatpush1.bf16.msra.mxu0 %v1523
      %1681 = vmatprep.subr.bf16.mxu0 0
      %1682 = vmatpush1.bf16.msra.mxu0 %v1524
      %1683 = vmatprep.subr.bf16.mxu0 0
      %1684 = vmatpush1.bf16.msra.mxu0 %v1525
      %1685 = vmatprep.subr.bf16.mxu0 0
      %1686 = vmatpush1.bf16.msra.mxu0 %v1526
      %1687 = vmatprep.mubr.bf16.mxu0 %v936
      %1688 = vmatmul.mubr.bf16.gmra.mrb[0].mxu0 %v935
      %v1689 = vpop.f32.mrb[0].mxu0
      %v1690 = vadd.f32 %v486, %v1689
      %v1691 = vpop.f32.mrb[0].mxu0
      %v1692 = vpop.f32.mrb[0].mxu0
      %v1693 = vadd.f32 %v486, %v1692
      %v1694 = vpop.f32.mrb[0].mxu0
      %1695 = vmatprep.mubr.bf16.mxu0 %v945
      %1696 = vmatmul.mubr.bf16.gmra.mrb[0].mxu0 %v944
      %v1697 = vpop.f32.mrb[0].mxu0
      %v1698 = vadd.f32 %v486, %v1697
      %v1699 = vpop.f32.mrb[0].mxu0
      %v1700 = vpop.f32.mrb[0].mxu0
      %v1701 = vadd.f32 %v486, %v1700
      %v1702 = vpop.f32.mrb[0].mxu0
      %1703 = vmatprep.mubr.bf16.mxu0 %v954
      %1704 = vmatmul.mubr.bf16.gmra.mrb[0].mxu0 %v953
      %v1705 = vpop.f32.mrb[0].mxu0
      %v1706 = vadd.f32 %v486, %v1705
      %v1707 = vpop.f32.mrb[0].mxu0
      %v1708 = vpop.f32.mrb[0].mxu0
      %v1709 = vadd.f32 %v486, %v1708
      %v1710 = vpop.f32.mrb[0].mxu0
      %1711 = vmatprep.mubr.bf16.mxu0 %v963
      %1712 = vmatmul.mubr.bf16.gmra.mrb[0].mxu0 %v962
      %v1713 = vpop.f32.mrb[0].mxu0
      %v1714 = vadd.f32 %v486, %v1713
      %v1715 = vpop.f32.mrb[0].mxu0
      %v1716 = vpop.f32.mrb[0].mxu0
      %v1717 = vadd.f32 %v486, %v1716
      %v1718 = vpop.f32.mrb[0].mxu0
      %1719 = vmatprep.mubr.bf16.mxu0 %v972
      %1720 = vmatmul.mubr.bf16.gmra.mrb[0].mxu0 %v971
      %v1721 = vpop.f32.mrb[0].mxu0
      %v1722 = vadd.f32 %v486, %v1721
      %v1723 = vpop.f32.mrb[0].mxu0
      %v1724 = vpop.f32.mrb[0].mxu0
      %v1725 = vadd.f32 %v486, %v1724
      %v1726 = vpop.f32.mrb[0].mxu0
      %1727 = vmatprep.mubr.bf16.mxu0 %v981
      %1728 = vmatmul.mubr.bf16.gmra.mrb[0].mxu0 %v980
      %v1729 = vpop.f32.mrb[0].mxu0
      %v1730 = vadd.f32 %v486, %v1729
      %v1731 = vpop.f32.mrb[0].mxu0
      %v1732 = vpop.f32.mrb[0].mxu0
      %v1733 = vadd.f32 %v486, %v1732
      %v1734 = vpop.f32.mrb[0].mxu0
      %1735 = vmatprep.mubr.bf16.mxu0 %v990
      %1736 = vmatmul.mubr.bf16.gmra.mrb[0].mxu0 %v989
      %v1737 = vpop.f32.mrb[0].mxu0
      %v1738 = vadd.f32 %v486, %v1737
      %v1739 = vpop.f32.mrb[0].mxu0
      %v1740 = vpop.f32.mrb[0].mxu0
      %v1741 = vadd.f32 %v486, %v1740
      %v1742 = vpop.f32.mrb[0].mxu0
      %1743 = vmatprep.mubr.bf16.mxu0 %v999
      %1744 = vmatmul.mubr.bf16.gmra.mrb[0].mxu0 %v998
      %v1745 = vpop.f32.mrb[0].mxu0
      %v1746 = vadd.f32 %v486, %v1745
      %v1747 = vpop.f32.mrb[0].mxu0
      %v1748 = vpop.f32.mrb[0].mxu0
      %v1749 = vadd.f32 %v486, %v1748
      %v1750 = vpop.f32.mrb[0].mxu0
      %1751 = vmatprep.mubr.bf16.mxu0 %v1008
      %1752 = vmatmul.mubr.bf16.gmra.mrb[0].mxu0 %v1007
      %v1753 = vpop.f32.mrb[0].mxu0
      %v1754 = vadd.f32 %v486, %v1753
      %v1755 = vpop.f32.mrb[0].mxu0
      %v1756 = vpop.f32.mrb[0].mxu0
      %v1757 = vadd.f32 %v486, %v1756
      %v1758 = vpop.f32.mrb[0].mxu0
      %1759 = vmatprep.mubr.bf16.mxu0 %v1017
      %1760 = vmatmul.mubr.bf16.gmra.mrb[0].mxu0 %v1016
      %v1761 = vpop.f32.mrb[0].mxu0
      %v1762 = vadd.f32 %v486, %v1761
      %v1763 = vpop.f32.mrb[0].mxu0
      %v1764 = vpop.f32.mrb[0].mxu0
      %v1765 = vadd.f32 %v486, %v1764
      %v1766 = vpop.f32.mrb[0].mxu0
      %1767 = vmatprep.mubr.bf16.mxu0 %v1026
      %1768 = vmatmul.mubr.bf16.gmra.mrb[0].mxu0 %v1025
      %v1769 = vpop.f32.mrb[0].mxu0
      %v1770 = vadd.f32 %v486, %v1769
      %v1771 = vpop.f32.mrb[0].mxu0
      %v1772 = vpop.f32.mrb[0].mxu0
      %v1773 = vadd.f32 %v486, %v1772
      %v1774 = vpop.f32.mrb[0].mxu0
      %1775 = vmatprep.mubr.bf16.mxu0 %v1035
      %1776 = vmatmul.mubr.bf16.gmra.mrb[0].mxu0 %v1034
      %v1777 = vpop.f32.mrb[0].mxu0
      %v1778 = vadd.f32 %v486, %v1777
      %v1779 = vpop.f32.mrb[0].mxu0
      %v1780 = vpop.f32.mrb[0].mxu0
      %v1781 = vadd.f32 %v486, %v1780
      %v1782 = vpop.f32.mrb[0].mxu0
      %1783 = vmatprep.mubr.bf16.mxu0 %v1044
      %1784 = vmatmul.mubr.bf16.gmra.mrb[0].mxu0 %v1043
      %v1785 = vpop.f32.mrb[0].mxu0
      %v1786 = vadd.f32 %v486, %v1785
      %v1787 = vpop.f32.mrb[0].mxu0
      %v1788 = vpop.f32.mrb[0].mxu0
      %v1789 = vadd.f32 %v486, %v1788
      %v1790 = vpop.f32.mrb[0].mxu0
      %1791 = vmatprep.mubr.bf16.mxu0 %v1053
      %1792 = vmatmul.mubr.bf16.gmra.mrb[0].mxu0 %v1052
      %v1793 = vpop.f32.mrb[0].mxu0
      %v1794 = vadd.f32 %v486, %v1793
      %v1795 = vpop.f32.mrb[0].mxu0
      %v1796 = vpop.f32.mrb[0].mxu0
      %v1797 = vadd.f32 %v486, %v1796
      %v1798 = vpop.f32.mrb[0].mxu0
      %1799 = vmatprep.mubr.bf16.mxu0 %v1062
      %1800 = vmatmul.mubr.bf16.gmra.mrb[0].mxu0 %v1061
      %v1801 = vpop.f32.mrb[0].mxu0
      %v1802 = vadd.f32 %v486, %v1801
      %v1803 = vpop.f32.mrb[0].mxu0
      %v1804 = vpop.f32.mrb[0].mxu0
      %v1805 = vadd.f32 %v486, %v1804
      %v1806 = vpop.f32.mrb[0].mxu0
      %1807 = vmatprep.mubr.bf16.mxu0 %v1071
      %1808 = vmatmul.mubr.bf16.gmra.mrb[0].mxu0 %v1070
      %v1809 = vpop.f32.mrb[0].mxu0
      %v1810 = vadd.f32 %v486, %v1809
      %v1811 = vpop.f32.mrb[0].mxu0
      %v1812 = vpop.f32.mrb[0].mxu0
      %v1813 = vadd.f32 %v486, %v1812
      %v1814 = vpop.f32.mrb[0].mxu0
      %1815 = vdwg.mxu0
      %1816 = vmatprep.subr.bf16.mxu0 0
      %1817 = vmatpush1.bf16.msra.mxu0 %v1527
      %1818 = vmatprep.subr.bf16.mxu0 0
      %1819 = vmatpush1.bf16.msra.mxu0 %v1528
      %1820 = vmatprep.subr.bf16.mxu0 0
      %1821 = vmatpush1.bf16.msra.mxu0 %v1529
      %1822 = vmatprep.subr.bf16.mxu0 0
      %1823 = vmatpush1.bf16.msra.mxu0 %v1530
      %1824 = vmatprep.subr.bf16.mxu0 0
      %1825 = vmatpush1.bf16.msra.mxu0 %v1531
      %1826 = vmatprep.subr.bf16.mxu0 0
      %1827 = vmatpush1.bf16.msra.mxu0 %v1532
      %1828 = vmatprep.subr.bf16.mxu0 0
      %1829 = vmatpush1.bf16.msra.mxu0 %v1533
      %1830 = vmatprep.subr.bf16.mxu0 0
      %1831 = vmatpush1.bf16.msra.mxu0 %v1534
      %1832 = vmatprep.subr.bf16.mxu0 0
      %1833 = vmatpush1.bf16.msra.mxu0 %v1535
      %1834 = vmatprep.subr.bf16.mxu0 0
      %1835 = vmatpush1.bf16.msra.mxu0 %v1536
      %1836 = vmatprep.subr.bf16.mxu0 0
      %1837 = vmatpush1.bf16.msra.mxu0 %v1537
      %1838 = vmatprep.subr.bf16.mxu0 0
      %1839 = vmatpush1.bf16.msra.mxu0 %v1538
      %1840 = vmatprep.subr.bf16.mxu0 0
      %1841 = vmatpush1.bf16.msra.mxu0 %v1539
      %1842 = vmatprep.subr.bf16.mxu0 0
      %1843 = vmatpush1.bf16.msra.mxu0 %v1540
      %1844 = vmatprep.subr.bf16.mxu0 0
      %1845 = vmatpush1.bf16.msra.mxu0 %v1541
      %1846 = vmatprep.subr.bf16.mxu0 0
      %1847 = vmatpush1.bf16.msra.mxu0 %v1542
      %1848 = vmatprep.mubr.bf16.mxu0 %v938
      %1849 = vmatmul.mubr.bf16.gmra.mrb[0].mxu0 %v937
      %v1850 = vpop.f32.mrb[0].mxu0
      %v1851 = vadd.f32 %v1690, %v1850
      %v1852 = vpop.f32.mrb[0].mxu0
      %v1853 = vpop.f32.mrb[0].mxu0
      %v1854 = vadd.f32 %v1693, %v1853
      %v1855 = vpop.f32.mrb[0].mxu0
      %1856 = vmatprep.mubr.bf16.mxu0 %v947
      %1857 = vmatmul.mubr.bf16.gmra.mrb[0].mxu0 %v946
      %v1858 = vpop.f32.mrb[0].mxu0
      %v1859 = vadd.f32 %v1698, %v1858
      %v1860 = vpop.f32.mrb[0].mxu0
      %v1861 = vpop.f32.mrb[0].mxu0
      %v1862 = vadd.f32 %v1701, %v1861
      %v1863 = vpop.f32.mrb[0].mxu0
      %1864 = vmatprep.mubr.bf16.mxu0 %v956
      %1865 = vmatmul.mubr.bf16.gmra.mrb[0].mxu0 %v955
      %v1866 = vpop.f32.mrb[0].mxu0
      %v1867 = vadd.f32 %v1706, %v1866
      %v1868 = vpop.f32.mrb[0].mxu0
      %v1869 = vpop.f32.mrb[0].mxu0
      %v1870 = vadd.f32 %v1709, %v1869
      %v1871 = vpop.f32.mrb[0].mxu0
      %1872 = vmatprep.mubr.bf16.mxu0 %v965
      %1873 = vmatmul.mubr.bf16.gmra.mrb[0].mxu0 %v964
      %v1874 = vpop.f32.mrb[0].mxu0
      %v1875 = vadd.f32 %v1714, %v1874
      %v1876 = vpop.f32.mrb[0].mxu0
      %v1877 = vpop.f32.mrb[0].mxu0
      %v1878 = vadd.f32 %v1717, %v1877
      %v1879 = vpop.f32.mrb[0].mxu0
      %1880 = vmatprep.mubr.bf16.mxu0 %v974
      %1881 = vmatmul.mubr.bf16.gmra.mrb[0].mxu0 %v973
      %v1882 = vpop.f32.mrb[0].mxu0
      %v1883 = vadd.f32 %v1722, %v1882
      %v1884 = vpop.f32.mrb[0].mxu0
      %v1885 = vpop.f32.mrb[0].mxu0
      %v1886 = vadd.f32 %v1725, %v1885
      %v1887 = vpop.f32.mrb[0].mxu0
      %1888 = vmatprep.mubr.bf16.mxu0 %v983
      %1889 = vmatmul.mubr.bf16.gmra.mrb[0].mxu0 %v982
      %v1890 = vpop.f32.mrb[0].mxu0
      %v1891 = vadd.f32 %v1730, %v1890
      %v1892 = vpop.f32.mrb[0].mxu0
      %v1893 = vpop.f32.mrb[0].mxu0
      %v1894 = vadd.f32 %v1733, %v1893
      %v1895 = vpop.f32.mrb[0].mxu0
      %1896 = vmatprep.mubr.bf16.mxu0 %v992
      %1897 = vmatmul.mubr.bf16.gmra.mrb[0].mxu0 %v991
      %v1898 = vpop.f32.mrb[0].mxu0
      %v1899 = vadd.f32 %v1738, %v1898
      %v1900 = vpop.f32.mrb[0].mxu0
      %v1901 = vpop.f32.mrb[0].mxu0
      %v1902 = vadd.f32 %v1741, %v1901
      %v1903 = vpop.f32.mrb[0].mxu0
      %1904 = vmatprep.mubr.bf16.mxu0 %v1001
      %1905 = vmatmul.mubr.bf16.gmra.mrb[0].mxu0 %v1000
      %v1906 = vpop.f32.mrb[0].mxu0
      %v1907 = vadd.f32 %v1746, %v1906
      %v1908 = vpop.f32.mrb[0].mxu0
      %v1909 = vpop.f32.mrb[0].mxu0
      %v1910 = vadd.f32 %v1749, %v1909
      %v1911 = vpop.f32.mrb[0].mxu0
      %1912 = vmatprep.mubr.bf16.mxu0 %v1010
      %1913 = vmatmul.mubr.bf16.gmra.mrb[0].mxu0 %v1009
      %v1914 = vpop.f32.mrb[0].mxu0
      %v1915 = vadd.f32 %v1754, %v1914
      %v1916 = vpop.f32.mrb[0].mxu0
      %v1917 = vpop.f32.mrb[0].mxu0
      %v1918 = vadd.f32 %v1757, %v1917
      %v1919 = vpop.f32.mrb[0].mxu0
      %1920 = vmatprep.mubr.bf16.mxu0 %v1019
      %1921 = vmatmul.mubr.bf16.gmra.mrb[0].mxu0 %v1018
      %v1922 = vpop.f32.mrb[0].mxu0
      %v1923 = vadd.f32 %v1762, %v1922
      %v1924 = vpop.f32.mrb[0].mxu0
      %v1925 = vpop.f32.mrb[0].mxu0
      %v1926 = vadd.f32 %v1765, %v1925
      %v1927 = vpop.f32.mrb[0].mxu0
      %1928 = vmatprep.mubr.bf16.mxu0 %v1028
      %1929 = vmatmul.mubr.bf16.gmra.mrb[0].mxu0 %v1027
      %v1930 = vpop.f32.mrb[0].mxu0
      %v1931 = vadd.f32 %v1770, %v1930
      %v1932 = vpop.f32.mrb[0].mxu0
      %v1933 = vpop.f32.mrb[0].mxu0
      %v1934 = vadd.f32 %v1773, %v1933
      %v1935 = vpop.f32.mrb[0].mxu0
      %1936 = vmatprep.mubr.bf16.mxu0 %v1037
      %1937 = vmatmul.mubr.bf16.gmra.mrb[0].mxu0 %v1036
      %v1938 = vpop.f32.mrb[0].mxu0
      %v1939 = vadd.f32 %v1778, %v1938
      %v1940 = vpop.f32.mrb[0].mxu0
      %v1941 = vpop.f32.mrb[0].mxu0
      %v1942 = vadd.f32 %v1781, %v1941
      %v1943 = vpop.f32.mrb[0].mxu0
      %1944 = vmatprep.mubr.bf16.mxu0 %v1046
      %1945 = vmatmul.mubr.bf16.gmra.mrb[0].mxu0 %v1045
      %v1946 = vpop.f32.mrb[0].mxu0
      %v1947 = vadd.f32 %v1786, %v1946
      %v1948 = vpop.f32.mrb[0].mxu0
      %v1949 = vpop.f32.mrb[0].mxu0
      %v1950 = vadd.f32 %v1789, %v1949
      %v1951 = vpop.f32.mrb[0].mxu0
      %1952 = vmatprep.mubr.bf16.mxu0 %v1055
      %1953 = vmatmul.mubr.bf16.gmra.mrb[0].mxu0 %v1054
      %v1954 = vpop.f32.mrb[0].mxu0
      %v1955 = vadd.f32 %v1794, %v1954
      %v1956 = vpop.f32.mrb[0].mxu0
      %v1957 = vpop.f32.mrb[0].mxu0
      %v1958 = vadd.f32 %v1797, %v1957
      %v1959 = vpop.f32.mrb[0].mxu0
      %1960 = vmatprep.mubr.bf16.mxu0 %v1064
      %1961 = vmatmul.mubr.bf16.gmra.mrb[0].mxu0 %v1063
      %v1962 = vpop.f32.mrb[0].mxu0
      %v1963 = vadd.f32 %v1802, %v1962
      %v1964 = vpop.f32.mrb[0].mxu0
      %v1965 = vpop.f32.mrb[0].mxu0
      %v1966 = vadd.f32 %v1805, %v1965
      %v1967 = vpop.f32.mrb[0].mxu0
      %1968 = vmatprep.mubr.bf16.mxu0 %v1073
      %1969 = vmatmul.mubr.bf16.gmra.mrb[0].mxu0 %v1072
      %v1970 = vpop.f32.mrb[0].mxu0
      %v1971 = vadd.f32 %v1810, %v1970
      %v1972 = vpop.f32.mrb[0].mxu0
      %v1973 = vpop.f32.mrb[0].mxu0
      %v1974 = vadd.f32 %v1813, %v1973
      %v1975 = vpop.f32.mrb[0].mxu0
      %1976 = vdwg.mxu0
      %1977 = vmatprep.subr.bf16.mxu0 0
      %1978 = vmatpush1.bf16.msra.mxu0 %v1543
      %1979 = vmatprep.subr.bf16.mxu0 0
      %1980 = vmatpush1.bf16.msra.mxu0 %v1544
      %1981 = vmatprep.subr.bf16.mxu0 0
      %1982 = vmatpush1.bf16.msra.mxu0 %v1545
      %1983 = vmatprep.subr.bf16.mxu0 0
      %1984 = vmatpush1.bf16.msra.mxu0 %v1546
      %1985 = vmatprep.subr.bf16.mxu0 0
      %1986 = vmatpush1.bf16.msra.mxu0 %v1547
      %1987 = vmatprep.subr.bf16.mxu0 0
      %1988 = vmatpush1.bf16.msra.mxu0 %v1548
      %1989 = vmatprep.subr.bf16.mxu0 0
      %1990 = vmatpush1.bf16.msra.mxu0 %v1549
      %1991 = vmatprep.subr.bf16.mxu0 0
      %1992 = vmatpush1.bf16.msra.mxu0 %v1550
      %1993 = vmatprep.subr.bf16.mxu0 0
      %1994 = vmatpush1.bf16.msra.mxu0 %v1551
      %1995 = vmatprep.subr.bf16.mxu0 0
      %1996 = vmatpush1.bf16.msra.mxu0 %v1552
      %1997 = vmatprep.subr.bf16.mxu0 0
      %1998 = vmatpush1.bf16.msra.mxu0 %v1553
      %1999 = vmatprep.subr.bf16.mxu0 0
      %2000 = vmatpush1.bf16.msra.mxu0 %v1554
      %2001 = vmatprep.subr.bf16.mxu0 0
      %2002 = vmatpush1.bf16.msra.mxu0 %v1555
      %2003 = vmatprep.subr.bf16.mxu0 0
      %2004 = vmatpush1.bf16.msra.mxu0 %v1556
      %2005 = vmatprep.subr.bf16.mxu0 0
      %2006 = vmatpush1.bf16.msra.mxu0 %v1557
      %2007 = vmatprep.subr.bf16.mxu0 0
      %2008 = vmatpush1.bf16.msra.mxu0 %v1558
      %2009 = vmatprep.mubr.bf16.mxu0 %v940
      %2010 = vmatmul.mubr.bf16.gmra.mrb[0].mxu0 %v939
      %v2011 = vpop.f32.mrb[0].mxu0
      %v2012 = vadd.f32 %v1851, %v2011
      %v2013 = vpop.f32.mrb[0].mxu0
      %v2014 = vpop.f32.mrb[0].mxu0
      %v2015 = vadd.f32 %v1854, %v2014
      %v2016 = vpop.f32.mrb[0].mxu0
      %2017 = vmatprep.mubr.bf16.mxu0 %v949
      %2018 = vmatmul.mubr.bf16.gmra.mrb[0].mxu0 %v948
      %v2019 = vpop.f32.mrb[0].mxu0
      %v2020 = vadd.f32 %v1859, %v2019
      %v2021 = vpop.f32.mrb[0].mxu0
      %v2022 = vpop.f32.mrb[0].mxu0
      %v2023 = vadd.f32 %v1862, %v2022
      %v2024 = vpop.f32.mrb[0].mxu0
      %2025 = vmatprep.mubr.bf16.mxu0 %v958
      %2026 = vmatmul.mubr.bf16.gmra.mrb[0].mxu0 %v957
      %v2027 = vpop.f32.mrb[0].mxu0
      %v2028 = vadd.f32 %v1867, %v2027
      %v2029 = vpop.f32.mrb[0].mxu0
      %v2030 = vpop.f32.mrb[0].mxu0
      %v2031 = vadd.f32 %v1870, %v2030
      %v2032 = vpop.f32.mrb[0].mxu0
      %2033 = vmatprep.mubr.bf16.mxu0 %v967
      %2034 = vmatmul.mubr.bf16.gmra.mrb[0].mxu0 %v966
      %v2035 = vpop.f32.mrb[0].mxu0
      %v2036 = vadd.f32 %v1875, %v2035
      %v2037 = vpop.f32.mrb[0].mxu0
      %v2038 = vpop.f32.mrb[0].mxu0
      %v2039 = vadd.f32 %v1878, %v2038
      %v2040 = vpop.f32.mrb[0].mxu0
      %2041 = vmatprep.mubr.bf16.mxu0 %v976
      %2042 = vmatmul.mubr.bf16.gmra.mrb[0].mxu0 %v975
      %v2043 = vpop.f32.mrb[0].mxu0
      %v2044 = vadd.f32 %v1883, %v2043
      %v2045 = vpop.f32.mrb[0].mxu0
      %v2046 = vpop.f32.mrb[0].mxu0
      %v2047 = vadd.f32 %v1886, %v2046
      %v2048 = vpop.f32.mrb[0].mxu0
      %2049 = vmatprep.mubr.bf16.mxu0 %v985
      %2050 = vmatmul.mubr.bf16.gmra.mrb[0].mxu0 %v984
      %v2051 = vpop.f32.mrb[0].mxu0
      %v2052 = vadd.f32 %v1891, %v2051
      %v2053 = vpop.f32.mrb[0].mxu0
      %v2054 = vpop.f32.mrb[0].mxu0
      %v2055 = vadd.f32 %v1894, %v2054
      %v2056 = vpop.f32.mrb[0].mxu0
      %2057 = vmatprep.mubr.bf16.mxu0 %v994
      %2058 = vmatmul.mubr.bf16.gmra.mrb[0].mxu0 %v993
      %v2059 = vpop.f32.mrb[0].mxu0
      %v2060 = vadd.f32 %v1899, %v2059
      %v2061 = vpop.f32.mrb[0].mxu0
      %v2062 = vpop.f32.mrb[0].mxu0
      %v2063 = vadd.f32 %v1902, %v2062
      %v2064 = vpop.f32.mrb[0].mxu0
      %2065 = vmatprep.mubr.bf16.mxu0 %v1003
      %2066 = vmatmul.mubr.bf16.gmra.mrb[0].mxu0 %v1002
      %v2067 = vpop.f32.mrb[0].mxu0
      %v2068 = vadd.f32 %v1907, %v2067
      %v2069 = vpop.f32.mrb[0].mxu0
      %v2070 = vpop.f32.mrb[0].mxu0
      %v2071 = vadd.f32 %v1910, %v2070
      %v2072 = vpop.f32.mrb[0].mxu0
      %2073 = vmatprep.mubr.bf16.mxu0 %v1012
      %2074 = vmatmul.mubr.bf16.gmra.mrb[0].mxu0 %v1011
      %v2075 = vpop.f32.mrb[0].mxu0
      %v2076 = vadd.f32 %v1915, %v2075
      %v2077 = vpop.f32.mrb[0].mxu0
      %v2078 = vpop.f32.mrb[0].mxu0
      %v2079 = vadd.f32 %v1918, %v2078
      %v2080 = vpop.f32.mrb[0].mxu0
      %2081 = vmatprep.mubr.bf16.mxu0 %v1021
      %2082 = vmatmul.mubr.bf16.gmra.mrb[0].mxu0 %v1020
      %v2083 = vpop.f32.mrb[0].mxu0
      %v2084 = vadd.f32 %v1923, %v2083
      %v2085 = vpop.f32.mrb[0].mxu0
      %v2086 = vpop.f32.mrb[0].mxu0
      %v2087 = vadd.f32 %v1926, %v2086
      %v2088 = vpop.f32.mrb[0].mxu0
      %2089 = vmatprep.mubr.bf16.mxu0 %v1030
      %2090 = vmatmul.mubr.bf16.gmra.mrb[0].mxu0 %v1029
      %v2091 = vpop.f32.mrb[0].mxu0
      %v2092 = vadd.f32 %v1931, %v2091
      %v2093 = vpop.f32.mrb[0].mxu0
      %v2094 = vpop.f32.mrb[0].mxu0
      %v2095 = vadd.f32 %v1934, %v2094
      %v2096 = vpop.f32.mrb[0].mxu0
      %2097 = vmatprep.mubr.bf16.mxu0 %v1039
      %2098 = vmatmul.mubr.bf16.gmra.mrb[0].mxu0 %v1038
      %v2099 = vpop.f32.mrb[0].mxu0
      %v2100 = vadd.f32 %v1939, %v2099
      %v2101 = vpop.f32.mrb[0].mxu0
      %v2102 = vpop.f32.mrb[0].mxu0
      %v2103 = vadd.f32 %v1942, %v2102
      %v2104 = vpop.f32.mrb[0].mxu0
      %2105 = vmatprep.mubr.bf16.mxu0 %v1048
      %2106 = vmatmul.mubr.bf16.gmra.mrb[0].mxu0 %v1047
      %v2107 = vpop.f32.mrb[0].mxu0
      %v2108 = vadd.f32 %v1947, %v2107
      %v2109 = vpop.f32.mrb[0].mxu0
      %v2110 = vpop.f32.mrb[0].mxu0
      %v2111 = vadd.f32 %v1950, %v2110
      %v2112 = vpop.f32.mrb[0].mxu0
      %2113 = vmatprep.mubr.bf16.mxu0 %v1057
      %2114 = vmatmul.mubr.bf16.gmra.mrb[0].mxu0 %v1056
      %v2115 = vpop.f32.mrb[0].mxu0
      %v2116 = vadd.f32 %v1955, %v2115
      %v2117 = vpop.f32.mrb[0].mxu0
      %v2118 = vpop.f32.mrb[0].mxu0
      %v2119 = vadd.f32 %v1958, %v2118
      %v2120 = vpop.f32.mrb[0].mxu0
      %2121 = vmatprep.mubr.bf16.mxu0 %v1066
      %2122 = vmatmul.mubr.bf16.gmra.mrb[0].mxu0 %v1065
      %v2123 = vpop.f32.mrb[0].mxu0
      %v2124 = vadd.f32 %v1963, %v2123
      %v2125 = vpop.f32.mrb[0].mxu0
      %v2126 = vpop.f32.mrb[0].mxu0
      %v2127 = vadd.f32 %v1966, %v2126
      %v2128 = vpop.f32.mrb[0].mxu0
      %2129 = vmatprep.mubr.bf16.mxu0 %v1075
      %2130 = vmatmul.mubr.bf16.gmra.mrb[0].mxu0 %v1074
      %v2131 = vpop.f32.mrb[0].mxu0
      %v2132 = vadd.f32 %v1971, %v2131
      %v2133 = vpop.f32.mrb[0].mxu0
      %v2134 = vpop.f32.mrb[0].mxu0
      %v2135 = vadd.f32 %v1974, %v2134
      %v2136 = vpop.f32.mrb[0].mxu0
      %2137 = vdwg.mxu0
      %2138 = vmatprep.subr.bf16.mxu0 0
      %2139 = vmatpush1.bf16.msra.mxu0 %v1559
      %2140 = vmatprep.subr.bf16.mxu0 0
      %2141 = vmatpush1.bf16.msra.mxu0 %v1560
      %2142 = vmatprep.subr.bf16.mxu0 0
      %2143 = vmatpush1.bf16.msra.mxu0 %v1561
      %2144 = vmatprep.subr.bf16.mxu0 0
      %2145 = vmatpush1.bf16.msra.mxu0 %v1562
      %2146 = vmatprep.subr.bf16.mxu0 0
      %2147 = vmatpush1.bf16.msra.mxu0 %v1563
      %2148 = vmatprep.subr.bf16.mxu0 0
      %2149 = vmatpush1.bf16.msra.mxu0 %v1564
      %2150 = vmatprep.subr.bf16.mxu0 0
      %2151 = vmatpush1.bf16.msra.mxu0 %v1565
      %2152 = vmatprep.subr.bf16.mxu0 0
      %2153 = vmatpush1.bf16.msra.mxu0 %v1566
      %2154 = vmatprep.subr.bf16.mxu0 0
      %2155 = vmatpush1.bf16.msra.mxu0 %v1567
      %2156 = vmatprep.subr.bf16.mxu0 0
      %2157 = vmatpush1.bf16.msra.mxu0 %v1568
      %2158 = vmatprep.subr.bf16.mxu0 0
      %2159 = vmatpush1.bf16.msra.mxu0 %v1569
      %2160 = vmatprep.subr.bf16.mxu0 0
      %2161 = vmatpush1.bf16.msra.mxu0 %v1570
      %2162 = vmatprep.subr.bf16.mxu0 0
      %2163 = vmatpush1.bf16.msra.mxu0 %v1571
      %2164 = vmatprep.subr.bf16.mxu0 0
      %2165 = vmatpush1.bf16.msra.mxu0 %v1572
      %2166 = vmatprep.subr.bf16.mxu0 0
      %2167 = vmatpush1.bf16.msra.mxu0 %v1573
      %2168 = vmatprep.subr.bf16.mxu0 0
      %2169 = vmatpush1.bf16.msra.mxu0 %v1574
      %2170 = vmatprep.mubr.bf16.mxu0 %v942
      %2171 = vmatmul.mubr.bf16.gmra.mrb[0].mxu0 %v941
      %v2172 = vpop.f32.mrb[0].mxu0
      %v2173 = vadd.f32 %v2012, %v2172
      %v2174 = vpop.f32.mrb[0].mxu0
      %v2175 = vpop.f32.mrb[0].mxu0
      %v2176 = vadd.f32 %v2015, %v2175
      %v2177 = vpop.f32.mrb[0].mxu0
      %2178 = vmatprep.mubr.bf16.mxu0 %v951
      %2179 = vmatmul.mubr.bf16.gmra.mrb[0].mxu0 %v950
      %v2180 = vpop.f32.mrb[0].mxu0
      %v2181 = vadd.f32 %v2020, %v2180
      %v2182 = vpop.f32.mrb[0].mxu0
      %v2183 = vpop.f32.mrb[0].mxu0
      %v2184 = vadd.f32 %v2023, %v2183
      %v2185 = vpop.f32.mrb[0].mxu0
      %2186 = vmatprep.mubr.bf16.mxu0 %v960
      %2187 = vmatmul.mubr.bf16.gmra.mrb[0].mxu0 %v959
      %v2188 = vpop.f32.mrb[0].mxu0
      %v2189 = vadd.f32 %v2028, %v2188
      %v2190 = vpop.f32.mrb[0].mxu0
      %v2191 = vpop.f32.mrb[0].mxu0
      %v2192 = vadd.f32 %v2031, %v2191
      %v2193 = vpop.f32.mrb[0].mxu0
      %2194 = vmatprep.mubr.bf16.mxu0 %v969
      %2195 = vmatmul.mubr.bf16.gmra.mrb[0].mxu0 %v968
      %v2196 = vpop.f32.mrb[0].mxu0
      %v2197 = vadd.f32 %v2036, %v2196
      %v2198 = vpop.f32.mrb[0].mxu0
      %v2199 = vpop.f32.mrb[0].mxu0
      %v2200 = vadd.f32 %v2039, %v2199
      %v2201 = vpop.f32.mrb[0].mxu0
      %2202 = vmatprep.mubr.bf16.mxu0 %v978
      %2203 = vmatmul.mubr.bf16.gmra.mrb[0].mxu0 %v977
      %v2204 = vpop.f32.mrb[0].mxu0
      %v2205 = vadd.f32 %v2044, %v2204
      %v2206 = vpop.f32.mrb[0].mxu0
      %v2207 = vpop.f32.mrb[0].mxu0
      %v2208 = vadd.f32 %v2047, %v2207
      %v2209 = vpop.f32.mrb[0].mxu0
      %2210 = vmatprep.mubr.bf16.mxu0 %v987
      %2211 = vmatmul.mubr.bf16.gmra.mrb[0].mxu0 %v986
      %v2212 = vpop.f32.mrb[0].mxu0
      %v2213 = vadd.f32 %v2052, %v2212
      %v2214 = vpop.f32.mrb[0].mxu0
      %v2215 = vpop.f32.mrb[0].mxu0
      %v2216 = vadd.f32 %v2055, %v2215
      %v2217 = vpop.f32.mrb[0].mxu0
      %2218 = vmatprep.mubr.bf16.mxu0 %v996
      %2219 = vmatmul.mubr.bf16.gmra.mrb[0].mxu0 %v995
      %v2220 = vpop.f32.mrb[0].mxu0
      %v2221 = vadd.f32 %v2060, %v2220
      %v2222 = vpop.f32.mrb[0].mxu0
      %v2223 = vpop.f32.mrb[0].mxu0
      %v2224 = vadd.f32 %v2063, %v2223
      %v2225 = vpop.f32.mrb[0].mxu0
      %2226 = vmatprep.mubr.bf16.mxu0 %v1005
      %2227 = vmatmul.mubr.bf16.gmra.mrb[0].mxu0 %v1004
      %v2228 = vpop.f32.mrb[0].mxu0
      %v2229 = vadd.f32 %v2068, %v2228
      %v2230 = vpop.f32.mrb[0].mxu0
      %v2231 = vpop.f32.mrb[0].mxu0
      %v2232 = vadd.f32 %v2071, %v2231
      %v2233 = vpop.f32.mrb[0].mxu0
      %2234 = vmatprep.mubr.bf16.mxu0 %v1014
      %2235 = vmatmul.mubr.bf16.gmra.mrb[0].mxu0 %v1013
      %v2236 = vpop.f32.mrb[0].mxu0
      %v2237 = vadd.f32 %v2076, %v2236
      %v2238 = vpop.f32.mrb[0].mxu0
      %v2239 = vpop.f32.mrb[0].mxu0
      %v2240 = vadd.f32 %v2079, %v2239
      %v2241 = vpop.f32.mrb[0].mxu0
      %2242 = vmatprep.mubr.bf16.mxu0 %v1023
      %2243 = vmatmul.mubr.bf16.gmra.mrb[0].mxu0 %v1022
      %v2244 = vpop.f32.mrb[0].mxu0
      %v2245 = vadd.f32 %v2084, %v2244
      %v2246 = vpop.f32.mrb[0].mxu0
      %v2247 = vpop.f32.mrb[0].mxu0
      %v2248 = vadd.f32 %v2087, %v2247
      %v2249 = vpop.f32.mrb[0].mxu0
      %2250 = vmatprep.mubr.bf16.mxu0 %v1032
      %2251 = vmatmul.mubr.bf16.gmra.mrb[0].mxu0 %v1031
      %v2252 = vpop.f32.mrb[0].mxu0
      %v2253 = vadd.f32 %v2092, %v2252
      %v2254 = vpop.f32.mrb[0].mxu0
      %v2255 = vpop.f32.mrb[0].mxu0
      %v2256 = vadd.f32 %v2095, %v2255
      %v2257 = vpop.f32.mrb[0].mxu0
      %2258 = vmatprep.mubr.bf16.mxu0 %v1041
      %2259 = vmatmul.mubr.bf16.gmra.mrb[0].mxu0 %v1040
      %v2260 = vpop.f32.mrb[0].mxu0
      %v2261 = vadd.f32 %v2100, %v2260
      %v2262 = vpop.f32.mrb[0].mxu0
      %v2263 = vpop.f32.mrb[0].mxu0
      %v2264 = vadd.f32 %v2103, %v2263
      %v2265 = vpop.f32.mrb[0].mxu0
      %2266 = vmatprep.mubr.bf16.mxu0 %v1050
      %2267 = vmatmul.mubr.bf16.gmra.mrb[0].mxu0 %v1049
      %v2268 = vpop.f32.mrb[0].mxu0
      %v2269 = vadd.f32 %v2108, %v2268
      %v2270 = vpop.f32.mrb[0].mxu0
      %v2271 = vpop.f32.mrb[0].mxu0
      %v2272 = vadd.f32 %v2111, %v2271
      %v2273 = vpop.f32.mrb[0].mxu0
      %2274 = vmatprep.mubr.bf16.mxu0 %v1059
      %2275 = vmatmul.mubr.bf16.gmra.mrb[0].mxu0 %v1058
      %v2276 = vpop.f32.mrb[0].mxu0
      %v2277 = vadd.f32 %v2116, %v2276
      %v2278 = vpop.f32.mrb[0].mxu0
      %v2279 = vpop.f32.mrb[0].mxu0
      %v2280 = vadd.f32 %v2119, %v2279
      %v2281 = vpop.f32.mrb[0].mxu0
      %2282 = vmatprep.mubr.bf16.mxu0 %v1068
      %2283 = vmatmul.mubr.bf16.gmra.mrb[0].mxu0 %v1067
      %v2284 = vpop.f32.mrb[0].mxu0
      %v2285 = vadd.f32 %v2124, %v2284
      %v2286 = vpop.f32.mrb[0].mxu0
      %v2287 = vpop.f32.mrb[0].mxu0
      %v2288 = vadd.f32 %v2127, %v2287
      %v2289 = vpop.f32.mrb[0].mxu0
      %2290 = vmatprep.mubr.bf16.mxu0 %v1077
      %2291 = vmatmul.mubr.bf16.gmra.mrb[0].mxu0 %v1076
      %v2292 = vpop.f32.mrb[0].mxu0
      %v2293 = vadd.f32 %v2132, %v2292
      %v2294 = vpop.f32.mrb[0].mxu0
      %v2295 = vpop.f32.mrb[0].mxu0
      %v2296 = vadd.f32 %v2135, %v2295
      %v2297 = vpop.f32.mrb[0].mxu0
      %2298 = vdwg.mxu0
      %2299 = vmatprep.subr.bf16.mxu0 0
      %2300 = vmatpush1.bf16.msra.mxu0 %v1575
      %2301 = vmatprep.subr.bf16.mxu0 0
      %2302 = vmatpush1.bf16.msra.mxu0 %v1576
      %2303 = vmatprep.subr.bf16.mxu0 0
      %2304 = vmatpush1.bf16.msra.mxu0 %v1577
      %2305 = vmatprep.subr.bf16.mxu0 0
      %2306 = vmatpush1.bf16.msra.mxu0 %v1578
      %2307 = vmatprep.subr.bf16.mxu0 0
      %2308 = vmatpush1.bf16.msra.mxu0 %v1579
      %2309 = vmatprep.subr.bf16.mxu0 0
      %2310 = vmatpush1.bf16.msra.mxu0 %v1580
      %2311 = vmatprep.subr.bf16.mxu0 0
      %2312 = vmatpush1.bf16.msra.mxu0 %v1581
      %2313 = vmatprep.subr.bf16.mxu0 0
      %2314 = vmatpush1.bf16.msra.mxu0 %v1582
      %2315 = vmatprep.subr.bf16.mxu0 0
      %2316 = vmatpush1.bf16.msra.mxu0 0
      %2317 = vmatprep.subr.bf16.mxu0 0
      %2318 = vmatpush1.bf16.msra.mxu0 0
      %2319 = vmatprep.subr.bf16.mxu0 0
      %2320 = vmatpush1.bf16.msra.mxu0 0
      %2321 = vmatprep.subr.bf16.mxu0 0
      %2322 = vmatpush1.bf16.msra.mxu0 0
      %2323 = vmatprep.subr.bf16.mxu0 0
      %2324 = vmatpush1.bf16.msra.mxu0 0
      %2325 = vmatprep.subr.bf16.mxu0 0
      %2326 = vmatpush1.bf16.msra.mxu0 0
      %2327 = vmatprep.subr.bf16.mxu0 0
      %2328 = vmatpush1.bf16.msra.mxu0 0
      %2329 = vmatprep.subr.bf16.mxu0 0
      %2330 = vmatpush1.bf16.msra.mxu0 0
      %2331 = vmatprep.mubr.bf16.mxu0 0
      %2332 = vmatmul.mubr.bf16.gmra.mrb[0].mxu0 %v943
      %v2333 = vpop.f32.mrb[0].mxu0
      %v2334 = vadd.f32 %v2173, %v2333
      %v2335 = vpop.f32.mrb[0].mxu0
      %v2336 = vpop.f32.mrb[0].mxu0
      %v2337 = vadd.f32 %v2176, %v2336
      %v2338 = vpop.f32.mrb[0].mxu0
      %2339 = vmatprep.mubr.bf16.mxu0 0
      %2340 = vmatmul.mubr.bf16.gmra.mrb[0].mxu0 %v952
      %v2341 = vpop.f32.mrb[0].mxu0
      %v2342 = vadd.f32 %v2181, %v2341
      %v2343 = vpop.f32.mrb[0].mxu0
      %v2344 = vpop.f32.mrb[0].mxu0
      %v2345 = vadd.f32 %v2184, %v2344
      %v2346 = vpop.f32.mrb[0].mxu0
      %2347 = vmatprep.mubr.bf16.mxu0 0
      %2348 = vmatmul.mubr.bf16.gmra.mrb[0].mxu0 %v961
      %v2349 = vpop.f32.mrb[0].mxu0
      %v2350 = vadd.f32 %v2189, %v2349
      %v2351 = vpop.f32.mrb[0].mxu0
      %v2352 = vpop.f32.mrb[0].mxu0
      %v2353 = vadd.f32 %v2192, %v2352
      %v2354 = vpop.f32.mrb[0].mxu0
      %2355 = vmatprep.mubr.bf16.mxu0 0
      %2356 = vmatmul.mubr.bf16.gmra.mrb[0].mxu0 %v970
      %v2357 = vpop.f32.mrb[0].mxu0
      %v2358 = vadd.f32 %v2197, %v2357
      %v2359 = vpop.f32.mrb[0].mxu0
      %v2360 = vpop.f32.mrb[0].mxu0
      %v2361 = vadd.f32 %v2200, %v2360
      %v2362 = vpop.f32.mrb[0].mxu0
      %2363 = vmatprep.mubr.bf16.mxu0 0
      %2364 = vmatmul.mubr.bf16.gmra.mrb[0].mxu0 %v979
      %v2365 = vpop.f32.mrb[0].mxu0
      %v2366 = vadd.f32 %v2205, %v2365
      %v2367 = vpop.f32.mrb[0].mxu0
      %v2368 = vpop.f32.mrb[0].mxu0
      %v2369 = vadd.f32 %v2208, %v2368
      %v2370 = vpop.f32.mrb[0].mxu0
      %2371 = vmatprep.mubr.bf16.mxu0 0
      %2372 = vmatmul.mubr.bf16.gmra.mrb[0].mxu0 %v988
      %v2373 = vpop.f32.mrb[0].mxu0
      %v2374 = vadd.f32 %v2213, %v2373
      %v2375 = vpop.f32.mrb[0].mxu0
      %v2376 = vpop.f32.mrb[0].mxu0
      %v2377 = vadd.f32 %v2216, %v2376
      %v2378 = vpop.f32.mrb[0].mxu0
      %2379 = vmatprep.mubr.bf16.mxu0 0
      %2380 = vmatmul.mubr.bf16.gmra.mrb[0].mxu0 %v997
      %v2381 = vpop.f32.mrb[0].mxu0
      %v2382 = vadd.f32 %v2221, %v2381
      %v2383 = vpop.f32.mrb[0].mxu0
      %v2384 = vpop.f32.mrb[0].mxu0
      %v2385 = vadd.f32 %v2224, %v2384
      %v2386 = vpop.f32.mrb[0].mxu0
      %2387 = vmatprep.mubr.bf16.mxu0 0
      %2388 = vmatmul.mubr.bf16.gmra.mrb[0].mxu0 %v1006
      %v2389 = vpop.f32.mrb[0].mxu0
      %v2390 = vadd.f32 %v2229, %v2389
      %v2391 = vpop.f32.mrb[0].mxu0
      %v2392 = vpop.f32.mrb[0].mxu0
      %v2393 = vadd.f32 %v2232, %v2392
      %v2394 = vpop.f32.mrb[0].mxu0
      %2395 = vmatprep.mubr.bf16.mxu0 0
      %2396 = vmatmul.mubr.bf16.gmra.mrb[0].mxu0 %v1015
      %v2397 = vpop.f32.mrb[0].mxu0
      %v2398 = vadd.f32 %v2237, %v2397
      %v2399 = vpop.f32.mrb[0].mxu0
      %v2400 = vpop.f32.mrb[0].mxu0
      %v2401 = vadd.f32 %v2240, %v2400
      %v2402 = vpop.f32.mrb[0].mxu0
      %2403 = vmatprep.mubr.bf16.mxu0 0
      %2404 = vmatmul.mubr.bf16.gmra.mrb[0].mxu0 %v1024
      %v2405 = vpop.f32.mrb[0].mxu0
      %v2406 = vadd.f32 %v2245, %v2405
      %v2407 = vpop.f32.mrb[0].mxu0
      %v2408 = vpop.f32.mrb[0].mxu0
      %v2409 = vadd.f32 %v2248, %v2408
      %v2410 = vpop.f32.mrb[0].mxu0
      %2411 = vmatprep.mubr.bf16.mxu0 0
      %2412 = vmatmul.mubr.bf16.gmra.mrb[0].mxu0 %v1033
      %v2413 = vpop.f32.mrb[0].mxu0
      %v2414 = vadd.f32 %v2253, %v2413
      %v2415 = vpop.f32.mrb[0].mxu0
      %v2416 = vpop.f32.mrb[0].mxu0
      %v2417 = vadd.f32 %v2256, %v2416
      %v2418 = vpop.f32.mrb[0].mxu0
      %2419 = vmatprep.mubr.bf16.mxu0 0
      %2420 = vmatmul.mubr.bf16.gmra.mrb[0].mxu0 %v1042
      %v2421 = vpop.f32.mrb[0].mxu0
      %v2422 = vadd.f32 %v2261, %v2421
      %v2423 = vpop.f32.mrb[0].mxu0
      %v2424 = vpop.f32.mrb[0].mxu0
      %v2425 = vadd.f32 %v2264, %v2424
      %v2426 = vpop.f32.mrb[0].mxu0
      %2427 = vmatprep.mubr.bf16.mxu0 0
      %2428 = vmatmul.mubr.bf16.gmra.mrb[0].mxu0 %v1051
      %v2429 = vpop.f32.mrb[0].mxu0
      %v2430 = vadd.f32 %v2269, %v2429
      %v2431 = vpop.f32.mrb[0].mxu0
      %v2432 = vpop.f32.mrb[0].mxu0
      %v2433 = vadd.f32 %v2272, %v2432
      %v2434 = vpop.f32.mrb[0].mxu0
      %2435 = vmatprep.mubr.bf16.mxu0 0
      %2436 = vmatmul.mubr.bf16.gmra.mrb[0].mxu0 %v1060
      %v2437 = vpop.f32.mrb[0].mxu0
      %v2438 = vadd.f32 %v2277, %v2437
      %v2439 = vpop.f32.mrb[0].mxu0
      %v2440 = vpop.f32.mrb[0].mxu0
      %v2441 = vadd.f32 %v2280, %v2440
      %v2442 = vpop.f32.mrb[0].mxu0
      %2443 = vmatprep.mubr.bf16.mxu0 0
      %2444 = vmatmul.mubr.bf16.gmra.mrb[0].mxu0 %v1069
      %v2445 = vpop.f32.mrb[0].mxu0
      %v2446 = vadd.f32 %v2285, %v2445
      %v2447 = vpop.f32.mrb[0].mxu0
      %v2448 = vpop.f32.mrb[0].mxu0
      %v2449 = vadd.f32 %v2288, %v2448
      %v2450 = vpop.f32.mrb[0].mxu0
      %2451 = vmatprep.mubr.bf16.mxu0 0
      %2452 = vmatmul.mubr.bf16.gmra.mrb[0].mxu0 %v1078
      %v2453 = vpop.f32.mrb[0].mxu0
      %v2454 = vadd.f32 %v2293, %v2453
      %v2455 = vpop.f32.mrb[0].mxu0
      %v2456 = vpop.f32.mrb[0].mxu0
      %v2457 = vadd.f32 %v2296, %v2456
      %v2458 = vpop.f32.mrb[0].mxu0
      %2459 = vdwg.mxu0
      %v2460 = vld [vmem:[%s2 + $0x1] sm:$0x1]
      %vm2461 = vcmp.ge.f32.partialorder %v2334, 0.0
      %vm2462 = vcmp.ge.f32.partialorder %v2337, 0.0
      %vm2463 = vcmp.ge.f32.partialorder %v2342, 0.0
      %vm2464 = vcmp.ge.f32.partialorder %v2345, 0.0
      %vm2465 = vcmp.ge.f32.partialorder %v2350, 0.0
      %vm2466 = vcmp.ge.f32.partialorder %v2353, 0.0
      %vm2467 = vcmp.ge.f32.partialorder %v2358, 0.0
      %vm2468 = vcmp.ge.f32.partialorder %v2361, 0.0
      %vm2469 = vcmp.ge.f32.partialorder %v2366, 0.0
      %vm2470 = vcmp.ge.f32.partialorder %v2369, 0.0
      %vm2471 = vcmp.ge.f32.partialorder %v2374, 0.0
      %vm2472 = vcmp.ge.f32.partialorder %v2377, 0.0
      %vm2473 = vcmp.ge.f32.partialorder %v2382, 0.0
      %vm2474 = vcmp.ge.f32.partialorder %v2385, 0.0
      %vm2475 = vcmp.ge.f32.partialorder %v2390, 0.0
      %vm2476 = vcmp.ge.f32.partialorder %v2393, 0.0
      %vm2477 = vcmp.ge.f32.partialorder %v2398, 0.0
      %vm2478 = vcmp.ge.f32.partialorder %v2401, 0.0
      %vm2479 = vcmp.ge.f32.partialorder %v2406, 0.0
      %vm2480 = vcmp.ge.f32.partialorder %v2409, 0.0
      %vm2481 = vcmp.ge.f32.partialorder %v2414, 0.0
      %vm2482 = vcmp.ge.f32.partialorder %v2417, 0.0
      %vm2483 = vcmp.ge.f32.partialorder %v2422, 0.0
      %vm2484 = vcmp.ge.f32.partialorder %v2425, 0.0
      %vm2485 = vcmp.ge.f32.partialorder %v2430, 0.0
      %vm2486 = vcmp.ge.f32.partialorder %v2433, 0.0
      %vm2487 = vcmp.ge.f32.partialorder %v2438, 0.0
      %vm2488 = vcmp.ge.f32.partialorder %v2441, 0.0
      %vm2489 = vcmp.ge.f32.partialorder %v2446, 0.0
      %vm2490 = vcmp.ge.f32.partialorder %v2449, 0.0
      %vm2491 = vcmp.ge.f32.partialorder %v2454, 0.0
      %vm2492 = vcmp.ge.f32.partialorder %v2457, 0.0
      %v2493 = vlaneseq
      %v2494 = vshrl.u32 %v2493, 7
      %v2495 = vsub.s32 0, %v2494
      %v2496 = vrot.slane %v2460, %v2495
      %v2497 = vmul.f32 %v2496, %v2334
      %v2498 = vmul.f32 %v2496, %v2337
      %v2499 = vmul.f32 %v2496, %v2342
      %v2500 = vmul.f32 %v2496, %v2345
      %v2501 = vmul.f32 %v2496, %v2350
      %v2502 = vmul.f32 %v2496, %v2353
      %v2503 = vmul.f32 %v2496, %v2358
      %v2504 = vmul.f32 %v2496, %v2361
      %v2505 = vmul.f32 %v2496, %v2366
      %v2506 = vmul.f32 %v2496, %v2369
      %v2507 = vmul.f32 %v2496, %v2374
      %v2508 = vmul.f32 %v2496, %v2377
      %v2509 = vmul.f32 %v2496, %v2382
      %v2510 = vmul.f32 %v2496, %v2385
      %v2511 = vmul.f32 %v2496, %v2390
      %v2512 = vmul.f32 %v2496, %v2393
      %v2513 = vmul.f32 %v2496, %v2398
      %v2514 = vmul.f32 %v2496, %v2401
      %v2515 = vmul.f32 %v2496, %v2406
      %v2516 = vmul.f32 %v2496, %v2409
      %v2517 = vmul.f32 %v2496, %v2414
      %v2518 = vmul.f32 %v2496, %v2417
      %v2519 = vmul.f32 %v2496, %v2422
      %v2520 = vmul.f32 %v2496, %v2425
      %v2521 = vmul.f32 %v2496, %v2430
      %v2522 = vmul.f32 %v2496, %v2433
      %v2523 = vmul.f32 %v2496, %v2438
      %v2524 = vmul.f32 %v2496, %v2441
      %v2525 = vmul.f32 %v2496, %v2446
      %v2526 = vmul.f32 %v2496, %v2449
      %v2527 = vmul.f32 %v2496, %v2454
      %v2528 = vmul.f32 %v2496, %v2457
      %v2529 = vsel %vm2461, %v2334, %v2497
      %v2530 = vsel %vm2462, %v2337, %v2498
      %v2531 = vsel %vm2463, %v2342, %v2499
      %v2532 = vsel %vm2464, %v2345, %v2500
      %v2533 = vsel %vm2465, %v2350, %v2501
      %v2534 = vsel %vm2466, %v2353, %v2502
      %v2535 = vsel %vm2467, %v2358, %v2503
      %v2536 = vsel %vm2468, %v2361, %v2504
      %v2537 = vsel %vm2469, %v2366, %v2505
      %v2538 = vsel %vm2470, %v2369, %v2506
      %v2539 = vsel %vm2471, %v2374, %v2507
      %v2540 = vsel %vm2472, %v2377, %v2508
      %v2541 = vsel %vm2473, %v2382, %v2509
      %v2542 = vsel %vm2474, %v2385, %v2510
      %v2543 = vsel %vm2475, %v2390, %v2511
      %v2544 = vsel %vm2476, %v2393, %v2512
      %v2545 = vsel %vm2477, %v2398, %v2513
      %v2546 = vsel %vm2478, %v2401, %v2514
      %v2547 = vsel %vm2479, %v2406, %v2515
      %v2548 = vsel %vm2480, %v2409, %v2516
      %v2549 = vsel %vm2481, %v2414, %v2517
      %v2550 = vsel %vm2482, %v2417, %v2518
      %v2551 = vsel %vm2483, %v2422, %v2519
      %v2552 = vsel %vm2484, %v2425, %v2520
      %v2553 = vsel %vm2485, %v2430, %v2521
      %v2554 = vsel %vm2486, %v2433, %v2522
      %v2555 = vsel %vm2487, %v2438, %v2523
      %v2556 = vsel %vm2488, %v2441, %v2524
      %v2557 = vsel %vm2489, %v2446, %v2525
      %v2558 = vsel %vm2490, %v2449, %v2526
      %v2559 = vsel %vm2491, %v2454, %v2527
      %v2560 = vsel %vm2492, %v2457, %v2528
      %v2561 = vpack.c.bf16 %v2530, %v2529
      %v2562 = vpack.c.bf16 %v2532, %v2531
      %v2563 = vpack.c.bf16 %v2534, %v2533
      %v2564 = vpack.c.bf16 %v2536, %v2535
      %v2565 = vpack.c.bf16 %v2538, %v2537
      %v2566 = vpack.c.bf16 %v2540, %v2539
      %v2567 = vpack.c.bf16 %v2542, %v2541
      %v2568 = vpack.c.bf16 %v2544, %v2543
      %v2569 = vpack.c.bf16 %v2546, %v2545
      %v2570 = vpack.c.bf16 %v2548, %v2547
      %v2571 = vpack.c.bf16 %v2550, %v2549
      %v2572 = vpack.c.bf16 %v2552, %v2551
      %v2573 = vpack.c.bf16 %v2554, %v2553
      %v2574 = vpack.c.bf16 %v2556, %v2555
      %v2575 = vpack.c.bf16 %v2558, %v2557
      %v2576 = vpack.c.bf16 %v2560, %v2559
      %v2593 = vunpack.c.l.b16 %v2561
      %v2594 = vunpack.c.h.b16 %v2561
      %v2595 = vunpack.c.l.b16 %v2562
      %v2596 = vunpack.c.h.b16 %v2562
      %v2597 = vunpack.c.l.b16 %v2563
      %v2598 = vunpack.c.h.b16 %v2563
      %v2599 = vunpack.c.l.b16 %v2564
      %v2600 = vunpack.c.h.b16 %v2564
      %v2601 = vunpack.c.l.b16 %v2565
      %v2602 = vunpack.c.h.b16 %v2565
      %v2603 = vunpack.c.l.b16 %v2566
      %v2604 = vunpack.c.h.b16 %v2566
      %v2605 = vunpack.c.l.b16 %v2567
      %v2606 = vunpack.c.h.b16 %v2567
      %v2607 = vunpack.c.l.b16 %v2568
      %v2608 = vunpack.c.h.b16 %v2568
      %v2609 = vunpack.c.l.b16 %v2569
      %v2610 = vunpack.c.h.b16 %v2569
      %v2611 = vunpack.c.l.b16 %v2570
      %v2612 = vunpack.c.h.b16 %v2570
      %v2613 = vunpack.c.l.b16 %v2571
      %v2614 = vunpack.c.h.b16 %v2571
      %v2615 = vunpack.c.l.b16 %v2572
      %v2616 = vunpack.c.h.b16 %v2572
      %v2617 = vunpack.c.l.b16 %v2573
      %v2618 = vunpack.c.h.b16 %v2573
      %v2619 = vunpack.c.l.b16 %v2574
      %v2620 = vunpack.c.h.b16 %v2574
      %v2621 = vunpack.c.l.b16 %v2575
      %v2622 = vunpack.c.h.b16 %v2575
      %v2623 = vunpack.c.l.b16 %v2576
      %v2624 = vunpack.c.h.b16 %v2576
      %v2625 = vpack.c.b16 %v2593, %v2593
      %v2626 = vpack.c.b16 %v2594, %v2594
      %v2627 = vpack.c.b16 %v2595, %v2595
      %v2628 = vpack.c.b16 %v2596, %v2596
      %v2629 = vpack.c.b16 %v2597, %v2597
      %v2630 = vpack.c.b16 %v2598, %v2598
      %v2631 = vpack.c.b16 %v2599, %v2599
      %v2632 = vpack.c.b16 %v2600, %v2600
      %v2633 = vpack.c.b16 %v2601, %v2601
      %v2634 = vpack.c.b16 %v2602, %v2602
      %v2635 = vpack.c.b16 %v2603, %v2603
      %v2636 = vpack.c.b16 %v2604, %v2604
      %v2637 = vpack.c.b16 %v2605, %v2605
      %v2638 = vpack.c.b16 %v2606, %v2606
      %v2639 = vpack.c.b16 %v2607, %v2607
      %v2640 = vpack.c.b16 %v2608, %v2608
      %v2641 = vpack.c.b16 %v2609, %v2609
      %v2642 = vpack.c.b16 %v2610, %v2610
      %v2643 = vpack.c.b16 %v2611, %v2611
      %v2644 = vpack.c.b16 %v2612, %v2612
      %v2645 = vpack.c.b16 %v2613, %v2613
      %v2646 = vpack.c.b16 %v2614, %v2614
      %v2647 = vpack.c.b16 %v2615, %v2615
      %v2648 = vpack.c.b16 %v2616, %v2616
      %v2649 = vpack.c.b16 %v2617, %v2617
      %v2650 = vpack.c.b16 %v2618, %v2618
      %v2651 = vpack.c.b16 %v2619, %v2619
      %v2652 = vpack.c.b16 %v2620, %v2620
      %v2653 = vpack.c.b16 %v2621, %v2621
      %v2654 = vpack.c.b16 %v2622, %v2622
      %v2655 = vpack.c.b16 %v2623, %v2623
      %v2656 = vpack.c.b16 %v2624, %v2624
      %2689 = vst [vmem:[%s175] sm:$0xf] %v2625
      %2690 = vst [vmem:[%s175 + $0x4] sm:$0xf] %v2626
      %2691 = vst [vmem:[%s175 + $0x8] sm:$0xf] %v2627
      %2692 = vst [vmem:[%s175 + $0xc] sm:$0xf] %v2628
      %2693 = vst [vmem:[%s175 + $0x10] sm:$0xf] %v2629
      %2694 = vst [vmem:[%s175 + $0x14] sm:$0xf] %v2630
      %2695 = vst [vmem:[%s175 + $0x18] sm:$0xf] %v2631
      %2696 = vst [vmem:[%s175 + $0x1c] sm:$0xf] %v2632
      %2697 = vst [vmem:[%s175 + $0x20] sm:$0xf] %v2633
      %2698 = vst [vmem:[%s175 + $0x24] sm:$0xf] %v2634
      %2699 = vst [vmem:[%s175 + $0x28] sm:$0xf] %v2635
      %2700 = vst [vmem:[%s175 + $0x2c] sm:$0xf] %v2636
      %2701 = vst [vmem:[%s175 + $0x30] sm:$0xf] %v2637
      %2702 = vst [vmem:[%s175 + $0x34] sm:$0xf] %v2638
      %2703 = vst [vmem:[%s175 + $0x38] sm:$0xf] %v2639
      %2704 = vst [vmem:[%s175 + $0x3c] sm:$0xf] %v2640
      %2705 = vst [vmem:[%s175 + $0x40] sm:$0xf] %v2641
      %2706 = vst [vmem:[%s175 + $0x44] sm:$0xf] %v2642
      %2707 = vst [vmem:[%s175 + $0x48] sm:$0xf] %v2643
      %2708 = vst [vmem:[%s175 + $0x4c] sm:$0xf] %v2644
      %2709 = vst [vmem:[%s175 + $0x50] sm:$0xf] %v2645
      %2710 = vst [vmem:[%s175 + $0x54] sm:$0xf] %v2646
      %2711 = vst [vmem:[%s175 + $0x58] sm:$0xf] %v2647
      %2712 = vst [vmem:[%s175 + $0x5c] sm:$0xf] %v2648
      %2713 = vst [vmem:[%s175 + $0x60] sm:$0xf] %v2649
      %2714 = vst [vmem:[%s175 + $0x64] sm:$0xf] %v2650
      %2715 = vst [vmem:[%s175 + $0x68] sm:$0xf] %v2651
      %2716 = vst [vmem:[%s175 + $0x6c] sm:$0xf] %v2652
      %2717 = vst [vmem:[%s175 + $0x70] sm:$0xf] %v2653
      %2718 = vst [vmem:[%s175 + $0x74] sm:$0xf] %v2654
      %2719 = vst [vmem:[%s175 + $0x78] sm:$0xf] %v2655
      %2720 = vst [vmem:[%s175 + $0x7c] sm:$0xf] %v2656
      %s2721 = smul.u32 32, %s14
      %p2722 = scmp.lt.s32.totalorder %s2721, 63
      %s2723 = scalar_select %p2722, %s2721, 63
      %s2724 = smul.addr %s2723, 4
      %s2725 = scalar_lea.vmem %s3, %s2724
      // Predicated region
      $region33: #{network_builder_forward.7} parent=31 // pred_check
        %p2726 = pneg %p100
      $region34: #{network_builder_forward.7} parent=31 // pred_check_branch
        %2728 = sbr.rel (%p2726) target = $region36
      $region35: #{network_builder_forward.7} parent=31 // pred_region
        %s2729 = smul.u32 32, %s14
      $region36: #{network_builder_forward.7} parent=31 // pred_fallthru
        _
    $region32: #{network_builder_forward.7} parent=5 // pred_fallthru
      _
    %p2730 = scmp.le.s32.totalorder 2, %s9
    // Predicated region
    $region37: #{network_builder_forward.7} parent=5 // pred_check
      %p2731 = pneg %p2730
    $region38: #{network_builder_forward.7} parent=5 // pred_check_branch
      %2733 = sbr.rel (%p2731) target = $region40
    $region39: #{network_builder_forward.7} parent=5 // pred_region
      %s2734 = ssub.s32 %s9, 2
      // Predicated region
      $region41: #{network_builder_forward.7} parent=39 // pred_check
        %p2735 = pneg %p106
      $region42: #{network_builder_forward.7} parent=39 // pred_check_branch
        %2737 = sbr.rel (%p2735) target = $region44
      $region43: #{network_builder_forward.7} parent=39 // pred_region
        %s2738 = smul.u32 32, %s15
        %p2739 = scmp.lt.s32.totalorder %s2738, 63
        %s2740 = scalar_select %p2739, %s2738, 63
        %s2741 = smul.addr %s2740, 4
        %s2742 = scalar_lea.vmem %s3, %s2741
      $region44: #{network_builder_forward.7} parent=39 // pred_fallthru
        _
    $region40: #{network_builder_forward.7} parent=5 // pred_fallthru
      _
  $region6: #{network_builder_forward.7} parent=0 // loop_footer
    %s13 = sadd.s32 1, %s9
  $region7: #{network_builder_forward.7} parent=0 // loop_footer_branch
    %8 = sbr.rel target = $region3
  $region8: #{network_builder_forward.7} parent=0 // loop_exit
    _

// kernel: network_builder_forward.8
$region0: #{network_builder_forward.8}
  #allocation0 [shape = 'u32[]', space=smem, size = 0x4, offset = 0x4, fixed_abs, tag = 'smem constant byte address 0x4 - core index']
  #allocation1 [shape = 'u32[144,128]{1,0:T(1,128)}', space=vmem, size = 0x12000, scoped, tag = 'internal scratch']
  %s0 = inlined_call_operand.vmem [shape: bf16[128,1152], index: 0, kind: input, shape index: {}]
  %s1 = inlined_call_operand.vmem [shape: bf16[1152,128], index: 1, kind: input, shape index: {}]
  %s2 = inlined_call_operand.vmem [shape: f32[1,128], index: 2, kind: input, shape index: {}]
  %s3 = inlined_call_operand.vmem [shape: f32[128,128], index: 3, kind: input, shape index: {}]
  %s4 = inlined_call_operand.vmem [shape: f32[128,128], index: 4, kind: output, shape index: {}]
  %s5 = sld [smem:[#allocation0]]
  $region26: #{network_builder_forward.8} parent=0
    _
  %s7 = ssub.s32 1, %s5
  %s8 = scalar_select 0, %s7, %s5
  // Predicated region
  $region2: #{network_builder_forward.8} parent=0 // pred_check
    _
  $region3: #{network_builder_forward.8} parent=0 // pred_check_branch
    %10 = sbr.rel (0) target = $region5
  $region4: #{network_builder_forward.8} parent=0 // pred_region
    _
  $region5: #{network_builder_forward.8} parent=0 // pred_fallthru
    _
  // Predicated region
  $region6: #{network_builder_forward.8} parent=0 // pred_check
    _
  $region7: #{network_builder_forward.8} parent=0 // pred_check_branch
    %12 = sbr.rel (0) target = $region9
  $region8: #{network_builder_forward.8} parent=0 // pred_region
    _
  $region9: #{network_builder_forward.8} parent=0 // pred_fallthru
    _
  // Predicated region
  $region10: #{network_builder_forward.8} parent=0 // pred_check
    _
  $region11: #{network_builder_forward.8} parent=0 // pred_check_branch
    %14 = sbr.rel (0) target = $region13
  $region12: #{network_builder_forward.8} parent=0 // pred_region
    _
  $region13: #{network_builder_forward.8} parent=0 // pred_fallthru
    _
  // Predicated region
  $region14: #{network_builder_forward.8} parent=0 // pred_check
    _
  $region15: #{network_builder_forward.8} parent=0 // pred_check_branch
    %16 = sbr.rel (0) target = $region17
  $region16: #{network_builder_forward.8} parent=0 // pred_region
    _
  $region17: #{network_builder_forward.8} parent=0 // pred_fallthru
    _
  %v18 = vld [vmem:[%s0] sm:$0xff]
  %v19 = vld [vmem:[%s0 + $0x8] sm:$0xff]
  %v20 = vld [vmem:[%s0 + $0x10] sm:$0xff]
  %v21 = vld [vmem:[%s0 + $0x18] sm:$0xff]
  %v22 = vld [vmem:[%s0 + $0x20] sm:$0xf]
  %v23 = vld [vmem:[%s0 + $0x24] sm:$0xff]
  %v24 = vld [vmem:[%s0 + $0x2c] sm:$0xff]
  %v25 = vld [vmem:[%s0 + $0x34] sm:$0xff]
  %v26 = vld [vmem:[%s0 + $0x3c] sm:$0xff]
  %v27 = vld [vmem:[%s0 + $0x44] sm:$0xf]
  %v28 = vld [vmem:[%s0 + $0x48] sm:$0xff]
  %v29 = vld [vmem:[%s0 + $0x50] sm:$0xff]
  %v30 = vld [vmem:[%s0 + $0x58] sm:$0xff]
  %v31 = vld [vmem:[%s0 + $0x60] sm:$0xff]
  %v32 = vld [vmem:[%s0 + $0x68] sm:$0xf]
  %v33 = vld [vmem:[%s0 + $0x6c] sm:$0xff]
  %v34 = vld [vmem:[%s0 + $0x74] sm:$0xff]
  %v35 = vld [vmem:[%s0 + $0x7c] sm:$0xff]
  %v36 = vld [vmem:[%s0 + $0x84] sm:$0xff]
  %v37 = vld [vmem:[%s0 + $0x8c] sm:$0xf]
  %v38 = vld [vmem:[%s0 + $0x90] sm:$0xff]
  %v39 = vld [vmem:[%s0 + $0x98] sm:$0xff]
  %v40 = vld [vmem:[%s0 + $0xa0] sm:$0xff]
  %v41 = vld [vmem:[%s0 + $0xa8] sm:$0xff]
  %v42 = vld [vmem:[%s0 + $0xb0] sm:$0xf]
  %v43 = vld [vmem:[%s0 + $0xb4] sm:$0xff]
  %v44 = vld [vmem:[%s0 + $0xbc] sm:$0xff]
  %v45 = vld [vmem:[%s0 + $0xc4] sm:$0xff]
  %v46 = vld [vmem:[%s0 + $0xcc] sm:$0xff]
  %v47 = vld [vmem:[%s0 + $0xd4] sm:$0xf]
  %v48 = vld [vmem:[%s0 + $0xd8] sm:$0xff]
  %v49 = vld [vmem:[%s0 + $0xe0] sm:$0xff]
  %v50 = vld [vmem:[%s0 + $0xe8] sm:$0xff]
  %v51 = vld [vmem:[%s0 + $0xf0] sm:$0xff]
  %v52 = vld [vmem:[%s0 + $0xf8] sm:$0xf]
  %v53 = vld [vmem:[%s0 + $0xfc] sm:$0xff]
  %v54 = vld [vmem:[%s0 + $0x104] sm:$0xff]
  %v55 = vld [vmem:[%s0 + $0x10c] sm:$0xff]
  %v56 = vld [vmem:[%s0 + $0x114] sm:$0xff]
  %v57 = vld [vmem:[%s0 + $0x11c] sm:$0xf]
  %v58 = vld [vmem:[%s0 + $0x120] sm:$0xff]
  %v59 = vld [vmem:[%s0 + $0x128] sm:$0xff]
  %v60 = vld [vmem:[%s0 + $0x130] sm:$0xff]
  %v61 = vld [vmem:[%s0 + $0x138] sm:$0xff]
  %v62 = vld [vmem:[%s0 + $0x140] sm:$0xf]
  %v63 = vld [vmem:[%s0 + $0x144] sm:$0xff]
  %v64 = vld [vmem:[%s0 + $0x14c] sm:$0xff]
  %v65 = vld [vmem:[%s0 + $0x154] sm:$0xff]
  %v66 = vld [vmem:[%s0 + $0x15c] sm:$0xff]
  %v67 = vld [vmem:[%s0 + $0x164] sm:$0xf]
  %v68 = vld [vmem:[%s0 + $0x168] sm:$0xff]
  %v69 = vld [vmem:[%s0 + $0x170] sm:$0xff]
  %v70 = vld [vmem:[%s0 + $0x178] sm:$0xff]
  %v71 = vld [vmem:[%s0 + $0x180] sm:$0xff]
  %v72 = vld [vmem:[%s0 + $0x188] sm:$0xf]
  %v73 = vld [vmem:[%s0 + $0x18c] sm:$0xff]
  %v74 = vld [vmem:[%s0 + $0x194] sm:$0xff]
  %v75 = vld [vmem:[%s0 + $0x19c] sm:$0xff]
  %v76 = vld [vmem:[%s0 + $0x1a4] sm:$0xff]
  %v77 = vld [vmem:[%s0 + $0x1ac] sm:$0xf]
  %v78 = vld [vmem:[%s0 + $0x1b0] sm:$0xff]
  %v79 = vld [vmem:[%s0 + $0x1b8] sm:$0xff]
  %v80 = vld [vmem:[%s0 + $0x1c0] sm:$0xff]
  %v81 = vld [vmem:[%s0 + $0x1c8] sm:$0xff]
  %v82 = vld [vmem:[%s0 + $0x1d0] sm:$0xf]
  %v83 = vld [vmem:[%s0 + $0x1d4] sm:$0xff]
  %v84 = vld [vmem:[%s0 + $0x1dc] sm:$0xff]
  %v85 = vld [vmem:[%s0 + $0x1e4] sm:$0xff]
  %v86 = vld [vmem:[%s0 + $0x1ec] sm:$0xff]
  %v87 = vld [vmem:[%s0 + $0x1f4] sm:$0xf]
  %v88 = vld [vmem:[%s0 + $0x1f8] sm:$0xff]
  %v89 = vld [vmem:[%s0 + $0x200] sm:$0xff]
  %v90 = vld [vmem:[%s0 + $0x208] sm:$0xff]
  %v91 = vld [vmem:[%s0 + $0x210] sm:$0xff]
  %v92 = vld [vmem:[%s0 + $0x218] sm:$0xf]
  %v93 = vld [vmem:[%s0 + $0x21c] sm:$0xff]
  %v94 = vld [vmem:[%s0 + $0x224] sm:$0xff]
  %v95 = vld [vmem:[%s0 + $0x22c] sm:$0xff]
  %v96 = vld [vmem:[%s0 + $0x234] sm:$0xff]
  %v97 = vld [vmem:[%s0 + $0x23c] sm:$0xf]
  %v98 = vld [vmem:[%s1] sm:$0xf]
  %v99 = vld [vmem:[%s1 + $0x4] sm:$0xf]
  %v100 = vld [vmem:[%s1 + $0x8] sm:$0xf]
  %v101 = vld [vmem:[%s1 + $0xc] sm:$0xf]
  %v102 = vld [vmem:[%s1 + $0x10] sm:$0xf]
  %v103 = vld [vmem:[%s1 + $0x14] sm:$0xf]
  %v104 = vld [vmem:[%s1 + $0x18] sm:$0xf]
  %v105 = vld [vmem:[%s1 + $0x1c] sm:$0xf]
  %v106 = vld [vmem:[%s1 + $0x20] sm:$0xf]
  %v107 = vld [vmem:[%s1 + $0x24] sm:$0xf]
  %v108 = vld [vmem:[%s1 + $0x28] sm:$0xf]
  %v109 = vld [vmem:[%s1 + $0x2c] sm:$0xf]
  %v110 = vld [vmem:[%s1 + $0x30] sm:$0xf]
  %v111 = vld [vmem:[%s1 + $0x34] sm:$0xf]
  %v112 = vld [vmem:[%s1 + $0x38] sm:$0xf]
  %v113 = vld [vmem:[%s1 + $0x3c] sm:$0xf]
  %v114 = vld [vmem:[%s1 + $0x40] sm:$0xf]
  %v115 = vld [vmem:[%s1 + $0x44] sm:$0xf]
  %v116 = vld [vmem:[%s1 + $0x48] sm:$0xf]
  %v117 = vld [vmem:[%s1 + $0x4c] sm:$0xf]
  %v118 = vld [vmem:[%s1 + $0x50] sm:$0xf]
  %v119 = vld [vmem:[%s1 + $0x54] sm:$0xf]
  %v120 = vld [vmem:[%s1 + $0x58] sm:$0xf]
  %v121 = vld [vmem:[%s1 + $0x5c] sm:$0xf]
  %v122 = vld [vmem:[%s1 + $0x60] sm:$0xf]
  %v123 = vld [vmem:[%s1 + $0x64] sm:$0xf]
  %v124 = vld [vmem:[%s1 + $0x68] sm:$0xf]
  %v125 = vld [vmem:[%s1 + $0x6c] sm:$0xf]
  %v126 = vld [vmem:[%s1 + $0x70] sm:$0xf]
  %v127 = vld [vmem:[%s1 + $0x74] sm:$0xf]
  %v128 = vld [vmem:[%s1 + $0x78] sm:$0xf]
  %v129 = vld [vmem:[%s1 + $0x7c] sm:$0xf]
  %v130 = vld [vmem:[%s1 + $0x80] sm:$0xf]
  %v131 = vld [vmem:[%s1 + $0x84] sm:$0xf]
  %v132 = vld [vmem:[%s1 + $0x88] sm:$0xf]
  %v133 = vld [vmem:[%s1 + $0x8c] sm:$0xf]
  %v134 = vld [vmem:[%s1 + $0x90] sm:$0xf]
  %v135 = vld [vmem:[%s1 + $0x94] sm:$0xf]
  %v136 = vld [vmem:[%s1 + $0x98] sm:$0xf]
  %v137 = vld [vmem:[%s1 + $0x9c] sm:$0xf]
  %v138 = vld [vmem:[%s1 + $0xa0] sm:$0xf]
  %v139 = vld [vmem:[%s1 + $0xa4] sm:$0xf]
  %v140 = vld [vmem:[%s1 + $0xa8] sm:$0xf]
  %v141 = vld [vmem:[%s1 + $0xac] sm:$0xf]
  %v142 = vld [vmem:[%s1 + $0xb0] sm:$0xf]
  %v143 = vld [vmem:[%s1 + $0xb4] sm:$0xf]
  %v144 = vld [vmem:[%s1 + $0xb8] sm:$0xf]
  %v145 = vld [vmem:[%s1 + $0xbc] sm:$0xf]
  %v146 = vld [vmem:[%s1 + $0xc0] sm:$0xf]
  %v147 = vld [vmem:[%s1 + $0xc4] sm:$0xf]
  %v148 = vld [vmem:[%s1 + $0xc8] sm:$0xf]
  %v149 = vld [vmem:[%s1 + $0xcc] sm:$0xf]
  %v150 = vld [vmem:[%s1 + $0xd0] sm:$0xf]
  %v151 = vld [vmem:[%s1 + $0xd4] sm:$0xf]
  %v152 = vld [vmem:[%s1 + $0xd8] sm:$0xf]
  %v153 = vld [vmem:[%s1 + $0xdc] sm:$0xf]
  %v154 = vld [vmem:[%s1 + $0xe0] sm:$0xf]
  %v155 = vld [vmem:[%s1 + $0xe4] sm:$0xf]
  %v156 = vld [vmem:[%s1 + $0xe8] sm:$0xf]
  %v157 = vld [vmem:[%s1 + $0xec] sm:$0xf]
  %v158 = vld [vmem:[%s1 + $0xf0] sm:$0xf]
  %v159 = vld [vmem:[%s1 + $0xf4] sm:$0xf]
  %v160 = vld [vmem:[%s1 + $0xf8] sm:$0xf]
  %v161 = vld [vmem:[%s1 + $0xfc] sm:$0xf]
  %v162 = vld [vmem:[%s1 + $0x100] sm:$0xf]
  %v163 = vld [vmem:[%s1 + $0x104] sm:$0xf]
  %v164 = vld [vmem:[%s1 + $0x108] sm:$0xf]
  %v165 = vld [vmem:[%s1 + $0x10c] sm:$0xf]
  %v166 = vld [vmem:[%s1 + $0x110] sm:$0xf]
  %v167 = vld [vmem:[%s1 + $0x114] sm:$0xf]
  %v168 = vld [vmem:[%s1 + $0x118] sm:$0xf]
  %v169 = vld [vmem:[%s1 + $0x11c] sm:$0xf]
  %v170 = vld [vmem:[%s1 + $0x120] sm:$0xf]
  %v171 = vld [vmem:[%s1 + $0x124] sm:$0xf]
  %v172 = vld [vmem:[%s1 + $0x128] sm:$0xf]
  %v173 = vld [vmem:[%s1 + $0x12c] sm:$0xf]
  %v174 = vld [vmem:[%s1 + $0x130] sm:$0xf]
  %v175 = vld [vmem:[%s1 + $0x134] sm:$0xf]
  %v176 = vld [vmem:[%s1 + $0x138] sm:$0xf]
  %v177 = vld [vmem:[%s1 + $0x13c] sm:$0xf]
  %v178 = vld [vmem:[%s1 + $0x140] sm:$0xf]
  %v179 = vld [vmem:[%s1 + $0x144] sm:$0xf]
  %v180 = vld [vmem:[%s1 + $0x148] sm:$0xf]
  %v181 = vld [vmem:[%s1 + $0x14c] sm:$0xf]
  %v182 = vld [vmem:[%s1 + $0x150] sm:$0xf]
  %v183 = vld [vmem:[%s1 + $0x154] sm:$0xf]
  %v184 = vld [vmem:[%s1 + $0x158] sm:$0xf]
  %v185 = vld [vmem:[%s1 + $0x15c] sm:$0xf]
  %v186 = vld [vmem:[%s1 + $0x160] sm:$0xf]
  %v187 = vld [vmem:[%s1 + $0x164] sm:$0xf]
  %v188 = vld [vmem:[%s1 + $0x168] sm:$0xf]
  %v189 = vld [vmem:[%s1 + $0x16c] sm:$0xf]
  %v190 = vld [vmem:[%s1 + $0x170] sm:$0xf]
  %v191 = vld [vmem:[%s1 + $0x174] sm:$0xf]
  %v192 = vld [vmem:[%s1 + $0x178] sm:$0xf]
  %v193 = vld [vmem:[%s1 + $0x17c] sm:$0xf]
  %v194 = vld [vmem:[%s1 + $0x180] sm:$0xf]
  %v195 = vld [vmem:[%s1 + $0x184] sm:$0xf]
  %v196 = vld [vmem:[%s1 + $0x188] sm:$0xf]
  %v197 = vld [vmem:[%s1 + $0x18c] sm:$0xf]
  %v198 = vld [vmem:[%s1 + $0x190] sm:$0xf]
  %v199 = vld [vmem:[%s1 + $0x194] sm:$0xf]
  %v200 = vld [vmem:[%s1 + $0x198] sm:$0xf]
  %v201 = vld [vmem:[%s1 + $0x19c] sm:$0xf]
  %v202 = vld [vmem:[%s1 + $0x1a0] sm:$0xf]
  %v203 = vld [vmem:[%s1 + $0x1a4] sm:$0xf]
  %v204 = vld [vmem:[%s1 + $0x1a8] sm:$0xf]
  %v205 = vld [vmem:[%s1 + $0x1ac] sm:$0xf]
  %v206 = vld [vmem:[%s1 + $0x1b0] sm:$0xf]
  %v207 = vld [vmem:[%s1 + $0x1b4] sm:$0xf]
  %v208 = vld [vmem:[%s1 + $0x1b8] sm:$0xf]
  %v209 = vld [vmem:[%s1 + $0x1bc] sm:$0xf]
  %v210 = vld [vmem:[%s1 + $0x1c0] sm:$0xf]
  %v211 = vld [vmem:[%s1 + $0x1c4] sm:$0xf]
  %v212 = vld [vmem:[%s1 + $0x1c8] sm:$0xf]
  %v213 = vld [vmem:[%s1 + $0x1cc] sm:$0xf]
  %v214 = vld [vmem:[%s1 + $0x1d0] sm:$0xf]
  %v215 = vld [vmem:[%s1 + $0x1d4] sm:$0xf]
  %v216 = vld [vmem:[%s1 + $0x1d8] sm:$0xf]
  %v217 = vld [vmem:[%s1 + $0x1dc] sm:$0xf]
  %v218 = vld [vmem:[%s1 + $0x1e0] sm:$0xf]
  %v219 = vld [vmem:[%s1 + $0x1e4] sm:$0xf]
  %v220 = vld [vmem:[%s1 + $0x1e8] sm:$0xf]
  %v221 = vld [vmem:[%s1 + $0x1ec] sm:$0xf]
  %v222 = vld [vmem:[%s1 + $0x1f0] sm:$0xf]
  %v223 = vld [vmem:[%s1 + $0x1f4] sm:$0xf]
  %v224 = vld [vmem:[%s1 + $0x1f8] sm:$0xf]
  %v225 = vld [vmem:[%s1 + $0x1fc] sm:$0xf]
  %v226 = vld [vmem:[%s1 + $0x200] sm:$0xf]
  %v227 = vld [vmem:[%s1 + $0x204] sm:$0xf]
  %v228 = vld [vmem:[%s1 + $0x208] sm:$0xf]
  %v229 = vld [vmem:[%s1 + $0x20c] sm:$0xf]
  %v230 = vld [vmem:[%s1 + $0x210] sm:$0xf]
  %v231 = vld [vmem:[%s1 + $0x214] sm:$0xf]
  %v232 = vld [vmem:[%s1 + $0x218] sm:$0xf]
  %v233 = vld [vmem:[%s1 + $0x21c] sm:$0xf]
  %v234 = vld [vmem:[%s1 + $0x220] sm:$0xf]
  %v235 = vld [vmem:[%s1 + $0x224] sm:$0xf]
  %v236 = vld [vmem:[%s1 + $0x228] sm:$0xf]
  %v237 = vld [vmem:[%s1 + $0x22c] sm:$0xf]
  %v238 = vld [vmem:[%s1 + $0x230] sm:$0xf]
  %v239 = vld [vmem:[%s1 + $0x234] sm:$0xf]
  %v240 = vld [vmem:[%s1 + $0x238] sm:$0xf]
  %v241 = vld [vmem:[%s1 + $0x23c] sm:$0xf]
  %v242 = vld [vmem:[%s2] sm:$0x1]
  %v244 = vlaneseq
  %v245 = vshrl.u32 %v244, 7
  %v246 = vsub.s32 0, %v245
  %v247 = vrot.slane %v242, %v246
  %v329 = vunpack.c.l.b16 %v18
  %v330 = vunpack.c.h.b16 %v18
  %v331 = vunpack.c.l.b16 %v19
  %v332 = vunpack.c.h.b16 %v19
  %v333 = vunpack.c.l.b16 %v20
  %v334 = vunpack.c.h.b16 %v20
  %v335 = vunpack.c.l.b16 %v21
  %v336 = vunpack.c.h.b16 %v21
  %v337 = vunpack.c.l.b16 %v22
  %v338 = vunpack.c.l.b16 %v23
  %v339 = vunpack.c.h.b16 %v23
  %v340 = vunpack.c.l.b16 %v24
  %v341 = vunpack.c.h.b16 %v24
  %v342 = vunpack.c.l.b16 %v25
  %v343 = vunpack.c.h.b16 %v25
  %v344 = vunpack.c.l.b16 %v26
  %v345 = vunpack.c.h.b16 %v26
  %v346 = vunpack.c.l.b16 %v27
  %v347 = vunpack.c.l.b16 %v28
  %v348 = vunpack.c.h.b16 %v28
  %v349 = vunpack.c.l.b16 %v29
  %v350 = vunpack.c.h.b16 %v29
  %v351 = vunpack.c.l.b16 %v30
  %v352 = vunpack.c.h.b16 %v30
  %v353 = vunpack.c.l.b16 %v31
  %v354 = vunpack.c.h.b16 %v31
  %v355 = vunpack.c.l.b16 %v32
  %v356 = vunpack.c.l.b16 %v33
  %v357 = vunpack.c.h.b16 %v33
  %v358 = vunpack.c.l.b16 %v34
  %v359 = vunpack.c.h.b16 %v34
  %v360 = vunpack.c.l.b16 %v35
  %v361 = vunpack.c.h.b16 %v35
  %v362 = vunpack.c.l.b16 %v36
  %v363 = vunpack.c.h.b16 %v36
  %v364 = vunpack.c.l.b16 %v37
  %v365 = vunpack.c.l.b16 %v38
  %v366 = vunpack.c.h.b16 %v38
  %v367 = vunpack.c.l.b16 %v39
  %v368 = vunpack.c.h.b16 %v39
  %v369 = vunpack.c.l.b16 %v40
  %v370 = vunpack.c.h.b16 %v40
  %v371 = vunpack.c.l.b16 %v41
  %v372 = vunpack.c.h.b16 %v41
  %v373 = vunpack.c.l.b16 %v42
  %v374 = vunpack.c.l.b16 %v43
  %v375 = vunpack.c.h.b16 %v43
  %v376 = vunpack.c.l.b16 %v44
  %v377 = vunpack.c.h.b16 %v44
  %v378 = vunpack.c.l.b16 %v45
  %v379 = vunpack.c.h.b16 %v45
  %v380 = vunpack.c.l.b16 %v46
  %v381 = vunpack.c.h.b16 %v46
  %v382 = vunpack.c.l.b16 %v47
  %v383 = vunpack.c.l.b16 %v48
  %v384 = vunpack.c.h.b16 %v48
  %v385 = vunpack.c.l.b16 %v49
  %v386 = vunpack.c.h.b16 %v49
  %v387 = vunpack.c.l.b16 %v50
  %v388 = vunpack.c.h.b16 %v50
  %v389 = vunpack.c.l.b16 %v51
  %v390 = vunpack.c.h.b16 %v51
  %v391 = vunpack.c.l.b16 %v52
  %v392 = vunpack.c.l.b16 %v53
  %v393 = vunpack.c.h.b16 %v53
  %v394 = vunpack.c.l.b16 %v54
  %v395 = vunpack.c.h.b16 %v54
  %v396 = vunpack.c.l.b16 %v55
  %v397 = vunpack.c.h.b16 %v55
  %v398 = vunpack.c.l.b16 %v56
  %v399 = vunpack.c.h.b16 %v56
  %v400 = vunpack.c.l.b16 %v57
  %v401 = vunpack.c.l.b16 %v58
  %v402 = vunpack.c.h.b16 %v58
  %v403 = vunpack.c.l.b16 %v59
  %v404 = vunpack.c.h.b16 %v59
  %v405 = vunpack.c.l.b16 %v60
  %v406 = vunpack.c.h.b16 %v60
  %v407 = vunpack.c.l.b16 %v61
  %v408 = vunpack.c.h.b16 %v61
  %v409 = vunpack.c.l.b16 %v62
  %v410 = vunpack.c.l.b16 %v63
  %v411 = vunpack.c.h.b16 %v63
  %v412 = vunpack.c.l.b16 %v64
  %v413 = vunpack.c.h.b16 %v64
  %v414 = vunpack.c.l.b16 %v65
  %v415 = vunpack.c.h.b16 %v65
  %v416 = vunpack.c.l.b16 %v66
  %v417 = vunpack.c.h.b16 %v66
  %v418 = vunpack.c.l.b16 %v67
  %v419 = vunpack.c.l.b16 %v68
  %v420 = vunpack.c.h.b16 %v68
  %v421 = vunpack.c.l.b16 %v69
  %v422 = vunpack.c.h.b16 %v69
  %v423 = vunpack.c.l.b16 %v70
  %v424 = vunpack.c.h.b16 %v70
  %v425 = vunpack.c.l.b16 %v71
  %v426 = vunpack.c.h.b16 %v71
  %v427 = vunpack.c.l.b16 %v72
  %v428 = vunpack.c.l.b16 %v73
  %v429 = vunpack.c.h.b16 %v73
  %v430 = vunpack.c.l.b16 %v74
  %v431 = vunpack.c.h.b16 %v74
  %v432 = vunpack.c.l.b16 %v75
  %v433 = vunpack.c.h.b16 %v75
  %v434 = vunpack.c.l.b16 %v76
  %v435 = vunpack.c.h.b16 %v76
  %v436 = vunpack.c.l.b16 %v77
  %v437 = vunpack.c.l.b16 %v78
  %v438 = vunpack.c.h.b16 %v78
  %v439 = vunpack.c.l.b16 %v79
  %v440 = vunpack.c.h.b16 %v79
  %v441 = vunpack.c.l.b16 %v80
  %v442 = vunpack.c.h.b16 %v80
  %v443 = vunpack.c.l.b16 %v81
  %v444 = vunpack.c.h.b16 %v81
  %v445 = vunpack.c.l.b16 %v82
  %v446 = vunpack.c.l.b16 %v83
  %v447 = vunpack.c.h.b16 %v83
  %v448 = vunpack.c.l.b16 %v84
  %v449 = vunpack.c.h.b16 %v84
  %v450 = vunpack.c.l.b16 %v85
  %v451 = vunpack.c.h.b16 %v85
  %v452 = vunpack.c.l.b16 %v86
  %v453 = vunpack.c.h.b16 %v86
  %v454 = vunpack.c.l.b16 %v87
  %v455 = vunpack.c.l.b16 %v88
  %v456 = vunpack.c.h.b16 %v88
  %v457 = vunpack.c.l.b16 %v89
  %v458 = vunpack.c.h.b16 %v89
  %v459 = vunpack.c.l.b16 %v90
  %v460 = vunpack.c.h.b16 %v90
  %v461 = vunpack.c.l.b16 %v91
  %v462 = vunpack.c.h.b16 %v91
  %v463 = vunpack.c.l.b16 %v92
  %v464 = vunpack.c.l.b16 %v93
  %v465 = vunpack.c.h.b16 %v93
  %v466 = vunpack.c.l.b16 %v94
  %v467 = vunpack.c.h.b16 %v94
  %v468 = vunpack.c.l.b16 %v95
  %v469 = vunpack.c.h.b16 %v95
  %v470 = vunpack.c.l.b16 %v96
  %v471 = vunpack.c.h.b16 %v96
  %v472 = vunpack.c.l.b16 %v97
  %v473 = vpack.c.b16 %v338, %v329
  %v474 = vpack.c.b16 %v339, %v330
  %v475 = vpack.c.b16 %v340, %v331
  %v476 = vpack.c.b16 %v341, %v332
  %v477 = vpack.c.b16 %v342, %v333
  %v478 = vpack.c.b16 %v343, %v334
  %v479 = vpack.c.b16 %v344, %v335
  %v480 = vpack.c.b16 %v345, %v336
  %v481 = vpack.c.b16 %v346, %v337
  %v482 = vpack.c.b16 %v356, %v347
  %v483 = vpack.c.b16 %v357, %v348
  %v484 = vpack.c.b16 %v358, %v349
  %v485 = vpack.c.b16 %v359, %v350
  %v486 = vpack.c.b16 %v360, %v351
  %v487 = vpack.c.b16 %v361, %v352
  %v488 = vpack.c.b16 %v362, %v353
  %v489 = vpack.c.b16 %v363, %v354
  %v490 = vpack.c.b16 %v364, %v355
  %v491 = vpack.c.b16 %v374, %v365
  %v492 = vpack.c.b16 %v375, %v366
  %v493 = vpack.c.b16 %v376, %v367
  %v494 = vpack.c.b16 %v377, %v368
  %v495 = vpack.c.b16 %v378, %v369
  %v496 = vpack.c.b16 %v379, %v370
  %v497 = vpack.c.b16 %v380, %v371
  %v498 = vpack.c.b16 %v381, %v372
  %v499 = vpack.c.b16 %v382, %v373
  %v500 = vpack.c.b16 %v392, %v383
  %v501 = vpack.c.b16 %v393, %v384
  %v502 = vpack.c.b16 %v394, %v385
  %v503 = vpack.c.b16 %v395, %v386
  %v504 = vpack.c.b16 %v396, %v387
  %v505 = vpack.c.b16 %v397, %v388
  %v506 = vpack.c.b16 %v398, %v389
  %v507 = vpack.c.b16 %v399, %v390
  %v508 = vpack.c.b16 %v400, %v391
  %v509 = vpack.c.b16 %v410, %v401
  %v510 = vpack.c.b16 %v411, %v402
  %v511 = vpack.c.b16 %v412, %v403
  %v512 = vpack.c.b16 %v413, %v404
  %v513 = vpack.c.b16 %v414, %v405
  %v514 = vpack.c.b16 %v415, %v406
  %v515 = vpack.c.b16 %v416, %v407
  %v516 = vpack.c.b16 %v417, %v408
  %v517 = vpack.c.b16 %v418, %v409
  %v518 = vpack.c.b16 %v428, %v419
  %v519 = vpack.c.b16 %v429, %v420
  %v520 = vpack.c.b16 %v430, %v421
  %v521 = vpack.c.b16 %v431, %v422
  %v522 = vpack.c.b16 %v432, %v423
  %v523 = vpack.c.b16 %v433, %v424
  %v524 = vpack.c.b16 %v434, %v425
  %v525 = vpack.c.b16 %v435, %v426
  %v526 = vpack.c.b16 %v436, %v427
  %v527 = vpack.c.b16 %v446, %v437
  %v528 = vpack.c.b16 %v447, %v438
  %v529 = vpack.c.b16 %v448, %v439
  %v530 = vpack.c.b16 %v449, %v440
  %v531 = vpack.c.b16 %v450, %v441
  %v532 = vpack.c.b16 %v451, %v442
  %v533 = vpack.c.b16 %v452, %v443
  %v534 = vpack.c.b16 %v453, %v444
  %v535 = vpack.c.b16 %v454, %v445
  %v536 = vpack.c.b16 %v464, %v455
  %v537 = vpack.c.b16 %v465, %v456
  %v538 = vpack.c.b16 %v466, %v457
  %v539 = vpack.c.b16 %v467, %v458
  %v540 = vpack.c.b16 %v468, %v459
  %v541 = vpack.c.b16 %v469, %v460
  %v542 = vpack.c.b16 %v470, %v461
  %v543 = vpack.c.b16 %v471, %v462
  %v544 = vpack.c.b16 %v472, %v463
  %v761 = vunpack.c.l.b16 %v98
  %v762 = vunpack.c.l.b16 %v99
  %v763 = vunpack.c.l.b16 %v100
  %v764 = vunpack.c.l.b16 %v101
  %v765 = vunpack.c.l.b16 %v102
  %v766 = vunpack.c.l.b16 %v103
  %v767 = vunpack.c.l.b16 %v104
  %v768 = vunpack.c.l.b16 %v105
  %v769 = vunpack.c.l.b16 %v106
  %v770 = vunpack.c.l.b16 %v107
  %v771 = vunpack.c.l.b16 %v108
  %v772 = vunpack.c.l.b16 %v109
  %v773 = vunpack.c.l.b16 %v110
  %v774 = vunpack.c.l.b16 %v111
  %v775 = vunpack.c.l.b16 %v112
  %v776 = vunpack.c.l.b16 %v113
  %v777 = vunpack.c.l.b16 %v114
  %v778 = vunpack.c.l.b16 %v115
  %v779 = vunpack.c.l.b16 %v116
  %v780 = vunpack.c.l.b16 %v117
  %v781 = vunpack.c.l.b16 %v118
  %v782 = vunpack.c.l.b16 %v119
  %v783 = vunpack.c.l.b16 %v120
  %v784 = vunpack.c.l.b16 %v121
  %v785 = vunpack.c.l.b16 %v122
  %v786 = vunpack.c.l.b16 %v123
  %v787 = vunpack.c.l.b16 %v124
  %v788 = vunpack.c.l.b16 %v125
  %v789 = vunpack.c.l.b16 %v126
  %v790 = vunpack.c.l.b16 %v127
  %v791 = vunpack.c.l.b16 %v128
  %v792 = vunpack.c.l.b16 %v129
  %v793 = vunpack.c.l.b16 %v130
  %v794 = vunpack.c.l.b16 %v131
  %v795 = vunpack.c.l.b16 %v132
  %v796 = vunpack.c.l.b16 %v133
  %v797 = vunpack.c.l.b16 %v134
  %v798 = vunpack.c.l.b16 %v135
  %v799 = vunpack.c.l.b16 %v136
  %v800 = vunpack.c.l.b16 %v137
  %v801 = vunpack.c.l.b16 %v138
  %v802 = vunpack.c.l.b16 %v139
  %v803 = vunpack.c.l.b16 %v140
  %v804 = vunpack.c.l.b16 %v141
  %v805 = vunpack.c.l.b16 %v142
  %v806 = vunpack.c.l.b16 %v143
  %v807 = vunpack.c.l.b16 %v144
  %v808 = vunpack.c.l.b16 %v145
  %v809 = vunpack.c.l.b16 %v146
  %v810 = vunpack.c.l.b16 %v147
  %v811 = vunpack.c.l.b16 %v148
  %v812 = vunpack.c.l.b16 %v149
  %v813 = vunpack.c.l.b16 %v150
  %v814 = vunpack.c.l.b16 %v151
  %v815 = vunpack.c.l.b16 %v152
  %v816 = vunpack.c.l.b16 %v153
  %v817 = vunpack.c.l.b16 %v154
  %v818 = vunpack.c.l.b16 %v155
  %v819 = vunpack.c.l.b16 %v156
  %v820 = vunpack.c.l.b16 %v157
  %v821 = vunpack.c.l.b16 %v158
  %v822 = vunpack.c.l.b16 %v159
  %v823 = vunpack.c.l.b16 %v160
  %v824 = vunpack.c.l.b16 %v161
  %v825 = vunpack.c.l.b16 %v162
  %v826 = vunpack.c.l.b16 %v163
  %v827 = vunpack.c.l.b16 %v164
  %v828 = vunpack.c.l.b16 %v165
  %v829 = vunpack.c.l.b16 %v166
  %v830 = vunpack.c.l.b16 %v167
  %v831 = vunpack.c.l.b16 %v168
  %v832 = vunpack.c.l.b16 %v169
  %v833 = vunpack.c.l.b16 %v170
  %v834 = vunpack.c.l.b16 %v171
  %v835 = vunpack.c.l.b16 %v172
  %v836 = vunpack.c.l.b16 %v173
  %v837 = vunpack.c.l.b16 %v174
  %v838 = vunpack.c.l.b16 %v175
  %v839 = vunpack.c.l.b16 %v176
  %v840 = vunpack.c.l.b16 %v177
  %v841 = vunpack.c.l.b16 %v178
  %v842 = vunpack.c.l.b16 %v179
  %v843 = vunpack.c.l.b16 %v180
  %v844 = vunpack.c.l.b16 %v181
  %v845 = vunpack.c.l.b16 %v182
  %v846 = vunpack.c.l.b16 %v183
  %v847 = vunpack.c.l.b16 %v184
  %v848 = vunpack.c.l.b16 %v185
  %v849 = vunpack.c.l.b16 %v186
  %v850 = vunpack.c.l.b16 %v187
  %v851 = vunpack.c.l.b16 %v188
  %v852 = vunpack.c.l.b16 %v189
  %v853 = vunpack.c.l.b16 %v190
  %v854 = vunpack.c.l.b16 %v191
  %v855 = vunpack.c.l.b16 %v192
  %v856 = vunpack.c.l.b16 %v193
  %v857 = vunpack.c.l.b16 %v194
  %v858 = vunpack.c.l.b16 %v195
  %v859 = vunpack.c.l.b16 %v196
  %v860 = vunpack.c.l.b16 %v197
  %v861 = vunpack.c.l.b16 %v198
  %v862 = vunpack.c.l.b16 %v199
  %v863 = vunpack.c.l.b16 %v200
  %v864 = vunpack.c.l.b16 %v201
  %v865 = vunpack.c.l.b16 %v202
  %v866 = vunpack.c.l.b16 %v203
  %v867 = vunpack.c.l.b16 %v204
  %v868 = vunpack.c.l.b16 %v205
  %v869 = vunpack.c.l.b16 %v206
  %v870 = vunpack.c.l.b16 %v207
  %v871 = vunpack.c.l.b16 %v208
  %v872 = vunpack.c.l.b16 %v209
  %v873 = vunpack.c.l.b16 %v210
  %v874 = vunpack.c.l.b16 %v211
  %v875 = vunpack.c.l.b16 %v212
  %v876 = vunpack.c.l.b16 %v213
  %v877 = vunpack.c.l.b16 %v214
  %v878 = vunpack.c.l.b16 %v215
  %v879 = vunpack.c.l.b16 %v216
  %v880 = vunpack.c.l.b16 %v217
  %v881 = vunpack.c.l.b16 %v218
  %v882 = vunpack.c.l.b16 %v219
  %v883 = vunpack.c.l.b16 %v220
  %v884 = vunpack.c.l.b16 %v221
  %v885 = vunpack.c.l.b16 %v222
  %v886 = vunpack.c.l.b16 %v223
  %v887 = vunpack.c.l.b16 %v224
  %v888 = vunpack.c.l.b16 %v225
  %v889 = vunpack.c.l.b16 %v226
  %v890 = vunpack.c.l.b16 %v227
  %v891 = vunpack.c.l.b16 %v228
  %v892 = vunpack.c.l.b16 %v229
  %v893 = vunpack.c.l.b16 %v230
  %v894 = vunpack.c.l.b16 %v231
  %v895 = vunpack.c.l.b16 %v232
  %v896 = vunpack.c.l.b16 %v233
  %v897 = vunpack.c.l.b16 %v234
  %v898 = vunpack.c.l.b16 %v235
  %v899 = vunpack.c.l.b16 %v236
  %v900 = vunpack.c.l.b16 %v237
  %v901 = vunpack.c.l.b16 %v238
  %v902 = vunpack.c.l.b16 %v239
  %v903 = vunpack.c.l.b16 %v240
  %v904 = vunpack.c.l.b16 %v241
  %v905 = vpack.c.b16 %v762, %v761
  %v906 = vpack.c.b16 %v764, %v763
  %v907 = vpack.c.b16 %v766, %v765
  %v908 = vpack.c.b16 %v768, %v767
  %v909 = vpack.c.b16 %v770, %v769
  %v910 = vpack.c.b16 %v772, %v771
  %v911 = vpack.c.b16 %v774, %v773
  %v912 = vpack.c.b16 %v776, %v775
  %v913 = vpack.c.b16 %v778, %v777
  %v914 = vpack.c.b16 %v780, %v779
  %v915 = vpack.c.b16 %v782, %v781
  %v916 = vpack.c.b16 %v784, %v783
  %v917 = vpack.c.b16 %v786, %v785
  %v918 = vpack.c.b16 %v788, %v787
  %v919 = vpack.c.b16 %v790, %v789
  %v920 = vpack.c.b16 %v792, %v791
  %v921 = vpack.c.b16 %v794, %v793
  %v922 = vpack.c.b16 %v796, %v795
  %v923 = vpack.c.b16 %v798, %v797
  %v924 = vpack.c.b16 %v800, %v799
  %v925 = vpack.c.b16 %v802, %v801
  %v926 = vpack.c.b16 %v804, %v803
  %v927 = vpack.c.b16 %v806, %v805
  %v928 = vpack.c.b16 %v808, %v807
  %v929 = vpack.c.b16 %v810, %v809
  %v930 = vpack.c.b16 %v812, %v811
  %v931 = vpack.c.b16 %v814, %v813
  %v932 = vpack.c.b16 %v816, %v815
  %v933 = vpack.c.b16 %v818, %v817
  %v934 = vpack.c.b16 %v820, %v819
  %v935 = vpack.c.b16 %v822, %v821
  %v936 = vpack.c.b16 %v824, %v823
  %v937 = vpack.c.b16 %v826, %v825
  %v938 = vpack.c.b16 %v828, %v827
  %v939 = vpack.c.b16 %v830, %v829
  %v940 = vpack.c.b16 %v832, %v831
  %v941 = vpack.c.b16 %v834, %v833
  %v942 = vpack.c.b16 %v836, %v835
  %v943 = vpack.c.b16 %v838, %v837
  %v944 = vpack.c.b16 %v840, %v839
  %v945 = vpack.c.b16 %v842, %v841
  %v946 = vpack.c.b16 %v844, %v843
  %v947 = vpack.c.b16 %v846, %v845
  %v948 = vpack.c.b16 %v848, %v847
  %v949 = vpack.c.b16 %v850, %v849
  %v950 = vpack.c.b16 %v852, %v851
  %v951 = vpack.c.b16 %v854, %v853
  %v952 = vpack.c.b16 %v856, %v855
  %v953 = vpack.c.b16 %v858, %v857
  %v954 = vpack.c.b16 %v860, %v859
  %v955 = vpack.c.b16 %v862, %v861
  %v956 = vpack.c.b16 %v864, %v863
  %v957 = vpack.c.b16 %v866, %v865
  %v958 = vpack.c.b16 %v868, %v867
  %v959 = vpack.c.b16 %v870, %v869
  %v960 = vpack.c.b16 %v872, %v871
  %v961 = vpack.c.b16 %v874, %v873
  %v962 = vpack.c.b16 %v876, %v875
  %v963 = vpack.c.b16 %v878, %v877
  %v964 = vpack.c.b16 %v880, %v879
  %v965 = vpack.c.b16 %v882, %v881
  %v966 = vpack.c.b16 %v884, %v883
  %v967 = vpack.c.b16 %v886, %v885
  %v968 = vpack.c.b16 %v888, %v887
  %v969 = vpack.c.b16 %v890, %v889
  %v970 = vpack.c.b16 %v892, %v891
  %v971 = vpack.c.b16 %v894, %v893
  %v972 = vpack.c.b16 %v896, %v895
  %v973 = vpack.c.b16 %v898, %v897
  %v974 = vpack.c.b16 %v900, %v899
  %v975 = vpack.c.b16 %v902, %v901
  %v976 = vpack.c.b16 %v904, %v903
  %1049 = vmatprep.subr.bf16.mxu0 0
  %1050 = vmatpush1.bf16.msra.mxu0 %v905
  %1051 = vmatprep.subr.bf16.mxu0 0
  %1052 = vmatpush1.bf16.msra.mxu0 %v906
  %1053 = vmatprep.subr.bf16.mxu0 0
  %1054 = vmatpush1.bf16.msra.mxu0 %v907
  %1055 = vmatprep.subr.bf16.mxu0 0
  %1056 = vmatpush1.bf16.msra.mxu0 %v908
  %1057 = vmatprep.subr.bf16.mxu0 0
  %1058 = vmatpush1.bf16.msra.mxu0 %v909
  %1059 = vmatprep.subr.bf16.mxu0 0
  %1060 = vmatpush1.bf16.msra.mxu0 %v910
  %1061 = vmatprep.subr.bf16.mxu0 0
  %1062 = vmatpush1.bf16.msra.mxu0 %v911
  %1063 = vmatprep.subr.bf16.mxu0 0
  %1064 = vmatpush1.bf16.msra.mxu0 %v912
  %1065 = vmatprep.subr.bf16.mxu0 0
  %1066 = vmatpush1.bf16.msra.mxu0 %v913
  %1067 = vmatprep.subr.bf16.mxu0 0
  %1068 = vmatpush1.bf16.msra.mxu0 %v914
  %1069 = vmatprep.subr.bf16.mxu0 0
  %1070 = vmatpush1.bf16.msra.mxu0 %v915
  %1071 = vmatprep.subr.bf16.mxu0 0
  %1072 = vmatpush1.bf16.msra.mxu0 %v916
  %1073 = vmatprep.subr.bf16.mxu0 0
  %1074 = vmatpush1.bf16.msra.mxu0 %v917
  %1075 = vmatprep.subr.bf16.mxu0 0
  %1076 = vmatpush1.bf16.msra.mxu0 %v918
  %1077 = vmatprep.subr.bf16.mxu0 0
  %1078 = vmatpush1.bf16.msra.mxu0 %v919
  %1079 = vmatprep.subr.bf16.mxu0 0
  %1080 = vmatpush1.bf16.msra.mxu0 %v920
  %1081 = vmatprep.mubr.bf16.mxu0 %v474
  %1082 = vmatmul.mubr.bf16.gmra.mrb[0].mxu0 %v473
  %v1083 = vpop.f32.mrb[0].mxu0
  %v1084 = vadd.f32 %v247, %v1083
  %v1085 = vpop.f32.mrb[0].mxu0
  %v1086 = vpop.f32.mrb[0].mxu0
  %v1087 = vadd.f32 %v247, %v1086
  %v1088 = vpop.f32.mrb[0].mxu0
  %1089 = vmatprep.mubr.bf16.mxu0 %v483
  %1090 = vmatmul.mubr.bf16.gmra.mrb[0].mxu0 %v482
  %v1091 = vpop.f32.mrb[0].mxu0
  %v1092 = vadd.f32 %v247, %v1091
  %v1093 = vpop.f32.mrb[0].mxu0
  %v1094 = vpop.f32.mrb[0].mxu0
  %v1095 = vadd.f32 %v247, %v1094
  %v1096 = vpop.f32.mrb[0].mxu0
  %1097 = vmatprep.mubr.bf16.mxu0 %v492
  %1098 = vmatmul.mubr.bf16.gmra.mrb[0].mxu0 %v491
  %v1099 = vpop.f32.mrb[0].mxu0
  %v1100 = vadd.f32 %v247, %v1099
  %v1101 = vpop.f32.mrb[0].mxu0
  %v1102 = vpop.f32.mrb[0].mxu0
  %v1103 = vadd.f32 %v247, %v1102
  %v1104 = vpop.f32.mrb[0].mxu0
  %1105 = vmatprep.mubr.bf16.mxu0 %v501
  %1106 = vmatmul.mubr.bf16.gmra.mrb[0].mxu0 %v500
  %v1107 = vpop.f32.mrb[0].mxu0
  %v1108 = vadd.f32 %v247, %v1107
  %v1109 = vpop.f32.mrb[0].mxu0
  %v1110 = vpop.f32.mrb[0].mxu0
  %v1111 = vadd.f32 %v247, %v1110
  %v1112 = vpop.f32.mrb[0].mxu0
  %1113 = vmatprep.mubr.bf16.mxu0 %v510
  %1114 = vmatmul.mubr.bf16.gmra.mrb[0].mxu0 %v509
  %v1115 = vpop.f32.mrb[0].mxu0
  %v1116 = vadd.f32 %v247, %v1115
  %v1117 = vpop.f32.mrb[0].mxu0
  %v1118 = vpop.f32.mrb[0].mxu0
  %v1119 = vadd.f32 %v247, %v1118
  %v1120 = vpop.f32.mrb[0].mxu0
  %1121 = vmatprep.mubr.bf16.mxu0 %v519
  %1122 = vmatmul.mubr.bf16.gmra.mrb[0].mxu0 %v518
  %v1123 = vpop.f32.mrb[0].mxu0
  %v1124 = vadd.f32 %v247, %v1123
  %v1125 = vpop.f32.mrb[0].mxu0
  %v1126 = vpop.f32.mrb[0].mxu0
  %v1127 = vadd.f32 %v247, %v1126
  %v1128 = vpop.f32.mrb[0].mxu0
  %1129 = vmatprep.mubr.bf16.mxu0 %v528
  %1130 = vmatmul.mubr.bf16.gmra.mrb[0].mxu0 %v527
  %v1131 = vpop.f32.mrb[0].mxu0
  %v1132 = vadd.f32 %v247, %v1131
  %v1133 = vpop.f32.mrb[0].mxu0
  %v1134 = vpop.f32.mrb[0].mxu0
  %v1135 = vadd.f32 %v247, %v1134
  %v1136 = vpop.f32.mrb[0].mxu0
  %1137 = vmatprep.mubr.bf16.mxu0 %v537
  %1138 = vmatmul.mubr.bf16.gmra.mrb[0].mxu0 %v536
  %v1139 = vpop.f32.mrb[0].mxu0
  %v1140 = vadd.f32 %v247, %v1139
  %v1141 = vpop.f32.mrb[0].mxu0
  %v1142 = vpop.f32.mrb[0].mxu0
  %v1143 = vadd.f32 %v247, %v1142
  %v1144 = vpop.f32.mrb[0].mxu0
  %1145 = vdwg.mxu0
  %1146 = vmatprep.subr.bf16.mxu0 0
  %1147 = vmatpush1.bf16.msra.mxu0 %v921
  %1148 = vmatprep.subr.bf16.mxu0 0
  %1149 = vmatpush1.bf16.msra.mxu0 %v922
  %1150 = vmatprep.subr.bf16.mxu0 0
  %1151 = vmatpush1.bf16.msra.mxu0 %v923
  %1152 = vmatprep.subr.bf16.mxu0 0
  %1153 = vmatpush1.bf16.msra.mxu0 %v924
  %1154 = vmatprep.subr.bf16.mxu0 0
  %1155 = vmatpush1.bf16.msra.mxu0 %v925
  %1156 = vmatprep.subr.bf16.mxu0 0
  %1157 = vmatpush1.bf16.msra.mxu0 %v926
  %1158 = vmatprep.subr.bf16.mxu0 0
  %1159 = vmatpush1.bf16.msra.mxu0 %v927
  %1160 = vmatprep.subr.bf16.mxu0 0
  %1161 = vmatpush1.bf16.msra.mxu0 %v928
  %1162 = vmatprep.subr.bf16.mxu0 0
  %1163 = vmatpush1.bf16.msra.mxu0 %v929
  %1164 = vmatprep.subr.bf16.mxu0 0
  %1165 = vmatpush1.bf16.msra.mxu0 %v930
  %1166 = vmatprep.subr.bf16.mxu0 0
  %1167 = vmatpush1.bf16.msra.mxu0 %v931
  %1168 = vmatprep.subr.bf16.mxu0 0
  %1169 = vmatpush1.bf16.msra.mxu0 %v932
  %1170 = vmatprep.subr.bf16.mxu0 0
  %1171 = vmatpush1.bf16.msra.mxu0 %v933
  %1172 = vmatprep.subr.bf16.mxu0 0
  %1173 = vmatpush1.bf16.msra.mxu0 %v934
  %1174 = vmatprep.subr.bf16.mxu0 0
  %1175 = vmatpush1.bf16.msra.mxu0 %v935
  %1176 = vmatprep.subr.bf16.mxu0 0
  %1177 = vmatpush1.bf16.msra.mxu0 %v936
  %1178 = vmatprep.mubr.bf16.mxu0 %v476
  %1179 = vmatmul.mubr.bf16.gmra.mrb[0].mxu0 %v475
  %v1180 = vpop.f32.mrb[0].mxu0
  %v1181 = vadd.f32 %v1084, %v1180
  %v1182 = vpop.f32.mrb[0].mxu0
  %v1183 = vpop.f32.mrb[0].mxu0
  %v1184 = vadd.f32 %v1087, %v1183
  %v1185 = vpop.f32.mrb[0].mxu0
  %1186 = vmatprep.mubr.bf16.mxu0 %v485
  %1187 = vmatmul.mubr.bf16.gmra.mrb[0].mxu0 %v484
  %v1188 = vpop.f32.mrb[0].mxu0
  %v1189 = vadd.f32 %v1092, %v1188
  %v1190 = vpop.f32.mrb[0].mxu0
  %v1191 = vpop.f32.mrb[0].mxu0
  %v1192 = vadd.f32 %v1095, %v1191
  %v1193 = vpop.f32.mrb[0].mxu0
  %1194 = vmatprep.mubr.bf16.mxu0 %v494
  %1195 = vmatmul.mubr.bf16.gmra.mrb[0].mxu0 %v493
  %v1196 = vpop.f32.mrb[0].mxu0
  %v1197 = vadd.f32 %v1100, %v1196
  %v1198 = vpop.f32.mrb[0].mxu0
  %v1199 = vpop.f32.mrb[0].mxu0
  %v1200 = vadd.f32 %v1103, %v1199
  %v1201 = vpop.f32.mrb[0].mxu0
  %1202 = vmatprep.mubr.bf16.mxu0 %v503
  %1203 = vmatmul.mubr.bf16.gmra.mrb[0].mxu0 %v502
  %v1204 = vpop.f32.mrb[0].mxu0
  %v1205 = vadd.f32 %v1108, %v1204
  %v1206 = vpop.f32.mrb[0].mxu0
  %v1207 = vpop.f32.mrb[0].mxu0
  %v1208 = vadd.f32 %v1111, %v1207
  %v1209 = vpop.f32.mrb[0].mxu0
  %1210 = vmatprep.mubr.bf16.mxu0 %v512
  %1211 = vmatmul.mubr.bf16.gmra.mrb[0].mxu0 %v511
  %v1212 = vpop.f32.mrb[0].mxu0
  %v1213 = vadd.f32 %v1116, %v1212
  %v1214 = vpop.f32.mrb[0].mxu0
  %v1215 = vpop.f32.mrb[0].mxu0
  %v1216 = vadd.f32 %v1119, %v1215
  %v1217 = vpop.f32.mrb[0].mxu0
  %1218 = vmatprep.mubr.bf16.mxu0 %v521
  %1219 = vmatmul.mubr.bf16.gmra.mrb[0].mxu0 %v520
  %v1220 = vpop.f32.mrb[0].mxu0
  %v1221 = vadd.f32 %v1124, %v1220
  %v1222 = vpop.f32.mrb[0].mxu0
  %v1223 = vpop.f32.mrb[0].mxu0
  %v1224 = vadd.f32 %v1127, %v1223
  %v1225 = vpop.f32.mrb[0].mxu0
  %1226 = vmatprep.mubr.bf16.mxu0 %v530
  %1227 = vmatmul.mubr.bf16.gmra.mrb[0].mxu0 %v529
  %v1228 = vpop.f32.mrb[0].mxu0
  %v1229 = vadd.f32 %v1132, %v1228
  %v1230 = vpop.f32.mrb[0].mxu0
  %v1231 = vpop.f32.mrb[0].mxu0
  %v1232 = vadd.f32 %v1135, %v1231
  %v1233 = vpop.f32.mrb[0].mxu0
  %1234 = vmatprep.mubr.bf16.mxu0 %v539
  %1235 = vmatmul.mubr.bf16.gmra.mrb[0].mxu0 %v538
  %v1236 = vpop.f32.mrb[0].mxu0
  %v1237 = vadd.f32 %v1140, %v1236
  %v1238 = vpop.f32.mrb[0].mxu0
  %v1239 = vpop.f32.mrb[0].mxu0
  %v1240 = vadd.f32 %v1143, %v1239
  %v1241 = vpop.f32.mrb[0].mxu0
  %1242 = vdwg.mxu0
  %1243 = vmatprep.subr.bf16.mxu0 0
  %1244 = vmatpush1.bf16.msra.mxu0 %v937
  %1245 = vmatprep.subr.bf16.mxu0 0
  %1246 = vmatpush1.bf16.msra.mxu0 %v938
  %1247 = vmatprep.subr.bf16.mxu0 0
  %1248 = vmatpush1.bf16.msra.mxu0 %v939
  %1249 = vmatprep.subr.bf16.mxu0 0
  %1250 = vmatpush1.bf16.msra.mxu0 %v940
  %1251 = vmatprep.subr.bf16.mxu0 0
  %1252 = vmatpush1.bf16.msra.mxu0 %v941
  %1253 = vmatprep.subr.bf16.mxu0 0
  %1254 = vmatpush1.bf16.msra.mxu0 %v942
  %1255 = vmatprep.subr.bf16.mxu0 0
  %1256 = vmatpush1.bf16.msra.mxu0 %v943
  %1257 = vmatprep.subr.bf16.mxu0 0
  %1258 = vmatpush1.bf16.msra.mxu0 %v944
  %1259 = vmatprep.subr.bf16.mxu0 0
  %1260 = vmatpush1.bf16.msra.mxu0 %v945
  %1261 = vmatprep.subr.bf16.mxu0 0
  %1262 = vmatpush1.bf16.msra.mxu0 %v946
  %1263 = vmatprep.subr.bf16.mxu0 0
  %1264 = vmatpush1.bf16.msra.mxu0 %v947
  %1265 = vmatprep.subr.bf16.mxu0 0
  %1266 = vmatpush1.bf16.msra.mxu0 %v948
  %1267 = vmatprep.subr.bf16.mxu0 0
  %1268 = vmatpush1.bf16.msra.mxu0 %v949
  %1269 = vmatprep.subr.bf16.mxu0 0
  %1270 = vmatpush1.bf16.msra.mxu0 %v950
  %1271 = vmatprep.subr.bf16.mxu0 0
  %1272 = vmatpush1.bf16.msra.mxu0 %v951
  %1273 = vmatprep.subr.bf16.mxu0 0
  %1274 = vmatpush1.bf16.msra.mxu0 %v952
  %1275 = vmatprep.mubr.bf16.mxu0 %v478
  %1276 = vmatmul.mubr.bf16.gmra.mrb[0].mxu0 %v477
  %v1277 = vpop.f32.mrb[0].mxu0
  %v1278 = vadd.f32 %v1181, %v1277
  %v1279 = vpop.f32.mrb[0].mxu0
  %v1280 = vpop.f32.mrb[0].mxu0
  %v1281 = vadd.f32 %v1184, %v1280
  %v1282 = vpop.f32.mrb[0].mxu0
  %1283 = vmatprep.mubr.bf16.mxu0 %v487
  %1284 = vmatmul.mubr.bf16.gmra.mrb[0].mxu0 %v486
  %v1285 = vpop.f32.mrb[0].mxu0
  %v1286 = vadd.f32 %v1189, %v1285
  %v1287 = vpop.f32.mrb[0].mxu0
  %v1288 = vpop.f32.mrb[0].mxu0
  %v1289 = vadd.f32 %v1192, %v1288
  %v1290 = vpop.f32.mrb[0].mxu0
  %1291 = vmatprep.mubr.bf16.mxu0 %v496
  %1292 = vmatmul.mubr.bf16.gmra.mrb[0].mxu0 %v495
  %v1293 = vpop.f32.mrb[0].mxu0
  %v1294 = vadd.f32 %v1197, %v1293
  %v1295 = vpop.f32.mrb[0].mxu0
  %v1296 = vpop.f32.mrb[0].mxu0
  %v1297 = vadd.f32 %v1200, %v1296
  %v1298 = vpop.f32.mrb[0].mxu0
  %1299 = vmatprep.mubr.bf16.mxu0 %v505
  %1300 = vmatmul.mubr.bf16.gmra.mrb[0].mxu0 %v504
  %v1301 = vpop.f32.mrb[0].mxu0
  %v1302 = vadd.f32 %v1205, %v1301
  %v1303 = vpop.f32.mrb[0].mxu0
  %v1304 = vpop.f32.mrb[0].mxu0
  %v1305 = vadd.f32 %v1208, %v1304
  %v1306 = vpop.f32.mrb[0].mxu0
  %1307 = vmatprep.mubr.bf16.mxu0 %v514
  %1308 = vmatmul.mubr.bf16.gmra.mrb[0].mxu0 %v513
  %v1309 = vpop.f32.mrb[0].mxu0
  %v1310 = vadd.f32 %v1213, %v1309
  %v1311 = vpop.f32.mrb[0].mxu0
  %v1312 = vpop.f32.mrb[0].mxu0
  %v1313 = vadd.f32 %v1216, %v1312
  %v1314 = vpop.f32.mrb[0].mxu0
  %1315 = vmatprep.mubr.bf16.mxu0 %v523
  %1316 = vmatmul.mubr.bf16.gmra.mrb[0].mxu0 %v522
  %v1317 = vpop.f32.mrb[0].mxu0
  %v1318 = vadd.f32 %v1221, %v1317
  %v1319 = vpop.f32.mrb[0].mxu0
  %v1320 = vpop.f32.mrb[0].mxu0
  %v1321 = vadd.f32 %v1224, %v1320
  %v1322 = vpop.f32.mrb[0].mxu0
  %1323 = vmatprep.mubr.bf16.mxu0 %v532
  %1324 = vmatmul.mubr.bf16.gmra.mrb[0].mxu0 %v531
  %v1325 = vpop.f32.mrb[0].mxu0
  %v1326 = vadd.f32 %v1229, %v1325
  %v1327 = vpop.f32.mrb[0].mxu0
  %v1328 = vpop.f32.mrb[0].mxu0
  %v1329 = vadd.f32 %v1232, %v1328
  %v1330 = vpop.f32.mrb[0].mxu0
  %1331 = vmatprep.mubr.bf16.mxu0 %v541
  %1332 = vmatmul.mubr.bf16.gmra.mrb[0].mxu0 %v540
  %v1333 = vpop.f32.mrb[0].mxu0
  %v1334 = vadd.f32 %v1237, %v1333
  %v1335 = vpop.f32.mrb[0].mxu0
  %v1336 = vpop.f32.mrb[0].mxu0
  %v1337 = vadd.f32 %v1240, %v1336
  %v1338 = vpop.f32.mrb[0].mxu0
  %1339 = vdwg.mxu0
  %1340 = vmatprep.subr.bf16.mxu0 0
  %1341 = vmatpush1.bf16.msra.mxu0 %v953
  %1342 = vmatprep.subr.bf16.mxu0 0
  %1343 = vmatpush1.bf16.msra.mxu0 %v954
  %1344 = vmatprep.subr.bf16.mxu0 0
  %1345 = vmatpush1.bf16.msra.mxu0 %v955
  %1346 = vmatprep.subr.bf16.mxu0 0
  %1347 = vmatpush1.bf16.msra.mxu0 %v956
  %1348 = vmatprep.subr.bf16.mxu0 0
  %1349 = vmatpush1.bf16.msra.mxu0 %v957
  %1350 = vmatprep.subr.bf16.mxu0 0
  %1351 = vmatpush1.bf16.msra.mxu0 %v958
  %1352 = vmatprep.subr.bf16.mxu0 0
  %1353 = vmatpush1.bf16.msra.mxu0 %v959
  %1354 = vmatprep.subr.bf16.mxu0 0
  %1355 = vmatpush1.bf16.msra.mxu0 %v960
  %1356 = vmatprep.subr.bf16.mxu0 0
  %1357 = vmatpush1.bf16.msra.mxu0 %v961
  %1358 = vmatprep.subr.bf16.mxu0 0
  %1359 = vmatpush1.bf16.msra.mxu0 %v962
  %1360 = vmatprep.subr.bf16.mxu0 0
  %1361 = vmatpush1.bf16.msra.mxu0 %v963
  %1362 = vmatprep.subr.bf16.mxu0 0
  %1363 = vmatpush1.bf16.msra.mxu0 %v964
  %1364 = vmatprep.subr.bf16.mxu0 0
  %1365 = vmatpush1.bf16.msra.mxu0 %v965
  %1366 = vmatprep.subr.bf16.mxu0 0
  %1367 = vmatpush1.bf16.msra.mxu0 %v966
  %1368 = vmatprep.subr.bf16.mxu0 0
  %1369 = vmatpush1.bf16.msra.mxu0 %v967
  %1370 = vmatprep.subr.bf16.mxu0 0
  %1371 = vmatpush1.bf16.msra.mxu0 %v968
  %1372 = vmatprep.mubr.bf16.mxu0 %v480
  %1373 = vmatmul.mubr.bf16.gmra.mrb[0].mxu0 %v479
  %v1374 = vpop.f32.mrb[0].mxu0
  %v1375 = vadd.f32 %v1278, %v1374
  %v1376 = vpop.f32.mrb[0].mxu0
  %v1377 = vpop.f32.mrb[0].mxu0
  %v1378 = vadd.f32 %v1281, %v1377
  %v1379 = vpop.f32.mrb[0].mxu0
  %1380 = vmatprep.mubr.bf16.mxu0 %v489
  %1381 = vmatmul.mubr.bf16.gmra.mrb[0].mxu0 %v488
  %v1382 = vpop.f32.mrb[0].mxu0
  %v1383 = vadd.f32 %v1286, %v1382
  %v1384 = vpop.f32.mrb[0].mxu0
  %v1385 = vpop.f32.mrb[0].mxu0
  %v1386 = vadd.f32 %v1289, %v1385
  %v1387 = vpop.f32.mrb[0].mxu0
  %1388 = vmatprep.mubr.bf16.mxu0 %v498
  %1389 = vmatmul.mubr.bf16.gmra.mrb[0].mxu0 %v497
  %v1390 = vpop.f32.mrb[0].mxu0
  %v1391 = vadd.f32 %v1294, %v1390
  %v1392 = vpop.f32.mrb[0].mxu0
  %v1393 = vpop.f32.mrb[0].mxu0
  %v1394 = vadd.f32 %v1297, %v1393
  %v1395 = vpop.f32.mrb[0].mxu0
  %1396 = vmatprep.mubr.bf16.mxu0 %v507
  %1397 = vmatmul.mubr.bf16.gmra.mrb[0].mxu0 %v506
  %v1398 = vpop.f32.mrb[0].mxu0
  %v1399 = vadd.f32 %v1302, %v1398
  %v1400 = vpop.f32.mrb[0].mxu0
  %v1401 = vpop.f32.mrb[0].mxu0
  %v1402 = vadd.f32 %v1305, %v1401
  %v1403 = vpop.f32.mrb[0].mxu0
  %1404 = vmatprep.mubr.bf16.mxu0 %v516
  %1405 = vmatmul.mubr.bf16.gmra.mrb[0].mxu0 %v515
  %v1406 = vpop.f32.mrb[0].mxu0
  %v1407 = vadd.f32 %v1310, %v1406
  %v1408 = vpop.f32.mrb[0].mxu0
  %v1409 = vpop.f32.mrb[0].mxu0
  %v1410 = vadd.f32 %v1313, %v1409
  %v1411 = vpop.f32.mrb[0].mxu0
  %1412 = vmatprep.mubr.bf16.mxu0 %v525
  %1413 = vmatmul.mubr.bf16.gmra.mrb[0].mxu0 %v524
  %v1414 = vpop.f32.mrb[0].mxu0
  %v1415 = vadd.f32 %v1318, %v1414
  %v1416 = vpop.f32.mrb[0].mxu0
  %v1417 = vpop.f32.mrb[0].mxu0
  %v1418 = vadd.f32 %v1321, %v1417
  %v1419 = vpop.f32.mrb[0].mxu0
  %1420 = vmatprep.mubr.bf16.mxu0 %v534
  %1421 = vmatmul.mubr.bf16.gmra.mrb[0].mxu0 %v533
  %v1422 = vpop.f32.mrb[0].mxu0
  %v1423 = vadd.f32 %v1326, %v1422
  %v1424 = vpop.f32.mrb[0].mxu0
  %v1425 = vpop.f32.mrb[0].mxu0
  %v1426 = vadd.f32 %v1329, %v1425
  %v1427 = vpop.f32.mrb[0].mxu0
  %1428 = vmatprep.mubr.bf16.mxu0 %v543
  %1429 = vmatmul.mubr.bf16.gmra.mrb[0].mxu0 %v542
  %v1430 = vpop.f32.mrb[0].mxu0
  %v1431 = vadd.f32 %v1334, %v1430
  %v1432 = vpop.f32.mrb[0].mxu0
  %v1433 = vpop.f32.mrb[0].mxu0
  %v1434 = vadd.f32 %v1337, %v1433
  %v1435 = vpop.f32.mrb[0].mxu0
  %1436 = vdwg.mxu0
  %1437 = vmatprep.subr.bf16.mxu0 0
  %1438 = vmatpush1.bf16.msra.mxu0 %v969
  %1439 = vmatprep.subr.bf16.mxu0 0
  %1440 = vmatpush1.bf16.msra.mxu0 %v970
  %1441 = vmatprep.subr.bf16.mxu0 0
  %1442 = vmatpush1.bf16.msra.mxu0 %v971
  %1443 = vmatprep.subr.bf16.mxu0 0
  %1444 = vmatpush1.bf16.msra.mxu0 %v972
  %1445 = vmatprep.subr.bf16.mxu0 0
  %1446 = vmatpush1.bf16.msra.mxu0 %v973
  %1447 = vmatprep.subr.bf16.mxu0 0
  %1448 = vmatpush1.bf16.msra.mxu0 %v974
  %1449 = vmatprep.subr.bf16.mxu0 0
  %1450 = vmatpush1.bf16.msra.mxu0 %v975
  %1451 = vmatprep.subr.bf16.mxu0 0
  %1452 = vmatpush1.bf16.msra.mxu0 %v976
  %1453 = vmatprep.subr.bf16.mxu0 0
  %1454 = vmatpush1.bf16.msra.mxu0 0
  %1455 = vmatprep.subr.bf16.mxu0 0
  %1456 = vmatpush1.bf16.msra.mxu0 0
  %1457 = vmatprep.subr.bf16.mxu0 0
  %1458 = vmatpush1.bf16.msra.mxu0 0
  %1459 = vmatprep.subr.bf16.mxu0 0
  %1460 = vmatpush1.bf16.msra.mxu0 0
  %1461 = vmatprep.subr.bf16.mxu0 0
  %1462 = vmatpush1.bf16.msra.mxu0 0
  %1463 = vmatprep.subr.bf16.mxu0 0
  %1464 = vmatpush1.bf16.msra.mxu0 0
  %1465 = vmatprep.subr.bf16.mxu0 0
  %1466 = vmatpush1.bf16.msra.mxu0 0
  %1467 = vmatprep.subr.bf16.mxu0 0
  %1468 = vmatpush1.bf16.msra.mxu0 0
  %1469 = vmatprep.mubr.bf16.mxu0 0
  %1470 = vmatmul.mubr.bf16.gmra.mrb[0].mxu0 %v481
  %v1471 = vpop.f32.mrb[0].mxu0
  %v1472 = vadd.f32 %v1375, %v1471
  %v1473 = vpop.f32.mrb[0].mxu0
  %v1474 = vpop.f32.mrb[0].mxu0
  %v1475 = vadd.f32 %v1378, %v1474
  %v1476 = vpop.f32.mrb[0].mxu0
  %1477 = vmatprep.mubr.bf16.mxu0 0
  %1478 = vmatmul.mubr.bf16.gmra.mrb[0].mxu0 %v490
  %v1479 = vpop.f32.mrb[0].mxu0
  %v1480 = vadd.f32 %v1383, %v1479
  %v1481 = vpop.f32.mrb[0].mxu0
  %v1482 = vpop.f32.mrb[0].mxu0
  %v1483 = vadd.f32 %v1386, %v1482
  %v1484 = vpop.f32.mrb[0].mxu0
  %1485 = vmatprep.mubr.bf16.mxu0 0
  %1486 = vmatmul.mubr.bf16.gmra.mrb[0].mxu0 %v499
  %v1487 = vpop.f32.mrb[0].mxu0
  %v1488 = vadd.f32 %v1391, %v1487
  %v1489 = vpop.f32.mrb[0].mxu0
  %v1490 = vpop.f32.mrb[0].mxu0
  %v1491 = vadd.f32 %v1394, %v1490
  %v1492 = vpop.f32.mrb[0].mxu0
  %1493 = vmatprep.mubr.bf16.mxu0 0
  %1494 = vmatmul.mubr.bf16.gmra.mrb[0].mxu0 %v508
  %v1495 = vpop.f32.mrb[0].mxu0
  %v1496 = vadd.f32 %v1399, %v1495
  %v1497 = vpop.f32.mrb[0].mxu0
  %v1498 = vpop.f32.mrb[0].mxu0
  %v1499 = vadd.f32 %v1402, %v1498
  %v1500 = vpop.f32.mrb[0].mxu0
  %1501 = vmatprep.mubr.bf16.mxu0 0
  %1502 = vmatmul.mubr.bf16.gmra.mrb[0].mxu0 %v517
  %v1503 = vpop.f32.mrb[0].mxu0
  %v1504 = vadd.f32 %v1407, %v1503
  %v1505 = vpop.f32.mrb[0].mxu0
  %v1506 = vpop.f32.mrb[0].mxu0
  %v1507 = vadd.f32 %v1410, %v1506
  %v1508 = vpop.f32.mrb[0].mxu0
  %1509 = vmatprep.mubr.bf16.mxu0 0
  %1510 = vmatmul.mubr.bf16.gmra.mrb[0].mxu0 %v526
  %v1511 = vpop.f32.mrb[0].mxu0
  %v1512 = vadd.f32 %v1415, %v1511
  %v1513 = vpop.f32.mrb[0].mxu0
  %v1514 = vpop.f32.mrb[0].mxu0
  %v1515 = vadd.f32 %v1418, %v1514
  %v1516 = vpop.f32.mrb[0].mxu0
  %1517 = vmatprep.mubr.bf16.mxu0 0
  %1518 = vmatmul.mubr.bf16.gmra.mrb[0].mxu0 %v535
  %v1519 = vpop.f32.mrb[0].mxu0
  %v1520 = vadd.f32 %v1423, %v1519
  %v1521 = vpop.f32.mrb[0].mxu0
  %v1522 = vpop.f32.mrb[0].mxu0
  %v1523 = vadd.f32 %v1426, %v1522
  %v1524 = vpop.f32.mrb[0].mxu0
  %1525 = vmatprep.mubr.bf16.mxu0 0
  %1526 = vmatmul.mubr.bf16.gmra.mrb[0].mxu0 %v544
  %v1527 = vpop.f32.mrb[0].mxu0
  %v1528 = vadd.f32 %v1431, %v1527
  %v1529 = vpop.f32.mrb[0].mxu0
  %v1530 = vpop.f32.mrb[0].mxu0
  %v1531 = vadd.f32 %v1434, %v1530
  %v1532 = vpop.f32.mrb[0].mxu0
  %1533 = vdwg.mxu0
  %v1534 = vld [vmem:[%s3] sm:$0xff]
  %v1535 = vld [vmem:[%s3 + $0x8] sm:$0xff]
  %v1536 = vld [vmem:[%s3 + $0x10] sm:$0xff]
  %v1537 = vld [vmem:[%s3 + $0x18] sm:$0xff]
  %v1538 = vld [vmem:[%s3 + $0x20] sm:$0xff]
  %v1539 = vld [vmem:[%s3 + $0x28] sm:$0xff]
  %v1540 = vld [vmem:[%s3 + $0x30] sm:$0xff]
  %v1541 = vld [vmem:[%s3 + $0x38] sm:$0xff]
  %v1542 = vld [vmem:[%s3 + $0x40] sm:$0xff]
  %v1543 = vld [vmem:[%s3 + $0x48] sm:$0xff]
  %v1544 = vld [vmem:[%s3 + $0x50] sm:$0xff]
  %v1545 = vld [vmem:[%s3 + $0x58] sm:$0xff]
  %v1546 = vld [vmem:[%s3 + $0x60] sm:$0xff]
  %v1547 = vld [vmem:[%s3 + $0x68] sm:$0xff]
  %v1548 = vld [vmem:[%s3 + $0x70] sm:$0xff]
  %v1549 = vld [vmem:[%s3 + $0x78] sm:$0xff]
  %v1550 = vadd.f32 %v1472, %v1534
  %v1551 = vadd.f32 %v1475, %v1535
  %v1552 = vadd.f32 %v1480, %v1536
  %v1553 = vadd.f32 %v1483, %v1537
  %v1554 = vadd.f32 %v1488, %v1538
  %v1555 = vadd.f32 %v1491, %v1539
  %v1556 = vadd.f32 %v1496, %v1540
  %v1557 = vadd.f32 %v1499, %v1541
  %v1558 = vadd.f32 %v1504, %v1542
  %v1559 = vadd.f32 %v1507, %v1543
  %v1560 = vadd.f32 %v1512, %v1544
  %v1561 = vadd.f32 %v1515, %v1545
  %v1562 = vadd.f32 %v1520, %v1546
  %v1563 = vadd.f32 %v1523, %v1547
  %v1564 = vadd.f32 %v1528, %v1548
  %v1565 = vadd.f32 %v1531, %v1549
  %1566 = vst [vmem:[%s4] sm:$0xff] %v1550
  %1567 = vst [vmem:[%s4 + $0x8] sm:$0xff] %v1551
  %1568 = vst [vmem:[%s4 + $0x10] sm:$0xff] %v1552
  %1569 = vst [vmem:[%s4 + $0x18] sm:$0xff] %v1553
  %1570 = vst [vmem:[%s4 + $0x20] sm:$0xff] %v1554
  %1571 = vst [vmem:[%s4 + $0x28] sm:$0xff] %v1555
  %1572 = vst [vmem:[%s4 + $0x30] sm:$0xff] %v1556
  %1573 = vst [vmem:[%s4 + $0x38] sm:$0xff] %v1557
  %1574 = vst [vmem:[%s4 + $0x40] sm:$0xff] %v1558
  %1575 = vst [vmem:[%s4 + $0x48] sm:$0xff] %v1559
  %1576 = vst [vmem:[%s4 + $0x50] sm:$0xff] %v1560
  %1577 = vst [vmem:[%s4 + $0x58] sm:$0xff] %v1561
  %1578 = vst [vmem:[%s4 + $0x60] sm:$0xff] %v1562
  %1579 = vst [vmem:[%s4 + $0x68] sm:$0xff] %v1563
  %1580 = vst [vmem:[%s4 + $0x70] sm:$0xff] %v1564
  %1581 = vst [vmem:[%s4 + $0x78] sm:$0xff] %v1565
  // Predicated region
  $region18: #{network_builder_forward.8} parent=0 // pred_check
    _
  $region19: #{network_builder_forward.8} parent=0 // pred_check_branch
    %1583 = sbr.rel (0) target = $region21
  $region20: #{network_builder_forward.8} parent=0 // pred_region
    _
  $region21: #{network_builder_forward.8} parent=0 // pred_fallthru
    _
  // Predicated region
  $region22: #{network_builder_forward.8} parent=0 // pred_check
    _
  $region23: #{network_builder_forward.8} parent=0 // pred_check_branch
    %1585 = sbr.rel (0) target = $region25
  $region24: #{network_builder_forward.8} parent=0 // pred_region
    _
  $region25: #{network_builder_forward.8} parent=0 // pred_fallthru
    _

// kernel: network_builder_forward.9
$region0: #{network_builder_forward.9}
  #allocation0 [shape = 'u32[]', space=smem, size = 0x4, offset = 0x4, fixed_abs, tag = 'smem constant byte address 0x4 - core index']
  #allocation1 [shape = 'u32[144,128]{1,0:T(1,128)}', space=vmem, size = 0x12000, scoped, tag = 'internal scratch']
  %s0 = inlined_call_operand.vmem [shape: bf16[2,2048], index: 0, kind: input, shape index: {}]
  %s1 = inlined_call_operand.vmem [shape: bf16[2048,64], index: 1, kind: input, shape index: {}]
  %s2 = inlined_call_operand.vmem [shape: f32[1,64], index: 2, kind: input, shape index: {}]
  %s3 = inlined_call_operand.hbm [shape: f32[2,64], index: 3, kind: output, shape index: {}]
  %s4 = sld [smem:[#allocation0]]
  $region22: #{network_builder_forward.9} parent=0
    _
  %s6 = ssub.s32 1, %s4
  %s7 = scalar_select 0, %s6, %s4
  $region1: #{network_builder_forward.9} parent=0
    #allocation2 [shape = 'u8[1024]{0}', space=vmem, size = 0x400, scoped, tag = 'output window, operand 0, single buffered']
    #allocation3 [shape = 's32[1]{0}', space=sflag, size = 0x4, scoped, tag = 'scoped memory for network_builder_forward.9']
    %8 = vsyncpa [#allocation3], 0
    // Predicated region
    $region2: #{network_builder_forward.9} parent=1 // pred_check
      _
    $region3: #{network_builder_forward.9} parent=1 // pred_check_branch
      %10 = sbr.rel (0) target = $region5
    $region4: #{network_builder_forward.9} parent=1 // pred_region
      _
    $region5: #{network_builder_forward.9} parent=1 // pred_fallthru
      _
    // Predicated region
    $region6: #{network_builder_forward.9} parent=1 // pred_check
      _
    $region7: #{network_builder_forward.9} parent=1 // pred_check_branch
      %12 = sbr.rel (0) target = $region9
    $region8: #{network_builder_forward.9} parent=1 // pred_region
      _
    $region9: #{network_builder_forward.9} parent=1 // pred_fallthru
      _
    // Predicated region
    $region10: #{network_builder_forward.9} parent=1 // pred_check
      _
    $region11: #{network_builder_forward.9} parent=1 // pred_check_branch
      %14 = sbr.rel (0) target = $region13
    $region12: #{network_builder_forward.9} parent=1 // pred_region
      _
    $region13: #{network_builder_forward.9} parent=1 // pred_fallthru
      _
    %v16 = vld [vmem:[%s0] sm:$0xff]
    %v17 = vld [vmem:[%s0 + $0x8] sm:$0xff]
    %v18 = vld [vmem:[%s1] sm:$0xf]
    %v19 = vld [vmem:[%s1 + $0x4] sm:$0xf]
    %v20 = vld [vmem:[%s1 + $0x8] sm:$0xf]
    %v21 = vld [vmem:[%s1 + $0xc] sm:$0xf]
    %v22 = vld [vmem:[%s1 + $0x10] sm:$0xf]
    %v23 = vld [vmem:[%s1 + $0x14] sm:$0xf]
    %v24 = vld [vmem:[%s1 + $0x18] sm:$0xf]
    %v25 = vld [vmem:[%s1 + $0x1c] sm:$0xf]
    %v26 = vld [vmem:[%s1 + $0x20] sm:$0xf]
    %v27 = vld [vmem:[%s1 + $0x24] sm:$0xf]
    %v28 = vld [vmem:[%s1 + $0x28] sm:$0xf]
    %v29 = vld [vmem:[%s1 + $0x2c] sm:$0xf]
    %v30 = vld [vmem:[%s1 + $0x30] sm:$0xf]
    %v31 = vld [vmem:[%s1 + $0x34] sm:$0xf]
    %v32 = vld [vmem:[%s1 + $0x38] sm:$0xf]
    %v33 = vld [vmem:[%s1 + $0x3c] sm:$0xf]
    %v34 = vld [vmem:[%s1 + $0x40] sm:$0xf]
    %v35 = vld [vmem:[%s1 + $0x44] sm:$0xf]
    %v36 = vld [vmem:[%s1 + $0x48] sm:$0xf]
    %v37 = vld [vmem:[%s1 + $0x4c] sm:$0xf]
    %v38 = vld [vmem:[%s1 + $0x50] sm:$0xf]
    %v39 = vld [vmem:[%s1 + $0x54] sm:$0xf]
    %v40 = vld [vmem:[%s1 + $0x58] sm:$0xf]
    %v41 = vld [vmem:[%s1 + $0x5c] sm:$0xf]
    %v42 = vld [vmem:[%s1 + $0x60] sm:$0xf]
    %v43 = vld [vmem:[%s1 + $0x64] sm:$0xf]
    %v44 = vld [vmem:[%s1 + $0x68] sm:$0xf]
    %v45 = vld [vmem:[%s1 + $0x6c] sm:$0xf]
    %v46 = vld [vmem:[%s1 + $0x70] sm:$0xf]
    %v47 = vld [vmem:[%s1 + $0x74] sm:$0xf]
    %v48 = vld [vmem:[%s1 + $0x78] sm:$0xf]
    %v49 = vld [vmem:[%s1 + $0x7c] sm:$0xf]
    %v50 = vld [vmem:[%s1 + $0x80] sm:$0xf]
    %v51 = vld [vmem:[%s1 + $0x84] sm:$0xf]
    %v52 = vld [vmem:[%s1 + $0x88] sm:$0xf]
    %v53 = vld [vmem:[%s1 + $0x8c] sm:$0xf]
    %v54 = vld [vmem:[%s1 + $0x90] sm:$0xf]
    %v55 = vld [vmem:[%s1 + $0x94] sm:$0xf]
    %v56 = vld [vmem:[%s1 + $0x98] sm:$0xf]
    %v57 = vld [vmem:[%s1 + $0x9c] sm:$0xf]
    %v58 = vld [vmem:[%s1 + $0xa0] sm:$0xf]
    %v59 = vld [vmem:[%s1 + $0xa4] sm:$0xf]
    %v60 = vld [vmem:[%s1 + $0xa8] sm:$0xf]
    %v61 = vld [vmem:[%s1 + $0xac] sm:$0xf]
    %v62 = vld [vmem:[%s1 + $0xb0] sm:$0xf]
    %v63 = vld [vmem:[%s1 + $0xb4] sm:$0xf]
    %v64 = vld [vmem:[%s1 + $0xb8] sm:$0xf]
    %v65 = vld [vmem:[%s1 + $0xbc] sm:$0xf]
    %v66 = vld [vmem:[%s1 + $0xc0] sm:$0xf]
    %v67 = vld [vmem:[%s1 + $0xc4] sm:$0xf]
    %v68 = vld [vmem:[%s1 + $0xc8] sm:$0xf]
    %v69 = vld [vmem:[%s1 + $0xcc] sm:$0xf]
    %v70 = vld [vmem:[%s1 + $0xd0] sm:$0xf]
    %v71 = vld [vmem:[%s1 + $0xd4] sm:$0xf]
    %v72 = vld [vmem:[%s1 + $0xd8] sm:$0xf]
    %v73 = vld [vmem:[%s1 + $0xdc] sm:$0xf]
    %v74 = vld [vmem:[%s1 + $0xe0] sm:$0xf]
    %v75 = vld [vmem:[%s1 + $0xe4] sm:$0xf]
    %v76 = vld [vmem:[%s1 + $0xe8] sm:$0xf]
    %v77 = vld [vmem:[%s1 + $0xec] sm:$0xf]
    %v78 = vld [vmem:[%s1 + $0xf0] sm:$0xf]
    %v79 = vld [vmem:[%s1 + $0xf4] sm:$0xf]
    %v80 = vld [vmem:[%s1 + $0xf8] sm:$0xf]
    %v81 = vld [vmem:[%s1 + $0xfc] sm:$0xf]
    %v82 = vld [vmem:[%s1 + $0x100] sm:$0xf]
    %v83 = vld [vmem:[%s1 + $0x104] sm:$0xf]
    %v84 = vld [vmem:[%s1 + $0x108] sm:$0xf]
    %v85 = vld [vmem:[%s1 + $0x10c] sm:$0xf]
    %v86 = vld [vmem:[%s1 + $0x110] sm:$0xf]
    %v87 = vld [vmem:[%s1 + $0x114] sm:$0xf]
    %v88 = vld [vmem:[%s1 + $0x118] sm:$0xf]
    %v89 = vld [vmem:[%s1 + $0x11c] sm:$0xf]
    %v90 = vld [vmem:[%s1 + $0x120] sm:$0xf]
    %v91 = vld [vmem:[%s1 + $0x124] sm:$0xf]
    %v92 = vld [vmem:[%s1 + $0x128] sm:$0xf]
    %v93 = vld [vmem:[%s1 + $0x12c] sm:$0xf]
    %v94 = vld [vmem:[%s1 + $0x130] sm:$0xf]
    %v95 = vld [vmem:[%s1 + $0x134] sm:$0xf]
    %v96 = vld [vmem:[%s1 + $0x138] sm:$0xf]
    %v97 = vld [vmem:[%s1 + $0x13c] sm:$0xf]
    %v98 = vld [vmem:[%s1 + $0x140] sm:$0xf]
    %v99 = vld [vmem:[%s1 + $0x144] sm:$0xf]
    %v100 = vld [vmem:[%s1 + $0x148] sm:$0xf]
    %v101 = vld [vmem:[%s1 + $0x14c] sm:$0xf]
    %v102 = vld [vmem:[%s1 + $0x150] sm:$0xf]
    %v103 = vld [vmem:[%s1 + $0x154] sm:$0xf]
    %v104 = vld [vmem:[%s1 + $0x158] sm:$0xf]
    %v105 = vld [vmem:[%s1 + $0x15c] sm:$0xf]
    %v106 = vld [vmem:[%s1 + $0x160] sm:$0xf]
    %v107 = vld [vmem:[%s1 + $0x164] sm:$0xf]
    %v108 = vld [vmem:[%s1 + $0x168] sm:$0xf]
    %v109 = vld [vmem:[%s1 + $0x16c] sm:$0xf]
    %v110 = vld [vmem:[%s1 + $0x170] sm:$0xf]
    %v111 = vld [vmem:[%s1 + $0x174] sm:$0xf]
    %v112 = vld [vmem:[%s1 + $0x178] sm:$0xf]
    %v113 = vld [vmem:[%s1 + $0x17c] sm:$0xf]
    %v114 = vld [vmem:[%s1 + $0x180] sm:$0xf]
    %v115 = vld [vmem:[%s1 + $0x184] sm:$0xf]
    %v116 = vld [vmem:[%s1 + $0x188] sm:$0xf]
    %v117 = vld [vmem:[%s1 + $0x18c] sm:$0xf]
    %v118 = vld [vmem:[%s1 + $0x190] sm:$0xf]
    %v119 = vld [vmem:[%s1 + $0x194] sm:$0xf]
    %v120 = vld [vmem:[%s1 + $0x198] sm:$0xf]
    %v121 = vld [vmem:[%s1 + $0x19c] sm:$0xf]
    %v122 = vld [vmem:[%s1 + $0x1a0] sm:$0xf]
    %v123 = vld [vmem:[%s1 + $0x1a4] sm:$0xf]
    %v124 = vld [vmem:[%s1 + $0x1a8] sm:$0xf]
    %v125 = vld [vmem:[%s1 + $0x1ac] sm:$0xf]
    %v126 = vld [vmem:[%s1 + $0x1b0] sm:$0xf]
    %v127 = vld [vmem:[%s1 + $0x1b4] sm:$0xf]
    %v128 = vld [vmem:[%s1 + $0x1b8] sm:$0xf]
    %v129 = vld [vmem:[%s1 + $0x1bc] sm:$0xf]
    %v130 = vld [vmem:[%s1 + $0x1c0] sm:$0xf]
    %v131 = vld [vmem:[%s1 + $0x1c4] sm:$0xf]
    %v132 = vld [vmem:[%s1 + $0x1c8] sm:$0xf]
    %v133 = vld [vmem:[%s1 + $0x1cc] sm:$0xf]
    %v134 = vld [vmem:[%s1 + $0x1d0] sm:$0xf]
    %v135 = vld [vmem:[%s1 + $0x1d4] sm:$0xf]
    %v136 = vld [vmem:[%s1 + $0x1d8] sm:$0xf]
    %v137 = vld [vmem:[%s1 + $0x1dc] sm:$0xf]
    %v138 = vld [vmem:[%s1 + $0x1e0] sm:$0xf]
    %v139 = vld [vmem:[%s1 + $0x1e4] sm:$0xf]
    %v140 = vld [vmem:[%s1 + $0x1e8] sm:$0xf]
    %v141 = vld [vmem:[%s1 + $0x1ec] sm:$0xf]
    %v142 = vld [vmem:[%s1 + $0x1f0] sm:$0xf]
    %v143 = vld [vmem:[%s1 + $0x1f4] sm:$0xf]
    %v144 = vld [vmem:[%s1 + $0x1f8] sm:$0xf]
    %v145 = vld [vmem:[%s1 + $0x1fc] sm:$0xf]
    %v146 = vld [vmem:[%s1 + $0x200] sm:$0xf]
    %v147 = vld [vmem:[%s1 + $0x204] sm:$0xf]
    %v148 = vld [vmem:[%s1 + $0x208] sm:$0xf]
    %v149 = vld [vmem:[%s1 + $0x20c] sm:$0xf]
    %v150 = vld [vmem:[%s1 + $0x210] sm:$0xf]
    %v151 = vld [vmem:[%s1 + $0x214] sm:$0xf]
    %v152 = vld [vmem:[%s1 + $0x218] sm:$0xf]
    %v153 = vld [vmem:[%s1 + $0x21c] sm:$0xf]
    %v154 = vld [vmem:[%s1 + $0x220] sm:$0xf]
    %v155 = vld [vmem:[%s1 + $0x224] sm:$0xf]
    %v156 = vld [vmem:[%s1 + $0x228] sm:$0xf]
    %v157 = vld [vmem:[%s1 + $0x22c] sm:$0xf]
    %v158 = vld [vmem:[%s1 + $0x230] sm:$0xf]
    %v159 = vld [vmem:[%s1 + $0x234] sm:$0xf]
    %v160 = vld [vmem:[%s1 + $0x238] sm:$0xf]
    %v161 = vld [vmem:[%s1 + $0x23c] sm:$0xf]
    %v162 = vld [vmem:[%s1 + $0x240] sm:$0xf]
    %v163 = vld [vmem:[%s1 + $0x244] sm:$0xf]
    %v164 = vld [vmem:[%s1 + $0x248] sm:$0xf]
    %v165 = vld [vmem:[%s1 + $0x24c] sm:$0xf]
    %v166 = vld [vmem:[%s1 + $0x250] sm:$0xf]
    %v167 = vld [vmem:[%s1 + $0x254] sm:$0xf]
    %v168 = vld [vmem:[%s1 + $0x258] sm:$0xf]
    %v169 = vld [vmem:[%s1 + $0x25c] sm:$0xf]
    %v170 = vld [vmem:[%s1 + $0x260] sm:$0xf]
    %v171 = vld [vmem:[%s1 + $0x264] sm:$0xf]
    %v172 = vld [vmem:[%s1 + $0x268] sm:$0xf]
    %v173 = vld [vmem:[%s1 + $0x26c] sm:$0xf]
    %v174 = vld [vmem:[%s1 + $0x270] sm:$0xf]
    %v175 = vld [vmem:[%s1 + $0x274] sm:$0xf]
    %v176 = vld [vmem:[%s1 + $0x278] sm:$0xf]
    %v177 = vld [vmem:[%s1 + $0x27c] sm:$0xf]
    %v178 = vld [vmem:[%s1 + $0x280] sm:$0xf]
    %v179 = vld [vmem:[%s1 + $0x284] sm:$0xf]
    %v180 = vld [vmem:[%s1 + $0x288] sm:$0xf]
    %v181 = vld [vmem:[%s1 + $0x28c] sm:$0xf]
    %v182 = vld [vmem:[%s1 + $0x290] sm:$0xf]
    %v183 = vld [vmem:[%s1 + $0x294] sm:$0xf]
    %v184 = vld [vmem:[%s1 + $0x298] sm:$0xf]
    %v185 = vld [vmem:[%s1 + $0x29c] sm:$0xf]
    %v186 = vld [vmem:[%s1 + $0x2a0] sm:$0xf]
    %v187 = vld [vmem:[%s1 + $0x2a4] sm:$0xf]
    %v188 = vld [vmem:[%s1 + $0x2a8] sm:$0xf]
    %v189 = vld [vmem:[%s1 + $0x2ac] sm:$0xf]
    %v190 = vld [vmem:[%s1 + $0x2b0] sm:$0xf]
    %v191 = vld [vmem:[%s1 + $0x2b4] sm:$0xf]
    %v192 = vld [vmem:[%s1 + $0x2b8] sm:$0xf]
    %v193 = vld [vmem:[%s1 + $0x2bc] sm:$0xf]
    %v194 = vld [vmem:[%s1 + $0x2c0] sm:$0xf]
    %v195 = vld [vmem:[%s1 + $0x2c4] sm:$0xf]
    %v196 = vld [vmem:[%s1 + $0x2c8] sm:$0xf]
    %v197 = vld [vmem:[%s1 + $0x2cc] sm:$0xf]
    %v198 = vld [vmem:[%s1 + $0x2d0] sm:$0xf]
    %v199 = vld [vmem:[%s1 + $0x2d4] sm:$0xf]
    %v200 = vld [vmem:[%s1 + $0x2d8] sm:$0xf]
    %v201 = vld [vmem:[%s1 + $0x2dc] sm:$0xf]
    %v202 = vld [vmem:[%s1 + $0x2e0] sm:$0xf]
    %v203 = vld [vmem:[%s1 + $0x2e4] sm:$0xf]
    %v204 = vld [vmem:[%s1 + $0x2e8] sm:$0xf]
    %v205 = vld [vmem:[%s1 + $0x2ec] sm:$0xf]
    %v206 = vld [vmem:[%s1 + $0x2f0] sm:$0xf]
    %v207 = vld [vmem:[%s1 + $0x2f4] sm:$0xf]
    %v208 = vld [vmem:[%s1 + $0x2f8] sm:$0xf]
    %v209 = vld [vmem:[%s1 + $0x2fc] sm:$0xf]
    %v210 = vld [vmem:[%s1 + $0x300] sm:$0xf]
    %v211 = vld [vmem:[%s1 + $0x304] sm:$0xf]
    %v212 = vld [vmem:[%s1 + $0x308] sm:$0xf]
    %v213 = vld [vmem:[%s1 + $0x30c] sm:$0xf]
    %v214 = vld [vmem:[%s1 + $0x310] sm:$0xf]
    %v215 = vld [vmem:[%s1 + $0x314] sm:$0xf]
    %v216 = vld [vmem:[%s1 + $0x318] sm:$0xf]
    %v217 = vld [vmem:[%s1 + $0x31c] sm:$0xf]
    %v218 = vld [vmem:[%s1 + $0x320] sm:$0xf]
    %v219 = vld [vmem:[%s1 + $0x324] sm:$0xf]
    %v220 = vld [vmem:[%s1 + $0x328] sm:$0xf]
    %v221 = vld [vmem:[%s1 + $0x32c] sm:$0xf]
    %v222 = vld [vmem:[%s1 + $0x330] sm:$0xf]
    %v223 = vld [vmem:[%s1 + $0x334] sm:$0xf]
    %v224 = vld [vmem:[%s1 + $0x338] sm:$0xf]
    %v225 = vld [vmem:[%s1 + $0x33c] sm:$0xf]
    %v226 = vld [vmem:[%s1 + $0x340] sm:$0xf]
    %v227 = vld [vmem:[%s1 + $0x344] sm:$0xf]
    %v228 = vld [vmem:[%s1 + $0x348] sm:$0xf]
    %v229 = vld [vmem:[%s1 + $0x34c] sm:$0xf]
    %v230 = vld [vmem:[%s1 + $0x350] sm:$0xf]
    %v231 = vld [vmem:[%s1 + $0x354] sm:$0xf]
    %v232 = vld [vmem:[%s1 + $0x358] sm:$0xf]
    %v233 = vld [vmem:[%s1 + $0x35c] sm:$0xf]
    %v234 = vld [vmem:[%s1 + $0x360] sm:$0xf]
    %v235 = vld [vmem:[%s1 + $0x364] sm:$0xf]
    %v236 = vld [vmem:[%s1 + $0x368] sm:$0xf]
    %v237 = vld [vmem:[%s1 + $0x36c] sm:$0xf]
    %v238 = vld [vmem:[%s1 + $0x370] sm:$0xf]
    %v239 = vld [vmem:[%s1 + $0x374] sm:$0xf]
    %v240 = vld [vmem:[%s1 + $0x378] sm:$0xf]
    %v241 = vld [vmem:[%s1 + $0x37c] sm:$0xf]
    %v242 = vld [vmem:[%s1 + $0x380] sm:$0xf]
    %v243 = vld [vmem:[%s1 + $0x384] sm:$0xf]
    %v244 = vld [vmem:[%s1 + $0x388] sm:$0xf]
    %v245 = vld [vmem:[%s1 + $0x38c] sm:$0xf]
    %v246 = vld [vmem:[%s1 + $0x390] sm:$0xf]
    %v247 = vld [vmem:[%s1 + $0x394] sm:$0xf]
    %v248 = vld [vmem:[%s1 + $0x398] sm:$0xf]
    %v249 = vld [vmem:[%s1 + $0x39c] sm:$0xf]
    %v250 = vld [vmem:[%s1 + $0x3a0] sm:$0xf]
    %v251 = vld [vmem:[%s1 + $0x3a4] sm:$0xf]
    %v252 = vld [vmem:[%s1 + $0x3a8] sm:$0xf]
    %v253 = vld [vmem:[%s1 + $0x3ac] sm:$0xf]
    %v254 = vld [vmem:[%s1 + $0x3b0] sm:$0xf]
    %v255 = vld [vmem:[%s1 + $0x3b4] sm:$0xf]
    %v256 = vld [vmem:[%s1 + $0x3b8] sm:$0xf]
    %v257 = vld [vmem:[%s1 + $0x3bc] sm:$0xf]
    %v258 = vld [vmem:[%s1 + $0x3c0] sm:$0xf]
    %v259 = vld [vmem:[%s1 + $0x3c4] sm:$0xf]
    %v260 = vld [vmem:[%s1 + $0x3c8] sm:$0xf]
    %v261 = vld [vmem:[%s1 + $0x3cc] sm:$0xf]
    %v262 = vld [vmem:[%s1 + $0x3d0] sm:$0xf]
    %v263 = vld [vmem:[%s1 + $0x3d4] sm:$0xf]
    %v264 = vld [vmem:[%s1 + $0x3d8] sm:$0xf]
    %v265 = vld [vmem:[%s1 + $0x3dc] sm:$0xf]
    %v266 = vld [vmem:[%s1 + $0x3e0] sm:$0xf]
    %v267 = vld [vmem:[%s1 + $0x3e4] sm:$0xf]
    %v268 = vld [vmem:[%s1 + $0x3e8] sm:$0xf]
    %v269 = vld [vmem:[%s1 + $0x3ec] sm:$0xf]
    %v270 = vld [vmem:[%s1 + $0x3f0] sm:$0xf]
    %v271 = vld [vmem:[%s1 + $0x3f4] sm:$0xf]
    %v272 = vld [vmem:[%s1 + $0x3f8] sm:$0xf]
    %v273 = vld [vmem:[%s1 + $0x3fc] sm:$0xf]
    %v274 = vld [vmem:[%s2] sm:$0x1]
    %v276 = vlaneseq
    %v277 = vshrl.u32 %v276, 7
    %v278 = vsub.s32 0, %v277
    %v279 = vrot.slane %v274, %v278
    %v283 = vcombine.high %v16, %v16
    %v285 = vunpack.c.l.s4 1966171168
    %v286 = vunpack.c.0.s8 %v285
    %v287 = vlaneseq
    %v288 = vshrl.u32 %v287, 7
    %v289 = vsub.s32 %v286, %v288
    %v290 = vrot.slane %v16, %v289
    %v292 = vunpack.c.l.s4 1966171168
    %v293 = vunpack.c.0.s8 %v292
    %v294 = vlaneseq
    %v295 = vshrl.u32 %v294, 7
    %v296 = vsub.s32 %v293, %v295
    %v297 = vrot.slane %v283, %v296
    %v298 = vcombine.high %v290, %v290
    %v299 = vcombine.high %v297, %v297
    %v301 = vunpack.c.l.s4 1966171168
    %v302 = vunpack.c.0.s8 %v301
    %v303 = vlaneseq
    %v304 = vshrl.u32 %v303, 7
    %v305 = vsub.s32 %v302, %v304
    %v306 = vrot.slane %v290, %v305
    %v308 = vunpack.c.l.s4 1966171168
    %v309 = vunpack.c.0.s8 %v308
    %v310 = vlaneseq
    %v311 = vshrl.u32 %v310, 7
    %v312 = vsub.s32 %v309, %v311
    %v313 = vrot.slane %v297, %v312
    %v315 = vunpack.c.l.s4 1966171168
    %v316 = vunpack.c.0.s8 %v315
    %v317 = vlaneseq
    %v318 = vshrl.u32 %v317, 7
    %v319 = vsub.s32 %v316, %v318
    %v320 = vrot.slane %v298, %v319
    %v322 = vunpack.c.l.s4 1966171168
    %v323 = vunpack.c.0.s8 %v322
    %v324 = vlaneseq
    %v325 = vshrl.u32 %v324, 7
    %v326 = vsub.s32 %v323, %v325
    %v327 = vrot.slane %v299, %v326
    %v328 = vcombine.high %v306, %v306
    %v329 = vcombine.high %v313, %v313
    %v330 = vcombine.high %v320, %v320
    %v331 = vcombine.high %v327, %v327
    %v332 = vcombine.high %v17, %v17
    %v334 = vunpack.c.l.s4 1966171168
    %v335 = vunpack.c.0.s8 %v334
    %v336 = vlaneseq
    %v337 = vshrl.u32 %v336, 7
    %v338 = vsub.s32 %v335, %v337
    %v339 = vrot.slane %v17, %v338
    %v341 = vunpack.c.l.s4 1966171168
    %v342 = vunpack.c.0.s8 %v341
    %v343 = vlaneseq
    %v344 = vshrl.u32 %v343, 7
    %v345 = vsub.s32 %v342, %v344
    %v346 = vrot.slane %v332, %v345
    %v347 = vcombine.high %v339, %v339
    %v348 = vcombine.high %v346, %v346
    %v350 = vunpack.c.l.s4 1966171168
    %v351 = vunpack.c.0.s8 %v350
    %v352 = vlaneseq
    %v353 = vshrl.u32 %v352, 7
    %v354 = vsub.s32 %v351, %v353
    %v355 = vrot.slane %v339, %v354
    %v357 = vunpack.c.l.s4 1966171168
    %v358 = vunpack.c.0.s8 %v357
    %v359 = vlaneseq
    %v360 = vshrl.u32 %v359, 7
    %v361 = vsub.s32 %v358, %v360
    %v362 = vrot.slane %v346, %v361
    %v364 = vunpack.c.l.s4 1966171168
    %v365 = vunpack.c.0.s8 %v364
    %v366 = vlaneseq
    %v367 = vshrl.u32 %v366, 7
    %v368 = vsub.s32 %v365, %v367
    %v369 = vrot.slane %v347, %v368
    %v371 = vunpack.c.l.s4 1966171168
    %v372 = vunpack.c.0.s8 %v371
    %v373 = vlaneseq
    %v374 = vshrl.u32 %v373, 7
    %v375 = vsub.s32 %v372, %v374
    %v376 = vrot.slane %v348, %v375
    %v377 = vcombine.high %v355, %v355
    %v378 = vcombine.high %v362, %v362
    %v379 = vcombine.high %v369, %v369
    %v380 = vcombine.high %v376, %v376
    %v653 = vunpack.c.l.b16 %v18
    %v654 = vunpack.c.l.b16 %v19
    %v655 = vunpack.c.l.b16 %v20
    %v656 = vunpack.c.l.b16 %v21
    %v657 = vunpack.c.l.b16 %v22
    %v658 = vunpack.c.l.b16 %v23
    %v659 = vunpack.c.l.b16 %v24
    %v660 = vunpack.c.l.b16 %v25
    %v661 = vunpack.c.l.b16 %v26
    %v662 = vunpack.c.l.b16 %v27
    %v663 = vunpack.c.l.b16 %v28
    %v664 = vunpack.c.l.b16 %v29
    %v665 = vunpack.c.l.b16 %v30
    %v666 = vunpack.c.l.b16 %v31
    %v667 = vunpack.c.l.b16 %v32
    %v668 = vunpack.c.l.b16 %v33
    %v669 = vunpack.c.l.b16 %v34
    %v670 = vunpack.c.l.b16 %v35
    %v671 = vunpack.c.l.b16 %v36
    %v672 = vunpack.c.l.b16 %v37
    %v673 = vunpack.c.l.b16 %v38
    %v674 = vunpack.c.l.b16 %v39
    %v675 = vunpack.c.l.b16 %v40
    %v676 = vunpack.c.l.b16 %v41
    %v677 = vunpack.c.l.b16 %v42
    %v678 = vunpack.c.l.b16 %v43
    %v679 = vunpack.c.l.b16 %v44
    %v680 = vunpack.c.l.b16 %v45
    %v681 = vunpack.c.l.b16 %v46
    %v682 = vunpack.c.l.b16 %v47
    %v683 = vunpack.c.l.b16 %v48
    %v684 = vunpack.c.l.b16 %v49
    %v685 = vunpack.c.l.b16 %v50
    %v686 = vunpack.c.l.b16 %v51
    %v687 = vunpack.c.l.b16 %v52
    %v688 = vunpack.c.l.b16 %v53
    %v689 = vunpack.c.l.b16 %v54
    %v690 = vunpack.c.l.b16 %v55
    %v691 = vunpack.c.l.b16 %v56
    %v692 = vunpack.c.l.b16 %v57
    %v693 = vunpack.c.l.b16 %v58
    %v694 = vunpack.c.l.b16 %v59
    %v695 = vunpack.c.l.b16 %v60
    %v696 = vunpack.c.l.b16 %v61
    %v697 = vunpack.c.l.b16 %v62
    %v698 = vunpack.c.l.b16 %v63
    %v699 = vunpack.c.l.b16 %v64
    %v700 = vunpack.c.l.b16 %v65
    %v701 = vunpack.c.l.b16 %v66
    %v702 = vunpack.c.l.b16 %v67
    %v703 = vunpack.c.l.b16 %v68
    %v704 = vunpack.c.l.b16 %v69
    %v705 = vunpack.c.l.b16 %v70
    %v706 = vunpack.c.l.b16 %v71
    %v707 = vunpack.c.l.b16 %v72
    %v708 = vunpack.c.l.b16 %v73
    %v709 = vunpack.c.l.b16 %v74
    %v710 = vunpack.c.l.b16 %v75
    %v711 = vunpack.c.l.b16 %v76
    %v712 = vunpack.c.l.b16 %v77
    %v713 = vunpack.c.l.b16 %v78
    %v714 = vunpack.c.l.b16 %v79
    %v715 = vunpack.c.l.b16 %v80
    %v716 = vunpack.c.l.b16 %v81
    %v717 = vunpack.c.l.b16 %v82
    %v718 = vunpack.c.l.b16 %v83
    %v719 = vunpack.c.l.b16 %v84
    %v720 = vunpack.c.l.b16 %v85
    %v721 = vunpack.c.l.b16 %v86
    %v722 = vunpack.c.l.b16 %v87
    %v723 = vunpack.c.l.b16 %v88
    %v724 = vunpack.c.l.b16 %v89
    %v725 = vunpack.c.l.b16 %v90
    %v726 = vunpack.c.l.b16 %v91
    %v727 = vunpack.c.l.b16 %v92
    %v728 = vunpack.c.l.b16 %v93
    %v729 = vunpack.c.l.b16 %v94
    %v730 = vunpack.c.l.b16 %v95
    %v731 = vunpack.c.l.b16 %v96
    %v732 = vunpack.c.l.b16 %v97
    %v733 = vunpack.c.l.b16 %v98
    %v734 = vunpack.c.l.b16 %v99
    %v735 = vunpack.c.l.b16 %v100
    %v736 = vunpack.c.l.b16 %v101
    %v737 = vunpack.c.l.b16 %v102
    %v738 = vunpack.c.l.b16 %v103
    %v739 = vunpack.c.l.b16 %v104
    %v740 = vunpack.c.l.b16 %v105
    %v741 = vunpack.c.l.b16 %v106
    %v742 = vunpack.c.l.b16 %v107
    %v743 = vunpack.c.l.b16 %v108
    %v744 = vunpack.c.l.b16 %v109
    %v745 = vunpack.c.l.b16 %v110
    %v746 = vunpack.c.l.b16 %v111
    %v747 = vunpack.c.l.b16 %v112
    %v748 = vunpack.c.l.b16 %v113
    %v749 = vunpack.c.l.b16 %v114
    %v750 = vunpack.c.l.b16 %v115
    %v751 = vunpack.c.l.b16 %v116
    %v752 = vunpack.c.l.b16 %v117
    %v753 = vunpack.c.l.b16 %v118
    %v754 = vunpack.c.l.b16 %v119
    %v755 = vunpack.c.l.b16 %v120
    %v756 = vunpack.c.l.b16 %v121
    %v757 = vunpack.c.l.b16 %v122
    %v758 = vunpack.c.l.b16 %v123
    %v759 = vunpack.c.l.b16 %v124
    %v760 = vunpack.c.l.b16 %v125
    %v761 = vunpack.c.l.b16 %v126
    %v762 = vunpack.c.l.b16 %v127
    %v763 = vunpack.c.l.b16 %v128
    %v764 = vunpack.c.l.b16 %v129
    %v765 = vunpack.c.l.b16 %v130
    %v766 = vunpack.c.l.b16 %v131
    %v767 = vunpack.c.l.b16 %v132
    %v768 = vunpack.c.l.b16 %v133
    %v769 = vunpack.c.l.b16 %v134
    %v770 = vunpack.c.l.b16 %v135
    %v771 = vunpack.c.l.b16 %v136
    %v772 = vunpack.c.l.b16 %v137
    %v773 = vunpack.c.l.b16 %v138
    %v774 = vunpack.c.l.b16 %v139
    %v775 = vunpack.c.l.b16 %v140
    %v776 = vunpack.c.l.b16 %v141
    %v777 = vunpack.c.l.b16 %v142
    %v778 = vunpack.c.l.b16 %v143
    %v779 = vunpack.c.l.b16 %v144
    %v780 = vunpack.c.l.b16 %v145
    %v781 = vunpack.c.l.b16 %v146
    %v782 = vunpack.c.l.b16 %v147
    %v783 = vunpack.c.l.b16 %v148
    %v784 = vunpack.c.l.b16 %v149
    %v785 = vunpack.c.l.b16 %v150
    %v786 = vunpack.c.l.b16 %v151
    %v787 = vunpack.c.l.b16 %v152
    %v788 = vunpack.c.l.b16 %v153
    %v789 = vunpack.c.l.b16 %v154
    %v790 = vunpack.c.l.b16 %v155
    %v791 = vunpack.c.l.b16 %v156
    %v792 = vunpack.c.l.b16 %v157
    %v793 = vunpack.c.l.b16 %v158
    %v794 = vunpack.c.l.b16 %v159
    %v795 = vunpack.c.l.b16 %v160
    %v796 = vunpack.c.l.b16 %v161
    %v797 = vunpack.c.l.b16 %v162
    %v798 = vunpack.c.l.b16 %v163
    %v799 = vunpack.c.l.b16 %v164
    %v800 = vunpack.c.l.b16 %v165
    %v801 = vunpack.c.l.b16 %v166
    %v802 = vunpack.c.l.b16 %v167
    %v803 = vunpack.c.l.b16 %v168
    %v804 = vunpack.c.l.b16 %v169
    %v805 = vunpack.c.l.b16 %v170
    %v806 = vunpack.c.l.b16 %v171
    %v807 = vunpack.c.l.b16 %v172
    %v808 = vunpack.c.l.b16 %v173
    %v809 = vunpack.c.l.b16 %v174
    %v810 = vunpack.c.l.b16 %v175
    %v811 = vunpack.c.l.b16 %v176
    %v812 = vunpack.c.l.b16 %v177
    %v813 = vunpack.c.l.b16 %v178
    %v814 = vunpack.c.l.b16 %v179
    %v815 = vunpack.c.l.b16 %v180
    %v816 = vunpack.c.l.b16 %v181
    %v817 = vunpack.c.l.b16 %v182
    %v818 = vunpack.c.l.b16 %v183
    %v819 = vunpack.c.l.b16 %v184
    %v820 = vunpack.c.l.b16 %v185
    %v821 = vunpack.c.l.b16 %v186
    %v822 = vunpack.c.l.b16 %v187
    %v823 = vunpack.c.l.b16 %v188
    %v824 = vunpack.c.l.b16 %v189
    %v825 = vunpack.c.l.b16 %v190
    %v826 = vunpack.c.l.b16 %v191
    %v827 = vunpack.c.l.b16 %v192
    %v828 = vunpack.c.l.b16 %v193
    %v829 = vunpack.c.l.b16 %v194
    %v830 = vunpack.c.l.b16 %v195
    %v831 = vunpack.c.l.b16 %v196
    %v832 = vunpack.c.l.b16 %v197
    %v833 = vunpack.c.l.b16 %v198
    %v834 = vunpack.c.l.b16 %v199
    %v835 = vunpack.c.l.b16 %v200
    %v836 = vunpack.c.l.b16 %v201
    %v837 = vunpack.c.l.b16 %v202
    %v838 = vunpack.c.l.b16 %v203
    %v839 = vunpack.c.l.b16 %v204
    %v840 = vunpack.c.l.b16 %v205
    %v841 = vunpack.c.l.b16 %v206
    %v842 = vunpack.c.l.b16 %v207
    %v843 = vunpack.c.l.b16 %v208
    %v844 = vunpack.c.l.b16 %v209
    %v845 = vunpack.c.l.b16 %v210
    %v846 = vunpack.c.l.b16 %v211
    %v847 = vunpack.c.l.b16 %v212
    %v848 = vunpack.c.l.b16 %v213
    %v849 = vunpack.c.l.b16 %v214
    %v850 = vunpack.c.l.b16 %v215
    %v851 = vunpack.c.l.b16 %v216
    %v852 = vunpack.c.l.b16 %v217
    %v853 = vunpack.c.l.b16 %v218
    %v854 = vunpack.c.l.b16 %v219
    %v855 = vunpack.c.l.b16 %v220
    %v856 = vunpack.c.l.b16 %v221
    %v857 = vunpack.c.l.b16 %v222
    %v858 = vunpack.c.l.b16 %v223
    %v859 = vunpack.c.l.b16 %v224
    %v860 = vunpack.c.l.b16 %v225
    %v861 = vunpack.c.l.b16 %v226
    %v862 = vunpack.c.l.b16 %v227
    %v863 = vunpack.c.l.b16 %v228
    %v864 = vunpack.c.l.b16 %v229
    %v865 = vunpack.c.l.b16 %v230
    %v866 = vunpack.c.l.b16 %v231
    %v867 = vunpack.c.l.b16 %v232
    %v868 = vunpack.c.l.b16 %v233
    %v869 = vunpack.c.l.b16 %v234
    %v870 = vunpack.c.l.b16 %v235
    %v871 = vunpack.c.l.b16 %v236
    %v872 = vunpack.c.l.b16 %v237
    %v873 = vunpack.c.l.b16 %v238
    %v874 = vunpack.c.l.b16 %v239
    %v875 = vunpack.c.l.b16 %v240
    %v876 = vunpack.c.l.b16 %v241
    %v877 = vunpack.c.l.b16 %v242
    %v878 = vunpack.c.l.b16 %v243
    %v879 = vunpack.c.l.b16 %v244
    %v880 = vunpack.c.l.b16 %v245
    %v881 = vunpack.c.l.b16 %v246
    %v882 = vunpack.c.l.b16 %v247
    %v883 = vunpack.c.l.b16 %v248
    %v884 = vunpack.c.l.b16 %v249
    %v885 = vunpack.c.l.b16 %v250
    %v886 = vunpack.c.l.b16 %v251
    %v887 = vunpack.c.l.b16 %v252
    %v888 = vunpack.c.l.b16 %v253
    %v889 = vunpack.c.l.b16 %v254
    %v890 = vunpack.c.l.b16 %v255
    %v891 = vunpack.c.l.b16 %v256
    %v892 = vunpack.c.l.b16 %v257
    %v893 = vunpack.c.l.b16 %v258
    %v894 = vunpack.c.l.b16 %v259
    %v895 = vunpack.c.l.b16 %v260
    %v896 = vunpack.c.l.b16 %v261
    %v897 = vunpack.c.l.b16 %v262
    %v898 = vunpack.c.l.b16 %v263
    %v899 = vunpack.c.l.b16 %v264
    %v900 = vunpack.c.l.b16 %v265
    %v901 = vunpack.c.l.b16 %v266
    %v902 = vunpack.c.l.b16 %v267
    %v903 = vunpack.c.l.b16 %v268
    %v904 = vunpack.c.l.b16 %v269
    %v905 = vunpack.c.l.b16 %v270
    %v906 = vunpack.c.l.b16 %v271
    %v907 = vunpack.c.l.b16 %v272
    %v908 = vunpack.c.l.b16 %v273
    %v909 = vpack.c.b16 %v654, %v653
    %v910 = vpack.c.b16 %v656, %v655
    %v911 = vpack.c.b16 %v658, %v657
    %v912 = vpack.c.b16 %v660, %v659
    %v913 = vpack.c.b16 %v662, %v661
    %v914 = vpack.c.b16 %v664, %v663
    %v915 = vpack.c.b16 %v666, %v665
    %v916 = vpack.c.b16 %v668, %v667
    %v917 = vpack.c.b16 %v670, %v669
    %v918 = vpack.c.b16 %v672, %v671
    %v919 = vpack.c.b16 %v674, %v673
    %v920 = vpack.c.b16 %v676, %v675
    %v921 = vpack.c.b16 %v678, %v677
    %v922 = vpack.c.b16 %v680, %v679
    %v923 = vpack.c.b16 %v682, %v681
    %v924 = vpack.c.b16 %v684, %v683
    %v925 = vpack.c.b16 %v686, %v685
    %v926 = vpack.c.b16 %v688, %v687
    %v927 = vpack.c.b16 %v690, %v689
    %v928 = vpack.c.b16 %v692, %v691
    %v929 = vpack.c.b16 %v694, %v693
    %v930 = vpack.c.b16 %v696, %v695
    %v931 = vpack.c.b16 %v698, %v697
    %v932 = vpack.c.b16 %v700, %v699
    %v933 = vpack.c.b16 %v702, %v701
    %v934 = vpack.c.b16 %v704, %v703
    %v935 = vpack.c.b16 %v706, %v705
    %v936 = vpack.c.b16 %v708, %v707
    %v937 = vpack.c.b16 %v710, %v709
    %v938 = vpack.c.b16 %v712, %v711
    %v939 = vpack.c.b16 %v714, %v713
    %v940 = vpack.c.b16 %v716, %v715
    %v941 = vpack.c.b16 %v718, %v717
    %v942 = vpack.c.b16 %v720, %v719
    %v943 = vpack.c.b16 %v722, %v721
    %v944 = vpack.c.b16 %v724, %v723
    %v945 = vpack.c.b16 %v726, %v725
    %v946 = vpack.c.b16 %v728, %v727
    %v947 = vpack.c.b16 %v730, %v729
    %v948 = vpack.c.b16 %v732, %v731
    %v949 = vpack.c.b16 %v734, %v733
    %v950 = vpack.c.b16 %v736, %v735
    %v951 = vpack.c.b16 %v738, %v737
    %v952 = vpack.c.b16 %v740, %v739
    %v953 = vpack.c.b16 %v742, %v741
    %v954 = vpack.c.b16 %v744, %v743
    %v955 = vpack.c.b16 %v746, %v745
    %v956 = vpack.c.b16 %v748, %v747
    %v957 = vpack.c.b16 %v750, %v749
    %v958 = vpack.c.b16 %v752, %v751
    %v959 = vpack.c.b16 %v754, %v753
    %v960 = vpack.c.b16 %v756, %v755
    %v961 = vpack.c.b16 %v758, %v757
    %v962 = vpack.c.b16 %v760, %v759
    %v963 = vpack.c.b16 %v762, %v761
    %v964 = vpack.c.b16 %v764, %v763
    %v965 = vpack.c.b16 %v766, %v765
    %v966 = vpack.c.b16 %v768, %v767
    %v967 = vpack.c.b16 %v770, %v769
    %v968 = vpack.c.b16 %v772, %v771
    %v969 = vpack.c.b16 %v774, %v773
    %v970 = vpack.c.b16 %v776, %v775
    %v971 = vpack.c.b16 %v778, %v777
    %v972 = vpack.c.b16 %v780, %v779
    %v973 = vpack.c.b16 %v782, %v781
    %v974 = vpack.c.b16 %v784, %v783
    %v975 = vpack.c.b16 %v786, %v785
    %v976 = vpack.c.b16 %v788, %v787
    %v977 = vpack.c.b16 %v790, %v789
    %v978 = vpack.c.b16 %v792, %v791
    %v979 = vpack.c.b16 %v794, %v793
    %v980 = vpack.c.b16 %v796, %v795
    %v981 = vpack.c.b16 %v798, %v797
    %v982 = vpack.c.b16 %v800, %v799
    %v983 = vpack.c.b16 %v802, %v801
    %v984 = vpack.c.b16 %v804, %v803
    %v985 = vpack.c.b16 %v806, %v805
    %v986 = vpack.c.b16 %v808, %v807
    %v987 = vpack.c.b16 %v810, %v809
    %v988 = vpack.c.b16 %v812, %v811
    %v989 = vpack.c.b16 %v814, %v813
    %v990 = vpack.c.b16 %v816, %v815
    %v991 = vpack.c.b16 %v818, %v817
    %v992 = vpack.c.b16 %v820, %v819
    %v993 = vpack.c.b16 %v822, %v821
    %v994 = vpack.c.b16 %v824, %v823
    %v995 = vpack.c.b16 %v826, %v825
    %v996 = vpack.c.b16 %v828, %v827
    %v997 = vpack.c.b16 %v830, %v829
    %v998 = vpack.c.b16 %v832, %v831
    %v999 = vpack.c.b16 %v834, %v833
    %v1000 = vpack.c.b16 %v836, %v835
    %v1001 = vpack.c.b16 %v838, %v837
    %v1002 = vpack.c.b16 %v840, %v839
    %v1003 = vpack.c.b16 %v842, %v841
    %v1004 = vpack.c.b16 %v844, %v843
    %v1005 = vpack.c.b16 %v846, %v845
    %v1006 = vpack.c.b16 %v848, %v847
    %v1007 = vpack.c.b16 %v850, %v849
    %v1008 = vpack.c.b16 %v852, %v851
    %v1009 = vpack.c.b16 %v854, %v853
    %v1010 = vpack.c.b16 %v856, %v855
    %v1011 = vpack.c.b16 %v858, %v857
    %v1012 = vpack.c.b16 %v860, %v859
    %v1013 = vpack.c.b16 %v862, %v861
    %v1014 = vpack.c.b16 %v864, %v863
    %v1015 = vpack.c.b16 %v866, %v865
    %v1016 = vpack.c.b16 %v868, %v867
    %v1017 = vpack.c.b16 %v870, %v869
    %v1018 = vpack.c.b16 %v872, %v871
    %v1019 = vpack.c.b16 %v874, %v873
    %v1020 = vpack.c.b16 %v876, %v875
    %v1021 = vpack.c.b16 %v878, %v877
    %v1022 = vpack.c.b16 %v880, %v879
    %v1023 = vpack.c.b16 %v882, %v881
    %v1024 = vpack.c.b16 %v884, %v883
    %v1025 = vpack.c.b16 %v886, %v885
    %v1026 = vpack.c.b16 %v888, %v887
    %v1027 = vpack.c.b16 %v890, %v889
    %v1028 = vpack.c.b16 %v892, %v891
    %v1029 = vpack.c.b16 %v894, %v893
    %v1030 = vpack.c.b16 %v896, %v895
    %v1031 = vpack.c.b16 %v898, %v897
    %v1032 = vpack.c.b16 %v900, %v899
    %v1033 = vpack.c.b16 %v902, %v901
    %v1034 = vpack.c.b16 %v904, %v903
    %v1035 = vpack.c.b16 %v906, %v905
    %v1036 = vpack.c.b16 %v908, %v907
    %1165 = vmatprep.subr.bf16.mxu0 0
    %1166 = vmatpush1.bf16.msra.mxu0 %v909
    %1167 = vmatprep.subr.bf16.mxu0 0
    %1168 = vmatpush1.bf16.msra.mxu0 %v910
    %1169 = vmatprep.subr.bf16.mxu0 0
    %1170 = vmatpush1.bf16.msra.mxu0 %v911
    %1171 = vmatprep.subr.bf16.mxu0 0
    %1172 = vmatpush1.bf16.msra.mxu0 %v912
    %1173 = vmatprep.subr.bf16.mxu0 0
    %1174 = vmatpush1.bf16.msra.mxu0 %v913
    %1175 = vmatprep.subr.bf16.mxu0 0
    %1176 = vmatpush1.bf16.msra.mxu0 %v914
    %1177 = vmatprep.subr.bf16.mxu0 0
    %1178 = vmatpush1.bf16.msra.mxu0 %v915
    %1179 = vmatprep.subr.bf16.mxu0 0
    %1180 = vmatpush1.bf16.msra.mxu0 %v916
    %1181 = vmatprep.subr.bf16.mxu0 0
    %1182 = vmatpush1.bf16.msra.mxu0 %v917
    %1183 = vmatprep.subr.bf16.mxu0 0
    %1184 = vmatpush1.bf16.msra.mxu0 %v918
    %1185 = vmatprep.subr.bf16.mxu0 0
    %1186 = vmatpush1.bf16.msra.mxu0 %v919
    %1187 = vmatprep.subr.bf16.mxu0 0
    %1188 = vmatpush1.bf16.msra.mxu0 %v920
    %1189 = vmatprep.subr.bf16.mxu0 0
    %1190 = vmatpush1.bf16.msra.mxu0 %v921
    %1191 = vmatprep.subr.bf16.mxu0 0
    %1192 = vmatpush1.bf16.msra.mxu0 %v922
    %1193 = vmatprep.subr.bf16.mxu0 0
    %1194 = vmatpush1.bf16.msra.mxu0 %v923
    %1195 = vmatprep.subr.bf16.mxu0 0
    %1196 = vmatpush1.bf16.msra.mxu0 %v924
    %1197 = vmatprep.mubr.bf16.mxu0 %v320
    %1198 = vmatmul.mubr.bf16.gmra.mrb[0].mxu0 %v306
    %v1199 = vpop.f32.mrb[0].mxu0
    %v1200 = vadd.f32 %v279, %v1199
    %v1201 = vpop.f32.mrb[0].mxu0
    %v1202 = vpop.f32.mrb[0].mxu0
    %v1203 = vpop.f32.mrb[0].mxu0
    %1204 = vdwg.mxu0
    %1205 = vmatprep.subr.bf16.mxu0 0
    %1206 = vmatpush1.bf16.msra.mxu0 %v925
    %1207 = vmatprep.subr.bf16.mxu0 0
    %1208 = vmatpush1.bf16.msra.mxu0 %v926
    %1209 = vmatprep.subr.bf16.mxu0 0
    %1210 = vmatpush1.bf16.msra.mxu0 %v927
    %1211 = vmatprep.subr.bf16.mxu0 0
    %1212 = vmatpush1.bf16.msra.mxu0 %v928
    %1213 = vmatprep.subr.bf16.mxu0 0
    %1214 = vmatpush1.bf16.msra.mxu0 %v929
    %1215 = vmatprep.subr.bf16.mxu0 0
    %1216 = vmatpush1.bf16.msra.mxu0 %v930
    %1217 = vmatprep.subr.bf16.mxu0 0
    %1218 = vmatpush1.bf16.msra.mxu0 %v931
    %1219 = vmatprep.subr.bf16.mxu0 0
    %1220 = vmatpush1.bf16.msra.mxu0 %v932
    %1221 = vmatprep.subr.bf16.mxu0 0
    %1222 = vmatpush1.bf16.msra.mxu0 %v933
    %1223 = vmatprep.subr.bf16.mxu0 0
    %1224 = vmatpush1.bf16.msra.mxu0 %v934
    %1225 = vmatprep.subr.bf16.mxu0 0
    %1226 = vmatpush1.bf16.msra.mxu0 %v935
    %1227 = vmatprep.subr.bf16.mxu0 0
    %1228 = vmatpush1.bf16.msra.mxu0 %v936
    %1229 = vmatprep.subr.bf16.mxu0 0
    %1230 = vmatpush1.bf16.msra.mxu0 %v937
    %1231 = vmatprep.subr.bf16.mxu0 0
    %1232 = vmatpush1.bf16.msra.mxu0 %v938
    %1233 = vmatprep.subr.bf16.mxu0 0
    %1234 = vmatpush1.bf16.msra.mxu0 %v939
    %1235 = vmatprep.subr.bf16.mxu0 0
    %1236 = vmatpush1.bf16.msra.mxu0 %v940
    %1237 = vmatprep.mubr.bf16.mxu0 %v330
    %1238 = vmatmul.mubr.bf16.gmra.mrb[0].mxu0 %v328
    %v1239 = vpop.f32.mrb[0].mxu0
    %v1240 = vadd.f32 %v1200, %v1239
    %v1241 = vpop.f32.mrb[0].mxu0
    %v1242 = vpop.f32.mrb[0].mxu0
    %v1243 = vpop.f32.mrb[0].mxu0
    %1244 = vdwg.mxu0
    %1245 = vmatprep.subr.bf16.mxu0 0
    %1246 = vmatpush1.bf16.msra.mxu0 %v941
    %1247 = vmatprep.subr.bf16.mxu0 0
    %1248 = vmatpush1.bf16.msra.mxu0 %v942
    %1249 = vmatprep.subr.bf16.mxu0 0
    %1250 = vmatpush1.bf16.msra.mxu0 %v943
    %1251 = vmatprep.subr.bf16.mxu0 0
    %1252 = vmatpush1.bf16.msra.mxu0 %v944
    %1253 = vmatprep.subr.bf16.mxu0 0
    %1254 = vmatpush1.bf16.msra.mxu0 %v945
    %1255 = vmatprep.subr.bf16.mxu0 0
    %1256 = vmatpush1.bf16.msra.mxu0 %v946
    %1257 = vmatprep.subr.bf16.mxu0 0
    %1258 = vmatpush1.bf16.msra.mxu0 %v947
    %1259 = vmatprep.subr.bf16.mxu0 0
    %1260 = vmatpush1.bf16.msra.mxu0 %v948
    %1261 = vmatprep.subr.bf16.mxu0 0
    %1262 = vmatpush1.bf16.msra.mxu0 %v949
    %1263 = vmatprep.subr.bf16.mxu0 0
    %1264 = vmatpush1.bf16.msra.mxu0 %v950
    %1265 = vmatprep.subr.bf16.mxu0 0
    %1266 = vmatpush1.bf16.msra.mxu0 %v951
    %1267 = vmatprep.subr.bf16.mxu0 0
    %1268 = vmatpush1.bf16.msra.mxu0 %v952
    %1269 = vmatprep.subr.bf16.mxu0 0
    %1270 = vmatpush1.bf16.msra.mxu0 %v953
    %1271 = vmatprep.subr.bf16.mxu0 0
    %1272 = vmatpush1.bf16.msra.mxu0 %v954
    %1273 = vmatprep.subr.bf16.mxu0 0
    %1274 = vmatpush1.bf16.msra.mxu0 %v955
    %1275 = vmatprep.subr.bf16.mxu0 0
    %1276 = vmatpush1.bf16.msra.mxu0 %v956
    %1277 = vmatprep.mubr.bf16.mxu0 %v327
    %1278 = vmatmul.mubr.bf16.gmra.mrb[0].mxu0 %v313
    %v1279 = vpop.f32.mrb[0].mxu0
    %v1280 = vadd.f32 %v1240, %v1279
    %v1281 = vpop.f32.mrb[0].mxu0
    %v1282 = vpop.f32.mrb[0].mxu0
    %v1283 = vpop.f32.mrb[0].mxu0
    %1284 = vdwg.mxu0
    %1285 = vmatprep.subr.bf16.mxu0 0
    %1286 = vmatpush1.bf16.msra.mxu0 %v957
    %1287 = vmatprep.subr.bf16.mxu0 0
    %1288 = vmatpush1.bf16.msra.mxu0 %v958
    %1289 = vmatprep.subr.bf16.mxu0 0
    %1290 = vmatpush1.bf16.msra.mxu0 %v959
    %1291 = vmatprep.subr.bf16.mxu0 0
    %1292 = vmatpush1.bf16.msra.mxu0 %v960
    %1293 = vmatprep.subr.bf16.mxu0 0
    %1294 = vmatpush1.bf16.msra.mxu0 %v961
    %1295 = vmatprep.subr.bf16.mxu0 0
    %1296 = vmatpush1.bf16.msra.mxu0 %v962
    %1297 = vmatprep.subr.bf16.mxu0 0
    %1298 = vmatpush1.bf16.msra.mxu0 %v963
    %1299 = vmatprep.subr.bf16.mxu0 0
    %1300 = vmatpush1.bf16.msra.mxu0 %v964
    %1301 = vmatprep.subr.bf16.mxu0 0
    %1302 = vmatpush1.bf16.msra.mxu0 %v965
    %1303 = vmatprep.subr.bf16.mxu0 0
    %1304 = vmatpush1.bf16.msra.mxu0 %v966
    %1305 = vmatprep.subr.bf16.mxu0 0
    %1306 = vmatpush1.bf16.msra.mxu0 %v967
    %1307 = vmatprep.subr.bf16.mxu0 0
    %1308 = vmatpush1.bf16.msra.mxu0 %v968
    %1309 = vmatprep.subr.bf16.mxu0 0
    %1310 = vmatpush1.bf16.msra.mxu0 %v969
    %1311 = vmatprep.subr.bf16.mxu0 0
    %1312 = vmatpush1.bf16.msra.mxu0 %v970
    %1313 = vmatprep.subr.bf16.mxu0 0
    %1314 = vmatpush1.bf16.msra.mxu0 %v971
    %1315 = vmatprep.subr.bf16.mxu0 0
    %1316 = vmatpush1.bf16.msra.mxu0 %v972
    %1317 = vmatprep.mubr.bf16.mxu0 %v331
    %1318 = vmatmul.mubr.bf16.gmra.mrb[0].mxu0 %v329
    %v1319 = vpop.f32.mrb[0].mxu0
    %v1320 = vadd.f32 %v1280, %v1319
    %v1321 = vpop.f32.mrb[0].mxu0
    %v1322 = vpop.f32.mrb[0].mxu0
    %v1323 = vpop.f32.mrb[0].mxu0
    %1324 = vdwg.mxu0
    %1325 = vmatprep.subr.bf16.mxu0 0
    %1326 = vmatpush1.bf16.msra.mxu0 %v973
    %1327 = vmatprep.subr.bf16.mxu0 0
    %1328 = vmatpush1.bf16.msra.mxu0 %v974
    %1329 = vmatprep.subr.bf16.mxu0 0
    %1330 = vmatpush1.bf16.msra.mxu0 %v975
    %1331 = vmatprep.subr.bf16.mxu0 0
    %1332 = vmatpush1.bf16.msra.mxu0 %v976
    %1333 = vmatprep.subr.bf16.mxu0 0
    %1334 = vmatpush1.bf16.msra.mxu0 %v977
    %1335 = vmatprep.subr.bf16.mxu0 0
    %1336 = vmatpush1.bf16.msra.mxu0 %v978
    %1337 = vmatprep.subr.bf16.mxu0 0
    %1338 = vmatpush1.bf16.msra.mxu0 %v979
    %1339 = vmatprep.subr.bf16.mxu0 0
    %1340 = vmatpush1.bf16.msra.mxu0 %v980
    %1341 = vmatprep.subr.bf16.mxu0 0
    %1342 = vmatpush1.bf16.msra.mxu0 %v981
    %1343 = vmatprep.subr.bf16.mxu0 0
    %1344 = vmatpush1.bf16.msra.mxu0 %v982
    %1345 = vmatprep.subr.bf16.mxu0 0
    %1346 = vmatpush1.bf16.msra.mxu0 %v983
    %1347 = vmatprep.subr.bf16.mxu0 0
    %1348 = vmatpush1.bf16.msra.mxu0 %v984
    %1349 = vmatprep.subr.bf16.mxu0 0
    %1350 = vmatpush1.bf16.msra.mxu0 %v985
    %1351 = vmatprep.subr.bf16.mxu0 0
    %1352 = vmatpush1.bf16.msra.mxu0 %v986
    %1353 = vmatprep.subr.bf16.mxu0 0
    %1354 = vmatpush1.bf16.msra.mxu0 %v987
    %1355 = vmatprep.subr.bf16.mxu0 0
    %1356 = vmatpush1.bf16.msra.mxu0 %v988
    %1357 = vmatprep.mubr.bf16.mxu0 %v369
    %1358 = vmatmul.mubr.bf16.gmra.mrb[0].mxu0 %v355
    %v1359 = vpop.f32.mrb[0].mxu0
    %v1360 = vadd.f32 %v1320, %v1359
    %v1361 = vpop.f32.mrb[0].mxu0
    %v1362 = vpop.f32.mrb[0].mxu0
    %v1363 = vpop.f32.mrb[0].mxu0
    %1364 = vdwg.mxu0
    %1365 = vmatprep.subr.bf16.mxu0 0
    %1366 = vmatpush1.bf16.msra.mxu0 %v989
    %1367 = vmatprep.subr.bf16.mxu0 0
    %1368 = vmatpush1.bf16.msra.mxu0 %v990
    %1369 = vmatprep.subr.bf16.mxu0 0
    %1370 = vmatpush1.bf16.msra.mxu0 %v991
    %1371 = vmatprep.subr.bf16.mxu0 0
    %1372 = vmatpush1.bf16.msra.mxu0 %v992
    %1373 = vmatprep.subr.bf16.mxu0 0
    %1374 = vmatpush1.bf16.msra.mxu0 %v993
    %1375 = vmatprep.subr.bf16.mxu0 0
    %1376 = vmatpush1.bf16.msra.mxu0 %v994
    %1377 = vmatprep.subr.bf16.mxu0 0
    %1378 = vmatpush1.bf16.msra.mxu0 %v995
    %1379 = vmatprep.subr.bf16.mxu0 0
    %1380 = vmatpush1.bf16.msra.mxu0 %v996
    %1381 = vmatprep.subr.bf16.mxu0 0
    %1382 = vmatpush1.bf16.msra.mxu0 %v997
    %1383 = vmatprep.subr.bf16.mxu0 0
    %1384 = vmatpush1.bf16.msra.mxu0 %v998
    %1385 = vmatprep.subr.bf16.mxu0 0
    %1386 = vmatpush1.bf16.msra.mxu0 %v999
    %1387 = vmatprep.subr.bf16.mxu0 0
    %1388 = vmatpush1.bf16.msra.mxu0 %v1000
    %1389 = vmatprep.subr.bf16.mxu0 0
    %1390 = vmatpush1.bf16.msra.mxu0 %v1001
    %1391 = vmatprep.subr.bf16.mxu0 0
    %1392 = vmatpush1.bf16.msra.mxu0 %v1002
    %1393 = vmatprep.subr.bf16.mxu0 0
    %1394 = vmatpush1.bf16.msra.mxu0 %v1003
    %1395 = vmatprep.subr.bf16.mxu0 0
    %1396 = vmatpush1.bf16.msra.mxu0 %v1004
    %1397 = vmatprep.mubr.bf16.mxu0 %v379
    %1398 = vmatmul.mubr.bf16.gmra.mrb[0].mxu0 %v377
    %v1399 = vpop.f32.mrb[0].mxu0
    %v1400 = vadd.f32 %v1360, %v1399
    %v1401 = vpop.f32.mrb[0].mxu0
    %v1402 = vpop.f32.mrb[0].mxu0
    %v1403 = vpop.f32.mrb[0].mxu0
    %1404 = vdwg.mxu0
    %1405 = vmatprep.subr.bf16.mxu0 0
    %1406 = vmatpush1.bf16.msra.mxu0 %v1005
    %1407 = vmatprep.subr.bf16.mxu0 0
    %1408 = vmatpush1.bf16.msra.mxu0 %v1006
    %1409 = vmatprep.subr.bf16.mxu0 0
    %1410 = vmatpush1.bf16.msra.mxu0 %v1007
    %1411 = vmatprep.subr.bf16.mxu0 0
    %1412 = vmatpush1.bf16.msra.mxu0 %v1008
    %1413 = vmatprep.subr.bf16.mxu0 0
    %1414 = vmatpush1.bf16.msra.mxu0 %v1009
    %1415 = vmatprep.subr.bf16.mxu0 0
    %1416 = vmatpush1.bf16.msra.mxu0 %v1010
    %1417 = vmatprep.subr.bf16.mxu0 0
    %1418 = vmatpush1.bf16.msra.mxu0 %v1011
    %1419 = vmatprep.subr.bf16.mxu0 0
    %1420 = vmatpush1.bf16.msra.mxu0 %v1012
    %1421 = vmatprep.subr.bf16.mxu0 0
    %1422 = vmatpush1.bf16.msra.mxu0 %v1013
    %1423 = vmatprep.subr.bf16.mxu0 0
    %1424 = vmatpush1.bf16.msra.mxu0 %v1014
    %1425 = vmatprep.subr.bf16.mxu0 0
    %1426 = vmatpush1.bf16.msra.mxu0 %v1015
    %1427 = vmatprep.subr.bf16.mxu0 0
    %1428 = vmatpush1.bf16.msra.mxu0 %v1016
    %1429 = vmatprep.subr.bf16.mxu0 0
    %1430 = vmatpush1.bf16.msra.mxu0 %v1017
    %1431 = vmatprep.subr.bf16.mxu0 0
    %1432 = vmatpush1.bf16.msra.mxu0 %v1018
    %1433 = vmatprep.subr.bf16.mxu0 0
    %1434 = vmatpush1.bf16.msra.mxu0 %v1019
    %1435 = vmatprep.subr.bf16.mxu0 0
    %1436 = vmatpush1.bf16.msra.mxu0 %v1020
    %1437 = vmatprep.mubr.bf16.mxu0 %v376
    %1438 = vmatmul.mubr.bf16.gmra.mrb[0].mxu0 %v362
    %v1439 = vpop.f32.mrb[0].mxu0
    %v1440 = vadd.f32 %v1400, %v1439
    %v1441 = vpop.f32.mrb[0].mxu0
    %v1442 = vpop.f32.mrb[0].mxu0
    %v1443 = vpop.f32.mrb[0].mxu0
    %1444 = vdwg.mxu0
    %1445 = vmatprep.subr.bf16.mxu0 0
    %1446 = vmatpush1.bf16.msra.mxu0 %v1021
    %1447 = vmatprep.subr.bf16.mxu0 0
    %1448 = vmatpush1.bf16.msra.mxu0 %v1022
    %1449 = vmatprep.subr.bf16.mxu0 0
    %1450 = vmatpush1.bf16.msra.mxu0 %v1023
    %1451 = vmatprep.subr.bf16.mxu0 0
    %1452 = vmatpush1.bf16.msra.mxu0 %v1024
    %1453 = vmatprep.subr.bf16.mxu0 0
    %1454 = vmatpush1.bf16.msra.mxu0 %v1025
    %1455 = vmatprep.subr.bf16.mxu0 0
    %1456 = vmatpush1.bf16.msra.mxu0 %v1026
    %1457 = vmatprep.subr.bf16.mxu0 0
    %1458 = vmatpush1.bf16.msra.mxu0 %v1027
    %1459 = vmatprep.subr.bf16.mxu0 0
    %1460 = vmatpush1.bf16.msra.mxu0 %v1028
    %1461 = vmatprep.subr.bf16.mxu0 0
    %1462 = vmatpush1.bf16.msra.mxu0 %v1029
    %1463 = vmatprep.subr.bf16.mxu0 0
    %1464 = vmatpush1.bf16.msra.mxu0 %v1030
    %1465 = vmatprep.subr.bf16.mxu0 0
    %1466 = vmatpush1.bf16.msra.mxu0 %v1031
    %1467 = vmatprep.subr.bf16.mxu0 0
    %1468 = vmatpush1.bf16.msra.mxu0 %v1032
    %1469 = vmatprep.subr.bf16.mxu0 0
    %1470 = vmatpush1.bf16.msra.mxu0 %v1033
    %1471 = vmatprep.subr.bf16.mxu0 0
    %1472 = vmatpush1.bf16.msra.mxu0 %v1034
    %1473 = vmatprep.subr.bf16.mxu0 0
    %1474 = vmatpush1.bf16.msra.mxu0 %v1035
    %1475 = vmatprep.subr.bf16.mxu0 0
    %1476 = vmatpush1.bf16.msra.mxu0 %v1036
    %1477 = vmatprep.mubr.bf16.mxu0 %v380
    %1478 = vmatmul.mubr.bf16.gmra.mrb[0].mxu0 %v378
    %v1479 = vpop.f32.mrb[0].mxu0
    %v1480 = vadd.f32 %v1440, %v1479
    %v1481 = vpop.f32.mrb[0].mxu0
    %v1482 = vpop.f32.mrb[0].mxu0
    %v1483 = vpop.f32.mrb[0].mxu0
    %1484 = vdwg.mxu0
    %vm1485 = vcmask 517120
    %1486 = vst.msk [vmem:[#allocation2] sm:$0x3] %vm1485, %v1480
    // Predicated region
    $region14: #{network_builder_forward.9} parent=1 // pred_check
      _
    $region15: #{network_builder_forward.9} parent=1 // pred_check_branch
      %1488 = sbr.rel (0) target = $region17
    $region16: #{network_builder_forward.9} parent=1 // pred_region
      %s1490 = ssub.s32 32, 32
      %1491 = vsyncadd [#allocation3], %s1490
      %s1493 = sshll.u32 [#allocation2], 4
      %s1494 = int_to_ptr.vmem [resolvable:$true] %s1493
      %1496 = dma.vmem_to_hbm [thread:$0]  %s1494, 32, %s3, [#allocation3]
    $region17: #{network_builder_forward.9} parent=1 // pred_fallthru
      _
    // Predicated region
    $region18: #{network_builder_forward.9} parent=1 // pred_check
      _
    $region19: #{network_builder_forward.9} parent=1 // pred_check_branch
      %1498 = sbr.rel (0) target = $region21
    $region20: #{network_builder_forward.9} parent=1 // pred_region
      %1499 = dma.done [#allocation3], 32
    $region21: #{network_builder_forward.9} parent=1 // pred_fallthru
      _
    %1500 = vsyncpa [#allocation3], 1

</llo_original>
